<compile_context>
chip_gen: v7x
topology: tpu7x:2x2x1
jax: 0.10.0
libtpu: 0.0.40
codegen_flags: <defaults>
</compile_context>

<pallas_src>
import functools

import jax
import jax.numpy as jnp
from jax.experimental import pallas as pl
from jax.experimental.pallas import tpu as pltpu

_NEG_INF = -1e30
_VMEM_LIMIT = 48 * 1024 * 1024   # explicit scoped-VMEM budget; fits v7x's 64 MiB


def _tile(dim, target, mult):
    """Largest divisor of `dim` that is <= target and a multiple of `mult`
    (preferring multiples of 256 on lane axes for full v6e/v7x MXU passes)."""
    if dim <= target:
        return dim
    steps = (256, mult) if mult < 256 else (mult,)
    for step in steps:
        t = (target // step) * step
        while t >= step:
            if dim % t == 0:
                return t
            t -= step
    # TODO(synk): pad awkward (non-factorable) shapes instead of falling back
    # to the full dimension, which can exceed the scoped VMEM limit.
    return dim


# ----------------------------- Pallas kernels ------------------------------

def _matmul_kernel(*refs, has_bias, has_residual):
    """Tiled y = x @ W (+ b) (+ residual). Grid = (Mt, Nt, Kt); acc scratch in VMEM."""
    x_ref, w_ref = refs[0], refs[1]
    idx = 2
    b_ref = r_ref = None
    if has_bias:
        b_ref = refs[idx]; idx += 1
    if has_residual:
        r_ref = refs[idx]; idx += 1
    o_ref, acc_ref = refs[idx], refs[idx + 1]

    k = pl.program_id(2)

    @pl.when(k == 0)
    def _():
        acc_ref[...] = jnp.zeros_like(acc_ref)

    acc_ref[...] += jnp.dot(x_ref[...].astype(jnp.bfloat16), w_ref[...],
                            preferred_element_type=jnp.float32)

    @pl.when(k == pl.num_programs(2) - 1)
    def _():
        y = acc_ref[...]
        if has_bias:
            y = y + b_ref[...]
        if has_residual:
            y = y + r_ref[...]
        o_ref[...] = y.astype(o_ref.dtype)


def linear(x2d, w, b=None, residual=None, out_dtype=jnp.float32, *,
           tm=512, tn=512, tk=512):
    """y = x2d @ w (+ b) (+ residual); w stored bf16, f32 accumulation."""
    M, K = x2d.shape
    N = w.shape[1]
    tm = _tile(M, tm, 8)
    tn = _tile(N, tn, 128)
    tk = _tile(K, tk, 128)
    grid = (M // tm, N // tn, K // tk)

    has_bias = b is not None
    has_res = residual is not None
    in_specs = [
        pl.BlockSpec((tm, tk), lambda i, j, k: (i, k)),
        pl.BlockSpec((tk, tn), lambda i, j, k: (k, j)),
    ]
    args = [x2d, w]
    if has_bias:
        in_specs.append(pl.BlockSpec((1, tn), lambda i, j, k: (0, j)))
        args.append(b.reshape(1, N))
    if has_res:
        in_specs.append(pl.BlockSpec((tm, tn), lambda i, j, k: (i, j)))
        args.append(residual)

    kernel = functools.partial(_matmul_kernel, has_bias=has_bias, has_residual=has_res)
    return pl.pallas_call(
        kernel,
        out_shape=jax.ShapeDtypeStruct((M, N), out_dtype),
        grid=grid,
        in_specs=in_specs,
        out_specs=pl.BlockSpec((tm, tn), lambda i, j, k: (i, j)),
        scratch_shapes=[pltpu.VMEM((tm, tn), jnp.float32)],
        compiler_params=pltpu.CompilerParams(
            dimension_semantics=("parallel", "parallel", "arbitrary"),
            vmem_limit_bytes=_VMEM_LIMIT),
    )(*args)


def _ln_matmul_kernel(*refs, has_bias, activation, eps):
    """Fused LayerNorm prologue (cached per m-tile) + matmul (+ bias) (+ GELU).
    Grid = (Mt, Nt) with Nt inner; K (=D) is kept whole per tile."""
    if has_bias:
        x_ref, g_ref, bt_ref, w_ref, b_ref, o_ref, h_ref = refs
    else:
        x_ref, g_ref, bt_ref, w_ref, o_ref, h_ref = refs
        b_ref = None

    # LayerNorm is only recomputed when the m-tile changes (j == 0); every other
    # N tile of the same row block reuses the bf16 normalized activations.
    @pl.when(pl.program_id(1) == 0)
    def _():
        x = x_ref[...]                                        # f32 [tm, D]
        mean = jnp.mean(x, axis=-1, keepdims=True)
        xc = x - mean
        var = jnp.mean(xc * xc, axis=-1, keepdims=True)
        h = xc * jax.lax.rsqrt(var + eps) * g_ref[...] + bt_ref[...]
        h_ref[...] = h.astype(jnp.bfloat16)

    y = jnp.dot(h_ref[...], w_ref[...], preferred_element_type=jnp.float32)
    if has_bias:
        y = y + b_ref[...]
    if activation == "gelu":
        # TODO(synk): PyTorch nn.GELU default is exact erf; tanh approximation used
        # here (erf lowering is not guaranteed in Mosaic), ~1e-3 max deviation.
        y = jax.nn.gelu(y, approximate=True)
    o_ref[...] = y.astype(o_ref.dtype)


def ln_linear(x2d, gamma, beta, w, b=None, activation=None, out_dtype=jnp.float32, *,
              tm=256, tn=512, eps=1e-5):
    """y = LayerNorm(x2d) @ w (+ b) (+ GELU).  K (=D) is kept whole per tile because
    the LN prologue needs full rows; M and N are tiled and pipelined."""
    M, D = x2d.shape
    N = w.shape[1]
    tm = _tile(M, tm, 8)
    tn = _tile(N, tn, 128)
    grid = (M // tm, N // tn)

    has_bias = b is not None
    in_specs = [
        pl.BlockSpec((tm, D), lambda i, j: (i, 0)),
        pl.BlockSpec((1, D), lambda i, j: (0, 0)),
        pl.BlockSpec((1, D), lambda i, j: (0, 0)),
        pl.BlockSpec((D, tn), lambda i, j: (0, j)),
    ]
    args = [x2d, gamma.reshape(1, D), beta.reshape(1, D), w]
    if has_bias:
        in_specs.append(pl.BlockSpec((1, tn), lambda i, j: (0, j)))
        args.append(b.reshape(1, N))

    kernel = functools.partial(_ln_matmul_kernel, has_bias=has_bias,
                               activation=activation, eps=eps)
    return pl.pallas_call(
        kernel,
        out_shape=jax.ShapeDtypeStruct((M, N), out_dtype),
        grid=grid,
        in_specs=in_specs,
        out_specs=pl.BlockSpec((tm, tn), lambda i, j: (i, j)),
        scratch_shapes=[pltpu.VMEM((tm, D), jnp.bfloat16)],
        compiler_params=pltpu.CompilerParams(
            # N axis must stay sequential: the LN scratch is initialized at j == 0.
            dimension_semantics=("parallel", "arbitrary"),
            vmem_limit_bytes=_VMEM_LIMIT),
    )(*args)


# TODO(synk): for sequences / patch counts far beyond window_size=512 an
# online-softmax (flash-style) KV-tiled path should replace the monolithic
# per-head [S,S] scores below; at the module's default sizes it fits VMEM.

def _self_attn_kernel(qkv_ref, o_ref, *, n_heads, window_size):
    """qkv_ref: [1, S, 3D] bf16 packed Q|K|V; writes [1, S, D] bf16 lane-dense."""
    qkv = qkv_ref[0]                                   # [S, 3D]
    s_len = qkv.shape[0]
    d = qkv.shape[1] // 3
    dh = d // n_heads
    scale = 1.0 / (dh ** 0.5)

    row = jax.lax.broadcasted_iota(jnp.int32, (s_len, s_len), 0)
    col = jax.lax.broadcasted_iota(jnp.int32, (s_len, s_len), 1)
    disallow = (col > row) | (col < row - (window_size - 1))   # causal + local window

    ctx_parts = []
    for h in range(n_heads):                           # static head slices (lane axis)
        qh = (qkv[:, h * dh:(h + 1) * dh].astype(jnp.float32) * scale).astype(jnp.bfloat16)
        kh = qkv[:, d + h * dh:d + (h + 1) * dh]
        vh = qkv[:, 2 * d + h * dh:2 * d + (h + 1) * dh]
        s = jax.lax.dot_general(qh, kh, (((1,), (1,)), ((), ())),
                                preferred_element_type=jnp.float32)   # [S, S]
        s = jnp.where(disallow, _NEG_INF, s)
        s = s - jnp.max(s, axis=-1, keepdims=True)
        p = jnp.exp(s)
        p = p * pl.reciprocal(jnp.sum(p, axis=-1, keepdims=True), approx=True)
        ctx_parts.append(jnp.dot(p.astype(jnp.bfloat16), vh,
                                 preferred_element_type=jnp.float32))  # [S, Dh]
    o_ref[0] = jnp.concatenate(ctx_parts, axis=-1).astype(o_ref.dtype)  # one [S, D] store


def _cross_attn_kernel(pidx_ref, q_ref, kv_ref, o_ref, *, n_heads):
    """pidx: [1,S,1] i32; q: [1,S,D] bf16; kv: [1,P,2D] bf16 packed K|V -> [1,S,D]."""
    q_all = q_ref[0]                                   # [S, D]
    kv = kv_ref[0]                                     # [P, 2D]
    pidx = pidx_ref[0]                                 # [S, 1]
    s_len, d = q_all.shape
    n_patch = kv.shape[0]
    dh = d // n_heads
    scale = 1.0 / (dh ** 0.5)

    col = jax.lax.broadcasted_iota(jnp.int32, (s_len, n_patch), 1)
    disallow = col > pidx                              # patch p allowed iff p <= cumsum(bound)[t]

    ctx_parts = []
    for h in range(n_heads):
        qh = (q_all[:, h * dh:(h + 1) * dh].astype(jnp.float32) * scale).astype(jnp.bfloat16)
        kh = kv[:, h * dh:(h + 1) * dh]
        vh = kv[:, d + h * dh:d + (h + 1) * dh]
        s = jax.lax.dot_general(qh, kh, (((1,), (1,)), ((), ())),
                                preferred_element_type=jnp.float32)   # [S, P]
        s = jnp.where(disallow, _NEG_INF, s)
        s = s - jnp.max(s, axis=-1, keepdims=True)
        p = jnp.exp(s)
        p = p * pl.reciprocal(jnp.sum(p, axis=-1, keepdims=True), approx=True)
        ctx_parts.append(jnp.dot(p.astype(jnp.bfloat16), vh,
                                 preferred_element_type=jnp.float32))
    o_ref[0] = jnp.concatenate(ctx_parts, axis=-1).astype(o_ref.dtype)


def self_attention(qkv, n_heads, window_size):
    """qkv: [B, S, 3D] bf16 (packed) -> [B, S, D] bf16; no host transposes."""
    B, S, threeD = qkv.shape
    D = threeD // 3
    return pl.pallas_call(
        functools.partial(_self_attn_kernel, n_heads=n_heads, window_size=window_size),
        out_shape=jax.ShapeDtypeStruct((B, S, D), jnp.bfloat16),
        grid=(B,),
        in_specs=[pl.BlockSpec((1, S, threeD), lambda b: (b, 0, 0))],
        out_specs=pl.BlockSpec((1, S, D), lambda b: (b, 0, 0)),
        compiler_params=pltpu.CompilerParams(
            dimension_semantics=("parallel",), vmem_limit_bytes=_VMEM_LIMIT),
    )(qkv)


def cross_attention(patch_idx, q, kv, n_heads):
    """patch_idx: [B,S,1] i32; q: [B,S,D] bf16; kv: [B,P,2D] bf16 -> [B,S,D] bf16."""
    B, S, D = q.shape
    P = kv.shape[1]
    return pl.pallas_call(
        functools.partial(_cross_attn_kernel, n_heads=n_heads),
        out_shape=jax.ShapeDtypeStruct((B, S, D), jnp.bfloat16),
        grid=(B,),
        in_specs=[
            pl.BlockSpec((1, S, 1), lambda b: (b, 0, 0)),
            pl.BlockSpec((1, S, D), lambda b: (b, 0, 0)),
            pl.BlockSpec((1, P, 2 * D), lambda b: (b, 0, 0)),
        ],
        out_specs=pl.BlockSpec((1, S, D), lambda b: (b, 0, 0)),
        compiler_params=pltpu.CompilerParams(
            dimension_semantics=("parallel",), vmem_limit_bytes=_VMEM_LIMIT),
    )(patch_idx, q, kv)


# ------------------------------ model forward -------------------------------

def byte_decoder_forward(params, byte_seq, patch_repr, patch_boundaries,
                         n_heads, window_size):
    B, S = byte_seq.shape
    P = patch_repr.shape[1]
    D = params["byte_emb"].shape[1]
    H = n_heads
    assert S <= window_size, "sequence length must not exceed window_size (pos_emb size)"

    # embedding gathers + positional add in plain JAX (glue)
    x = params["byte_emb"][byte_seq] + params["pos_emb"][:S][None, :, :]
    x2d = x.reshape(B * S, D).astype(jnp.float32)                 # f32 residual stream
    patch2d = patch_repr.reshape(B * P, D).astype(jnp.bfloat16)   # cast once, reused per layer

    # per-byte allowed-patch index (mask is generated in-kernel from it)
    patch_idx = jnp.cumsum(patch_boundaries.astype(jnp.int32), axis=1)[:, :, None]  # [B,S,1]

    for lp in params["layers"]:
        # ---- 1) local windowed self-attention (pre-norm; residual fused into out-proj) ----
        qkv = ln_linear(x2d, lp["ln1_g"], lp["ln1_b"], lp["sa_w_qkv"], lp["sa_b_qkv"],
                        out_dtype=jnp.bfloat16).reshape(B, S, 3 * D)
        attn = self_attention(qkv, H, window_size)                          # [B,S,D] bf16
        x2d = linear(attn.reshape(B * S, D), lp["sa_wo"], lp["sa_bo"], residual=x2d)

        # ---- 2) cross-attention to patch representations ----
        q = ln_linear(x2d, lp["ln2_g"], lp["ln2_b"], lp["ca_wq"], lp["ca_bq"],
                      out_dtype=jnp.bfloat16).reshape(B, S, D)
        kv = linear(patch2d, lp["ca_w_kv"], lp["ca_b_kv"],
                    out_dtype=jnp.bfloat16).reshape(B, P, 2 * D)
        attn = cross_attention(patch_idx, q, kv, H)                         # [B,S,D] bf16
        x2d = linear(attn.reshape(B * S, D), lp["ca_wo"], lp["ca_bo"], residual=x2d)

        # ---- 3) feed-forward (LN + W1 + GELU fused; W2 + bias + residual fused) ----
        h = ln_linear(x2d, lp["ln3_g"], lp["ln3_b"], lp["ff_w1"], lp["ff_b1"],
                      activation="gelu", out_dtype=jnp.bfloat16)
        x2d = linear(h, lp["ff_w2"], lp["ff_b2"], residual=x2d)

    # final LayerNorm fused with the (bias-free) output projection
    logits = ln_linear(x2d, params["norm_g"], params["norm_b"], params["out_w"])
    return logits.reshape(B, S, 256)


# ----------------------------- parameter init ------------------------------

def init_params(key, d_model, n_layers, window_size):
    wdt = jnp.bfloat16   # matmul weights stored bf16 (f32 accumulation in-kernel)

    def nrm(k, shape, scale=0.05, dtype=jnp.float32):
        return (scale * jax.random.normal(k, shape, dtype=jnp.float32)).astype(dtype)

    keys = jax.random.split(key, 3 + n_layers)
    d = d_model
    params = {
        "byte_emb": nrm(keys[0], (256, d)),
        "pos_emb": nrm(keys[1], (window_size, d)),
        "out_w": nrm(keys[2], (d, 256), dtype=wdt),
        "norm_g": jnp.ones((d,), jnp.float32),
        "norm_b": jnp.zeros((d,), jnp.float32),
        "layers": [],
    }

    for li in range(n_layers):
        lk = jax.random.split(keys[3 + li], 8)
        params["layers"].append({
            # self-attention: packed QKV projection [D, 3D]
            "sa_w_qkv": nrm(lk[0], (d, 3 * d), dtype=wdt),
            "sa_b_qkv": jnp.zeros((3 * d,), jnp.float32),
            "sa_wo": nrm(lk[1], (d, d), dtype=wdt),
            "sa_bo": jnp.zeros((d,), jnp.float32),
            # cross-attention: Q projection + packed KV projection [D, 2D]
            "ca_wq": nrm(lk[2], (d, d), dtype=wdt),
            "ca_bq": jnp.zeros((d,), jnp.float32),
            "ca_w_kv": nrm(lk[3], (d, 2 * d), dtype=wdt),
            "ca_b_kv": jnp.zeros((2 * d,), jnp.float32),
            "ca_wo": nrm(lk[4], (d, d), dtype=wdt),
            "ca_bo": jnp.zeros((d,), jnp.float32),
            # feed-forward
            "ff_w1": nrm(lk[5], (d, 4 * d), dtype=wdt),
            "ff_b1": jnp.zeros((4 * d,), jnp.float32),
            "ff_w2": nrm(lk[6], (4 * d, d), dtype=wdt),
            "ff_b2": jnp.zeros((d,), jnp.float32),
            # layer norms
            "ln1_g": jnp.ones((d,), jnp.float32), "ln1_b": jnp.zeros((d,), jnp.float32),
            "ln2_g": jnp.ones((d,), jnp.float32), "ln2_b": jnp.zeros((d,), jnp.float32),
            "ln3_g": jnp.ones((d,), jnp.float32), "ln3_b": jnp.zeros((d,), jnp.float32),
        })
    return params


# ---------------------------------- main -----------------------------------

if __name__ == "__main__":
    B, S, P = 2, 8, 4
    d_model, n_layers, n_heads, window_size = 32, 2, 4, 8

    key = jax.random.PRNGKey(0)
    k_bytes, k_patch, k_bound, k_param = jax.random.split(key, 4)

    byte_seq = jax.random.randint(k_bytes, (B, S), 0, 256, dtype=jnp.int32)
    patch_representations = jax.random.normal(k_patch, (B, P, d_model), dtype=jnp.float32)
    patch_boundaries = (jax.random.uniform(k_bound, (B, S)) < 0.3).astype(jnp.int32)

    params = init_params(k_param, d_model, n_layers, window_size)

    fwd = jax.jit(functools.partial(byte_decoder_forward,
                                    n_heads=n_heads, window_size=window_size))
    logits = fwd(params, byte_seq, patch_representations, patch_boundaries)
    jax.block_until_ready(logits)

    assert logits.shape == (B, S, 256), logits.shape
    assert logits.dtype == jnp.float32
    assert bool(jnp.all(jnp.isfinite(logits)))
    print("KERNEL_OK")
</pallas_src>

<mosaic_0001>
module attributes {stable_mosaic.version = 11 : i64} {
  func.func @_ln_matmul_kernel(%arg0: i32, %arg1: i32, %arg2: memref<16x32xf32, #tpu.memory_space<vmem>>, %arg3: memref<1x32xf32, #tpu.memory_space<vmem>>, %arg4: memref<1x32xf32, #tpu.memory_space<vmem>>, %arg5: memref<32x96xbf16, #tpu.memory_space<vmem>>, %arg6: memref<1x96xf32, #tpu.memory_space<vmem>>, %arg7: memref<16x96xbf16, #tpu.memory_space<vmem>>, %arg8: memref<16x32xbf16, #tpu.memory_space<vmem>>) attributes {dimension_semantics = [#tpu.dimension_semantics<parallel>, #tpu.dimension_semantics<arbitrary>], iteration_bounds = array<i64: 1, 1>, scalar_prefetch = 0 : i64, scratch_operands = 1 : i64, tpu.core_type = #tpu.core_type<tc>, window_params = [{transform_indices = @transform_0, window_bounds = array<i64: 16, 32>}, {pipeline_mode = #tpu.pipeline_mode<synchronous>, transform_indices = @transform_1, window_bounds = array<i64: 1, 32>}, {pipeline_mode = #tpu.pipeline_mode<synchronous>, transform_indices = @transform_2, window_bounds = array<i64: 1, 32>}, {transform_indices = @transform_3, window_bounds = array<i64: 32, 96>}, {transform_indices = @transform_4, window_bounds = array<i64: 1, 96>}, {transform_indices = @transform_5, window_bounds = array<i64: 16, 96>}]} {
    %c0_i32 = arith.constant 0 : i32
    %0 = arith.cmpi eq, %arg1, %c0_i32 : i32
    %1 = arith.extui %0 : i1 to i32
    %c0_i32_0 = arith.constant 0 : i32
    %2 = arith.cmpi ne, %1, %c0_i32_0 : i32
    scf.if %2 {
      %c0_8 = arith.constant 0 : index
      %c0_9 = arith.constant 0 : index
      %11 = vector.load %arg2[%c0_8, %c0_9] : memref<16x32xf32, #tpu.memory_space<vmem>>, vector<16x32xf32>
      %cst_10 = arith.constant dense<0.000000e+00> : vector<16xf32>
      %12 = vector.multi_reduction <add>, %11, %cst_10 [1] : vector<16x32xf32> to vector<16xf32>
      %13 = vector.shape_cast %12 : vector<16xf32> to vector<16x1xf32>
      %cst_11 = arith.constant 3.200000e+01 : f32
      %14 = vector.broadcast %cst_11 : f32 to vector<16x1xf32>
      %15 = arith.divf %13, %14 : vector<16x1xf32>
      %16 = vector.broadcast %15 : vector<16x1xf32> to vector<16x32xf32>
      %17 = arith.subf %11, %16 : vector<16x32xf32>
      %18 = arith.mulf %17, %17 : vector<16x32xf32>
      %cst_12 = arith.constant dense<0.000000e+00> : vector<16xf32>
      %19 = vector.multi_reduction <add>, %18, %cst_12 [1] : vector<16x32xf32> to vector<16xf32>
      %20 = vector.shape_cast %19 : vector<16xf32> to vector<16x1xf32>
      %cst_13 = arith.constant 3.200000e+01 : f32
      %21 = vector.broadcast %cst_13 : f32 to vector<16x1xf32>
      %22 = arith.divf %20, %21 : vector<16x1xf32>
      %cst_14 = arith.constant 9.99999974E-6 : f32
      %23 = vector.broadcast %cst_14 : f32 to vector<16x1xf32>
      %24 = arith.addf %22, %23 : vector<16x1xf32>
      %25 = math.rsqrt %24 : vector<16x1xf32>
      %26 = vector.broadcast %25 : vector<16x1xf32> to vector<16x32xf32>
      %27 = arith.mulf %17, %26 : vector<16x32xf32>
      %c0_15 = arith.constant 0 : index
      %c0_16 = arith.constant 0 : index
      %28 = vector.load %arg3[%c0_15, %c0_16] : memref<1x32xf32, #tpu.memory_space<vmem>>, vector<1x32xf32>
      %29 = vector.broadcast %28 : vector<1x32xf32> to vector<16x32xf32>
      %30 = arith.mulf %27, %29 : vector<16x32xf32>
      %c0_17 = arith.constant 0 : index
      %c0_18 = arith.constant 0 : index
      %31 = vector.load %arg4[%c0_17, %c0_18] : memref<1x32xf32, #tpu.memory_space<vmem>>, vector<1x32xf32>
      %32 = vector.broadcast %31 : vector<1x32xf32> to vector<16x32xf32>
      %33 = arith.addf %30, %32 : vector<16x32xf32>
      %34 = arith.truncf %33 : vector<16x32xf32> to vector<16x32xbf16>
      %c0_19 = arith.constant 0 : index
      %c0_20 = arith.constant 0 : index
      %35 = vector.load %arg8[%c0_19, %c0_20] : memref<16x32xbf16, #tpu.memory_space<vmem>>, vector<16x32xbf16>
      tpu.vector_store %arg8[%c0_19, %c0_20], %34 {strides = array<i32>} : memref<16x32xbf16, #tpu.memory_space<vmem>>, vector<16x32xbf16>,
    } else {
    }
    %c0 = arith.constant 0 : index
    %c0_1 = arith.constant 0 : index
    %3 = vector.load %arg8[%c0, %c0_1] : memref<16x32xbf16, #tpu.memory_space<vmem>>, vector<16x32xbf16>
    %c0_2 = arith.constant 0 : index
    %c0_3 = arith.constant 0 : index
    %4 = vector.load %arg5[%c0_2, %c0_3] : memref<32x96xbf16, #tpu.memory_space<vmem>>, vector<32x96xbf16>
    %cst = arith.constant dense<0.000000e+00> : vector<16x96xf32>
    %5 = tpu.matmul %3, %4, %cst {dimension_numbers = #tpu.dot_dimension_numbers<[1], [0], [0], [1], [0, 0, 1, 1], [], []>} : vector<16x32xbf16>, vector<32x96xbf16>, vector<16x96xf32> -> vector<16x96xf32>
    %c0_4 = arith.constant 0 : index
    %c0_5 = arith.constant 0 : index
    %6 = vector.load %arg6[%c0_4, %c0_5] : memref<1x96xf32, #tpu.memory_space<vmem>>, vector<1x96xf32>
    %7 = vector.broadcast %6 : vector<1x96xf32> to vector<16x96xf32>
    %8 = arith.addf %5, %7 : vector<16x96xf32>
    %9 = arith.truncf %8 : vector<16x96xf32> to vector<16x96xbf16>
    %c0_6 = arith.constant 0 : index
    %c0_7 = arith.constant 0 : index
    %10 = vector.load %arg7[%c0_6, %c0_7] : memref<16x96xbf16, #tpu.memory_space<vmem>>, vector<16x96xbf16>
    tpu.vector_store %arg7[%c0_6, %c0_7], %9 {strides = array<i32>} : memref<16x96xbf16, #tpu.memory_space<vmem>>, vector<16x96xbf16>,
    return
  }
  func.func @transform_0(%arg0: i32, %arg1: i32) -> (i32, i32) {
    %c0_i32 = arith.constant 0 : i32
    %c0_i32_0 = arith.constant 0 : i32
    return %arg0, %c0_i32 : i32, i32
  }
  func.func @transform_1(%arg0: i32, %arg1: i32) -> (i32, i32) {
    %c0_i32 = arith.constant 0 : i32
    %c0_i32_0 = arith.constant 0 : i32
    %c0_i32_1 = arith.constant 0 : i32
    return %c0_i32, %c0_i32_0 : i32, i32
  }
  func.func @transform_2(%arg0: i32, %arg1: i32) -> (i32, i32) {
    %c0_i32 = arith.constant 0 : i32
    %c0_i32_0 = arith.constant 0 : i32
    %c0_i32_1 = arith.constant 0 : i32
    return %c0_i32, %c0_i32_0 : i32, i32
  }
  func.func @transform_3(%arg0: i32, %arg1: i32) -> (i32, i32) {
    %c0_i32 = arith.constant 0 : i32
    %c0_i32_0 = arith.constant 0 : i32
    return %c0_i32, %arg1 : i32, i32
  }
  func.func @transform_4(%arg0: i32, %arg1: i32) -> (i32, i32) {
    %c0_i32 = arith.constant 0 : i32
    %c0_i32_0 = arith.constant 0 : i32
    return %c0_i32, %arg1 : i32, i32
  }
  func.func @transform_5(%arg0: i32, %arg1: i32) -> (i32, i32) {
    %c0_i32 = arith.constant 0 : i32
    return %arg0, %arg1 : i32, i32
  }
}

module attributes {stable_mosaic.version = 11 : i64} {
  func.func @_matmul_kernel(%arg0: i32, %arg1: i32, %arg2: i32, %arg3: memref<16x32xbf16, #tpu.memory_space<vmem>>, %arg4: memref<32x32xbf16, #tpu.memory_space<vmem>>, %arg5: memref<1x32xf32, #tpu.memory_space<vmem>>, %arg6: memref<16x32xf32, #tpu.memory_space<vmem>>, %arg7: memref<16x32xf32, #tpu.memory_space<vmem>>, %arg8: memref<16x32xf32, #tpu.memory_space<vmem>>) attributes {dimension_semantics = [#tpu.dimension_semantics<parallel>, #tpu.dimension_semantics<parallel>, #tpu.dimension_semantics<arbitrary>], iteration_bounds = array<i64: 1, 1, 1>, scalar_prefetch = 0 : i64, scratch_operands = 1 : i64, tpu.core_type = #tpu.core_type<tc>, window_params = [{transform_indices = @transform_0, window_bounds = array<i64: 16, 32>}, {transform_indices = @transform_1, window_bounds = array<i64: 32, 32>}, {transform_indices = @transform_2, window_bounds = array<i64: 1, 32>}, {transform_indices = @transform_3, window_bounds = array<i64: 16, 32>}, {transform_indices = @transform_4, window_bounds = array<i64: 16, 32>}]} {
    %c0_i32 = arith.constant 0 : i32
    %0 = arith.cmpi eq, %arg2, %c0_i32 : i32
    %1 = arith.extui %0 : i1 to i32
    %c0_i32_0 = arith.constant 0 : i32
    %2 = arith.cmpi ne, %1, %c0_i32_0 : i32
    scf.if %2 {
      %cst_10 = arith.constant 0.000000e+00 : f32
      %12 = vector.broadcast %cst_10 : f32 to vector<16x32xf32>
      %c0_11 = arith.constant 0 : index
      %c0_12 = arith.constant 0 : index
      %13 = vector.load %arg8[%c0_11, %c0_12] : memref<16x32xf32, #tpu.memory_space<vmem>>, vector<16x32xf32>
      tpu.vector_store %arg8[%c0_11, %c0_12], %12 {strides = array<i32>} : memref<16x32xf32, #tpu.memory_space<vmem>>, vector<16x32xf32>,
    } else {
    }
    %c0 = arith.constant 0 : index
    %c0_1 = arith.constant 0 : index
    %3 = vector.load %arg8[%c0, %c0_1] : memref<16x32xf32, #tpu.memory_space<vmem>>, vector<16x32xf32>
    %c0_2 = arith.constant 0 : index
    %c0_3 = arith.constant 0 : index
    %4 = vector.load %arg3[%c0_2, %c0_3] : memref<16x32xbf16, #tpu.memory_space<vmem>>, vector<16x32xbf16>
    %c0_4 = arith.constant 0 : index
    %c0_5 = arith.constant 0 : index
    %5 = vector.load %arg4[%c0_4, %c0_5] : memref<32x32xbf16, #tpu.memory_space<vmem>>, vector<32x32xbf16>
    %cst = arith.constant dense<0.000000e+00> : vector<16x32xf32>
    %6 = tpu.matmul %4, %5, %cst {dimension_numbers = #tpu.dot_dimension_numbers<[1], [0], [0], [1], [0, 0, 1, 1], [], []>} : vector<16x32xbf16>, vector<32x32xbf16>, vector<16x32xf32> -> vector<16x32xf32>
    %7 = arith.addf %3, %6 : vector<16x32xf32>
    %c0_6 = arith.constant 0 : index
    %c0_7 = arith.constant 0 : index
    %8 = vector.load %arg8[%c0_6, %c0_7] : memref<16x32xf32, #tpu.memory_space<vmem>>, vector<16x32xf32>
    tpu.vector_store %arg8[%c0_6, %c0_7], %7 {strides = array<i32>} : memref<16x32xf32, #tpu.memory_space<vmem>>, vector<16x32xf32>,
    %c0_i32_8 = arith.constant 0 : i32
    %9 = arith.cmpi eq, %arg2, %c0_i32_8 : i32
    %10 = arith.extui %9 : i1 to i32
    %c0_i32_9 = arith.constant 0 : i32
    %11 = arith.cmpi ne, %10, %c0_i32_9 : i32
    scf.if %11 {
      %c0_10 = arith.constant 0 : index
      %c0_11 = arith.constant 0 : index
      %12 = vector.load %arg8[%c0_10, %c0_11] : memref<16x32xf32, #tpu.memory_space<vmem>>, vector<16x32xf32>
      %c0_12 = arith.constant 0 : index
      %c0_13 = arith.constant 0 : index
      %13 = vector.load %arg5[%c0_12, %c0_13] : memref<1x32xf32, #tpu.memory_space<vmem>>, vector<1x32xf32>
      %14 = vector.broadcast %13 : vector<1x32xf32> to vector<16x32xf32>
      %15 = arith.addf %12, %14 : vector<16x32xf32>
      %c0_14 = arith.constant 0 : index
      %c0_15 = arith.constant 0 : index
      %16 = vector.load %arg6[%c0_14, %c0_15] : memref<16x32xf32, #tpu.memory_space<vmem>>, vector<16x32xf32>
      %17 = arith.addf %15, %16 : vector<16x32xf32>
      %c0_16 = arith.constant 0 : index
      %c0_17 = arith.constant 0 : index
      %18 = vector.load %arg7[%c0_16, %c0_17] : memref<16x32xf32, #tpu.memory_space<vmem>>, vector<16x32xf32>
      tpu.vector_store %arg7[%c0_16, %c0_17], %17 {strides = array<i32>} : memref<16x32xf32, #tpu.memory_space<vmem>>, vector<16x32xf32>,
    } else {
    }
    return
  }
  func.func @transform_0(%arg0: i32, %arg1: i32, %arg2: i32) -> (i32, i32) {
    %c0_i32 = arith.constant 0 : i32
    return %arg0, %arg2 : i32, i32
  }
  func.func @transform_1(%arg0: i32, %arg1: i32, %arg2: i32) -> (i32, i32) {
    %c0_i32 = arith.constant 0 : i32
    return %arg2, %arg1 : i32, i32
  }
  func.func @transform_2(%arg0: i32, %arg1: i32, %arg2: i32) -> (i32, i32) {
    %c0_i32 = arith.constant 0 : i32
    %c0_i32_0 = arith.constant 0 : i32
    return %c0_i32, %arg1 : i32, i32
  }
  func.func @transform_3(%arg0: i32, %arg1: i32, %arg2: i32) -> (i32, i32) {
    %c0_i32 = arith.constant 0 : i32
    return %arg0, %arg1 : i32, i32
  }
  func.func @transform_4(%arg0: i32, %arg1: i32, %arg2: i32) -> (i32, i32) {
    %c0_i32 = arith.constant 0 : i32
    return %arg0, %arg1 : i32, i32
  }
}

module attributes {stable_mosaic.version = 11 : i64} {
  func.func @_self_attn_kernel(%arg0: i32, %arg1: memref<1x8x96xbf16, #tpu.memory_space<vmem>>, %arg2: memref<1x8x32xbf16, #tpu.memory_space<vmem>>) attributes {dimension_semantics = [#tpu.dimension_semantics<parallel>], iteration_bounds = array<i64: 2>, scalar_prefetch = 0 : i64, scratch_operands = 0 : i64, tpu.core_type = #tpu.core_type<tc>, window_params = [{transform_indices = @transform_0, window_bounds = array<i64: 1, 8, 96>}, {transform_indices = @transform_1, window_bounds = array<i64: 1, 8, 32>}]} {
    %c0 = arith.constant 0 : index
    %c0_0 = arith.constant 0 : index
    %c0_1 = arith.constant 0 : index
    %0 = vector.load %arg1[%c0, %c0_0, %c0_1] : memref<1x8x96xbf16, #tpu.memory_space<vmem>>, vector<1x8x96xbf16>
    %1 = vector.shape_cast %0 : vector<1x8x96xbf16> to vector<8x96xbf16>
    %2 = tpu.iota {dimensions = array<i32: 0>} : vector<8x8xi32>
    %3 = tpu.iota {dimensions = array<i32: 1>} : vector<8x8xi32>
    %4 = arith.cmpi sgt, %3, %2 : vector<8x8xi32>
    %c7_i32 = arith.constant 7 : i32
    %5 = vector.broadcast %c7_i32 : i32 to vector<8x8xi32>
    %6 = arith.subi %2, %5 : vector<8x8xi32>
    %7 = arith.cmpi slt, %3, %6 : vector<8x8xi32>
    %8 = arith.ori %4, %7 : vector<8x8xi1>
    %9 = vector.extract_strided_slice %1 {offsets = [0, 0], sizes = [8, 8], strides = [1, 1]} : vector<8x96xbf16> to vector<8x8xbf16>
    %10 = arith.extf %9 : vector<8x8xbf16> to vector<8x8xf32>
    %cst = arith.constant 0.353553385 : f32
    %11 = vector.broadcast %cst : f32 to vector<8x8xf32>
    %12 = arith.mulf %10, %11 : vector<8x8xf32>
    %13 = arith.truncf %12 : vector<8x8xf32> to vector<8x8xbf16>
    %14 = vector.extract_strided_slice %1 {offsets = [0, 32], sizes = [8, 8], strides = [1, 1]} : vector<8x96xbf16> to vector<8x8xbf16>
    %15 = vector.extract_strided_slice %1 {offsets = [0, 64], sizes = [8, 8], strides = [1, 1]} : vector<8x96xbf16> to vector<8x8xbf16>
    %cst_2 = arith.constant dense<0.000000e+00> : vector<8x8xf32>
    %16 = tpu.matmul %13, %14, %cst_2 {dimension_numbers = #tpu.dot_dimension_numbers<[1], [1], [0], [0], [0, 0, 1, 0], [], []>} : vector<8x8xbf16>, vector<8x8xbf16>, vector<8x8xf32> -> vector<8x8xf32>
    %cst_3 = arith.constant -1.000000e+30 : f32
    %17 = vector.broadcast %cst_3 : f32 to vector<8x8xf32>
    %18 = arith.select %8, %17, %16 : vector<8x8xi1>, vector<8x8xf32>
    %cst_4 = arith.constant dense<0xFF800000> : vector<8xf32>
    %19 = vector.multi_reduction <maximumf>, %18, %cst_4 [1] : vector<8x8xf32> to vector<8xf32>
    %20 = vector.shape_cast %19 : vector<8xf32> to vector<8x1xf32>
    %21 = vector.broadcast %20 : vector<8x1xf32> to vector<8x8xf32>
    %22 = arith.subf %18, %21 : vector<8x8xf32>
    %23 = math.exp %22 : vector<8x8xf32>
    %cst_5 = arith.constant dense<0.000000e+00> : vector<8xf32>
    %24 = vector.multi_reduction <add>, %23, %cst_5 [1] : vector<8x8xf32> to vector<8xf32>
    %25 = vector.shape_cast %24 : vector<8xf32> to vector<8x1xf32>
    %26 = tpu.reciprocal %25 {approx = true} : vector<8x1xf32> -> vector<8x1xf32>
    %27 = vector.broadcast %26 : vector<8x1xf32> to vector<8x8xf32>
    %28 = arith.mulf %23, %27 : vector<8x8xf32>
    %29 = arith.truncf %28 : vector<8x8xf32> to vector<8x8xbf16>
    %cst_6 = arith.constant dense<0.000000e+00> : vector<8x8xf32>
    %30 = tpu.matmul %29, %15, %cst_6 {dimension_numbers = #tpu.dot_dimension_numbers<[1], [0], [0], [1], [0, 0, 1, 1], [], []>} : vector<8x8xbf16>, vector<8x8xbf16>, vector<8x8xf32> -> vector<8x8xf32>
    %31 = vector.extract_strided_slice %1 {offsets = [0, 8], sizes = [8, 8], strides = [1, 1]} : vector<8x96xbf16> to vector<8x8xbf16>
    %32 = arith.extf %31 : vector<8x8xbf16> to vector<8x8xf32>
    %cst_7 = arith.constant 0.353553385 : f32
    %33 = vector.broadcast %cst_7 : f32 to vector<8x8xf32>
    %34 = arith.mulf %32, %33 : vector<8x8xf32>
    %35 = arith.truncf %34 : vector<8x8xf32> to vector<8x8xbf16>
    %36 = vector.extract_strided_slice %1 {offsets = [0, 40], sizes = [8, 8], strides = [1, 1]} : vector<8x96xbf16> to vector<8x8xbf16>
    %37 = vector.extract_strided_slice %1 {offsets = [0, 72], sizes = [8, 8], strides = [1, 1]} : vector<8x96xbf16> to vector<8x8xbf16>
    %cst_8 = arith.constant dense<0.000000e+00> : vector<8x8xf32>
    %38 = tpu.matmul %35, %36, %cst_8 {dimension_numbers = #tpu.dot_dimension_numbers<[1], [1], [0], [0], [0, 0, 1, 0], [], []>} : vector<8x8xbf16>, vector<8x8xbf16>, vector<8x8xf32> -> vector<8x8xf32>
    %cst_9 = arith.constant -1.000000e+30 : f32
    %39 = vector.broadcast %cst_9 : f32 to vector<8x8xf32>
    %40 = arith.select %8, %39, %38 : vector<8x8xi1>, vector<8x8xf32>
    %cst_10 = arith.constant dense<0xFF800000> : vector<8xf32>
    %41 = vector.multi_reduction <maximumf>, %40, %cst_10 [1] : vector<8x8xf32> to vector<8xf32>
    %42 = vector.shape_cast %41 : vector<8xf32> to vector<8x1xf32>
    %43 = vector.broadcast %42 : vector<8x1xf32> to vector<8x8xf32>
    %44 = arith.subf %40, %43 : vector<8x8xf32>
    %45 = math.exp %44 : vector<8x8xf32>
    %cst_11 = arith.constant dense<0.000000e+00> : vector<8xf32>
    %46 = vector.multi_reduction <add>, %45, %cst_11 [1] : vector<8x8xf32> to vector<8xf32>
    %47 = vector.shape_cast %46 : vector<8xf32> to vector<8x1xf32>
    %48 = tpu.reciprocal %47 {approx = true} : vector<8x1xf32> -> vector<8x1xf32>
    %49 = vector.broadcast %48 : vector<8x1xf32> to vector<8x8xf32>
    %50 = arith.mulf %45, %49 : vector<8x8xf32>
    %51 = arith.truncf %50 : vector<8x8xf32> to vector<8x8xbf16>
    %cst_12 = arith.constant dense<0.000000e+00> : vector<8x8xf32>
    %52 = tpu.matmul %51, %37, %cst_12 {dimension_numbers = #tpu.dot_dimension_numbers<[1], [0], [0], [1], [0, 0, 1, 1], [], []>} : vector<8x8xbf16>, vector<8x8xbf16>, vector<8x8xf32> -> vector<8x8xf32>
    %53 = vector.extract_strided_slice %1 {offsets = [0, 16], sizes = [8, 8], strides = [1, 1]} : vector<8x96xbf16> to vector<8x8xbf16>
    %54 = arith.extf %53 : vector<8x8xbf16> to vector<8x8xf32>
    %cst_13 = arith.constant 0.353553385 : f32
    %55 = vector.broadcast %cst_13 : f32 to vector<8x8xf32>
    %56 = arith.mulf %54, %55 : vector<8x8xf32>
    %57 = arith.truncf %56 : vector<8x8xf32> to vector<8x8xbf16>
    %58 = vector.extract_strided_slice %1 {offsets = [0, 48], sizes = [8, 8], strides = [1, 1]} : vector<8x96xbf16> to vector<8x8xbf16>
    %59 = vector.extract_strided_slice %1 {offsets = [0, 80], sizes = [8, 8], strides = [1, 1]} : vector<8x96xbf16> to vector<8x8xbf16>
    %cst_14 = arith.constant dense<0.000000e+00> : vector<8x8xf32>
    %60 = tpu.matmul %57, %58, %cst_14 {dimension_numbers = #tpu.dot_dimension_numbers<[1], [1], [0], [0], [0, 0, 1, 0], [], []>} : vector<8x8xbf16>, vector<8x8xbf16>, vector<8x8xf32> -> vector<8x8xf32>
    %cst_15 = arith.constant -1.000000e+30 : f32
    %61 = vector.broadcast %cst_15 : f32 to vector<8x8xf32>
    %62 = arith.select %8, %61, %60 : vector<8x8xi1>, vector<8x8xf32>
    %cst_16 = arith.constant dense<0xFF800000> : vector<8xf32>
    %63 = vector.multi_reduction <maximumf>, %62, %cst_16 [1] : vector<8x8xf32> to vector<8xf32>
    %64 = vector.shape_cast %63 : vector<8xf32> to vector<8x1xf32>
    %65 = vector.broadcast %64 : vector<8x1xf32> to vector<8x8xf32>
    %66 = arith.subf %62, %65 : vector<8x8xf32>
    %67 = math.exp %66 : vector<8x8xf32>
    %cst_17 = arith.constant dense<0.000000e+00> : vector<8xf32>
    %68 = vector.multi_reduction <add>, %67, %cst_17 [1] : vector<8x8xf32> to vector<8xf32>
    %69 = vector.shape_cast %68 : vector<8xf32> to vector<8x1xf32>
    %70 = tpu.reciprocal %69 {approx = true} : vector<8x1xf32> -> vector<8x1xf32>
    %71 = vector.broadcast %70 : vector<8x1xf32> to vector<8x8xf32>
    %72 = arith.mulf %67, %71 : vector<8x8xf32>
    %73 = arith.truncf %72 : vector<8x8xf32> to vector<8x8xbf16>
    %cst_18 = arith.constant dense<0.000000e+00> : vector<8x8xf32>
    %74 = tpu.matmul %73, %59, %cst_18 {dimension_numbers = #tpu.dot_dimension_numbers<[1], [0], [0], [1], [0, 0, 1, 1], [], []>} : vector<8x8xbf16>, vector<8x8xbf16>, vector<8x8xf32> -> vector<8x8xf32>
    %75 = vector.extract_strided_slice %1 {offsets = [0, 24], sizes = [8, 8], strides = [1, 1]} : vector<8x96xbf16> to vector<8x8xbf16>
    %76 = arith.extf %75 : vector<8x8xbf16> to vector<8x8xf32>
    %cst_19 = arith.constant 0.353553385 : f32
    %77 = vector.broadcast %cst_19 : f32 to vector<8x8xf32>
    %78 = arith.mulf %76, %77 : vector<8x8xf32>
    %79 = arith.truncf %78 : vector<8x8xf32> to vector<8x8xbf16>
    %80 = vector.extract_strided_slice %1 {offsets = [0, 56], sizes = [8, 8], strides = [1, 1]} : vector<8x96xbf16> to vector<8x8xbf16>
    %81 = vector.extract_strided_slice %1 {offsets = [0, 88], sizes = [8, 8], strides = [1, 1]} : vector<8x96xbf16> to vector<8x8xbf16>
    %cst_20 = arith.constant dense<0.000000e+00> : vector<8x8xf32>
    %82 = tpu.matmul %79, %80, %cst_20 {dimension_numbers = #tpu.dot_dimension_numbers<[1], [1], [0], [0], [0, 0, 1, 0], [], []>} : vector<8x8xbf16>, vector<8x8xbf16>, vector<8x8xf32> -> vector<8x8xf32>
    %cst_21 = arith.constant -1.000000e+30 : f32
    %83 = vector.broadcast %cst_21 : f32 to vector<8x8xf32>
    %84 = arith.select %8, %83, %82 : vector<8x8xi1>, vector<8x8xf32>
    %cst_22 = arith.constant dense<0xFF800000> : vector<8xf32>
    %85 = vector.multi_reduction <maximumf>, %84, %cst_22 [1] : vector<8x8xf32> to vector<8xf32>
    %86 = vector.shape_cast %85 : vector<8xf32> to vector<8x1xf32>
    %87 = vector.broadcast %86 : vector<8x1xf32> to vector<8x8xf32>
    %88 = arith.subf %84, %87 : vector<8x8xf32>
    %89 = math.exp %88 : vector<8x8xf32>
    %cst_23 = arith.constant dense<0.000000e+00> : vector<8xf32>
    %90 = vector.multi_reduction <add>, %89, %cst_23 [1] : vector<8x8xf32> to vector<8xf32>
    %91 = vector.shape_cast %90 : vector<8xf32> to vector<8x1xf32>
    %92 = tpu.reciprocal %91 {approx = true} : vector<8x1xf32> -> vector<8x1xf32>
    %93 = vector.broadcast %92 : vector<8x1xf32> to vector<8x8xf32>
    %94 = arith.mulf %89, %93 : vector<8x8xf32>
    %95 = arith.truncf %94 : vector<8x8xf32> to vector<8x8xbf16>
    %cst_24 = arith.constant dense<0.000000e+00> : vector<8x8xf32>
    %96 = tpu.matmul %95, %81, %cst_24 {dimension_numbers = #tpu.dot_dimension_numbers<[1], [0], [0], [1], [0, 0, 1, 1], [], []>} : vector<8x8xbf16>, vector<8x8xbf16>, vector<8x8xf32> -> vector<8x8xf32>
    %97 = tpu.concatenate %30, %52, %74, %96 in 1 : vector<8x8xf32>, vector<8x8xf32>, vector<8x8xf32>, vector<8x8xf32> -> vector<8x32xf32>
    %98 = arith.truncf %97 : vector<8x32xf32> to vector<8x32xbf16>
    %c0_25 = arith.constant 0 : index
    %c0_26 = arith.constant 0 : index
    %c0_27 = arith.constant 0 : index
    %99 = vector.load %arg2[%c0_25, %c0_26, %c0_27] : memref<1x8x32xbf16, #tpu.memory_space<vmem>>, vector<1x8x32xbf16>
    %100 = vector.shape_cast %99 : vector<1x8x32xbf16> to vector<8x32xbf16>
    %101 = vector.shape_cast %98 : vector<8x32xbf16> to vector<1x8x32xbf16>
    tpu.vector_store %arg2[%c0_25, %c0_26, %c0_27], %101 {strides = array<i32>} : memref<1x8x32xbf16, #tpu.memory_space<vmem>>, vector<1x8x32xbf16>,
    return
  }
  func.func @transform_0(%arg0: i32) -> (i32, i32, i32) {
    %c0_i32 = arith.constant 0 : i32
    %c0_i32_0 = arith.constant 0 : i32
    %c0_i32_1 = arith.constant 0 : i32
    return %arg0, %c0_i32, %c0_i32_0 : i32, i32, i32
  }
  func.func @transform_1(%arg0: i32) -> (i32, i32, i32) {
    %c0_i32 = arith.constant 0 : i32
    %c0_i32_0 = arith.constant 0 : i32
    %c0_i32_1 = arith.constant 0 : i32
    return %arg0, %c0_i32, %c0_i32_0 : i32, i32, i32
  }
}

module attributes {stable_mosaic.version = 11 : i64} {
  func.func @_ln_matmul_kernel(%arg0: i32, %arg1: i32, %arg2: memref<16x32xf32, #tpu.memory_space<vmem>>, %arg3: memref<1x32xf32, #tpu.memory_space<vmem>>, %arg4: memref<1x32xf32, #tpu.memory_space<vmem>>, %arg5: memref<32x32xbf16, #tpu.memory_space<vmem>>, %arg6: memref<1x32xf32, #tpu.memory_space<vmem>>, %arg7: memref<16x32xbf16, #tpu.memory_space<vmem>>, %arg8: memref<16x32xbf16, #tpu.memory_space<vmem>>) attributes {dimension_semantics = [#tpu.dimension_semantics<parallel>, #tpu.dimension_semantics<arbitrary>], iteration_bounds = array<i64: 1, 1>, scalar_prefetch = 0 : i64, scratch_operands = 1 : i64, tpu.core_type = #tpu.core_type<tc>, window_params = [{transform_indices = @transform_0, window_bounds = array<i64: 16, 32>}, {pipeline_mode = #tpu.pipeline_mode<synchronous>, transform_indices = @transform_1, window_bounds = array<i64: 1, 32>}, {pipeline_mode = #tpu.pipeline_mode<synchronous>, transform_indices = @transform_2, window_bounds = array<i64: 1, 32>}, {transform_indices = @transform_3, window_bounds = array<i64: 32, 32>}, {transform_indices = @transform_4, window_bounds = array<i64: 1, 32>}, {transform_indices = @transform_5, window_bounds = array<i64: 16, 32>}]} {
    %c0_i32 = arith.constant 0 : i32
    %0 = arith.cmpi eq, %arg1, %c0_i32 : i32
    %1 = arith.extui %0 : i1 to i32
    %c0_i32_0 = arith.constant 0 : i32
    %2 = arith.cmpi ne, %1, %c0_i32_0 : i32
    scf.if %2 {
      %c0_8 = arith.constant 0 : index
      %c0_9 = arith.constant 0 : index
      %11 = vector.load %arg2[%c0_8, %c0_9] : memref<16x32xf32, #tpu.memory_space<vmem>>, vector<16x32xf32>
      %cst_10 = arith.constant dense<0.000000e+00> : vector<16xf32>
      %12 = vector.multi_reduction <add>, %11, %cst_10 [1] : vector<16x32xf32> to vector<16xf32>
      %13 = vector.shape_cast %12 : vector<16xf32> to vector<16x1xf32>
      %cst_11 = arith.constant 3.200000e+01 : f32
      %14 = vector.broadcast %cst_11 : f32 to vector<16x1xf32>
      %15 = arith.divf %13, %14 : vector<16x1xf32>
      %16 = vector.broadcast %15 : vector<16x1xf32> to vector<16x32xf32>
      %17 = arith.subf %11, %16 : vector<16x32xf32>
      %18 = arith.mulf %17, %17 : vector<16x32xf32>
      %cst_12 = arith.constant dense<0.000000e+00> : vector<16xf32>
      %19 = vector.multi_reduction <add>, %18, %cst_12 [1] : vector<16x32xf32> to vector<16xf32>
      %20 = vector.shape_cast %19 : vector<16xf32> to vector<16x1xf32>
      %cst_13 = arith.constant 3.200000e+01 : f32
      %21 = vector.broadcast %cst_13 : f32 to vector<16x1xf32>
      %22 = arith.divf %20, %21 : vector<16x1xf32>
      %cst_14 = arith.constant 9.99999974E-6 : f32
      %23 = vector.broadcast %cst_14 : f32 to vector<16x1xf32>
      %24 = arith.addf %22, %23 : vector<16x1xf32>
      %25 = math.rsqrt %24 : vector<16x1xf32>
      %26 = vector.broadcast %25 : vector<16x1xf32> to vector<16x32xf32>
      %27 = arith.mulf %17, %26 : vector<16x32xf32>
      %c0_15 = arith.constant 0 : index
      %c0_16 = arith.constant 0 : index
      %28 = vector.load %arg3[%c0_15, %c0_16] : memref<1x32xf32, #tpu.memory_space<vmem>>, vector<1x32xf32>
      %29 = vector.broadcast %28 : vector<1x32xf32> to vector<16x32xf32>
      %30 = arith.mulf %27, %29 : vector<16x32xf32>
      %c0_17 = arith.constant 0 : index
      %c0_18 = arith.constant 0 : index
      %31 = vector.load %arg4[%c0_17, %c0_18] : memref<1x32xf32, #tpu.memory_space<vmem>>, vector<1x32xf32>
      %32 = vector.broadcast %31 : vector<1x32xf32> to vector<16x32xf32>
      %33 = arith.addf %30, %32 : vector<16x32xf32>
      %34 = arith.truncf %33 : vector<16x32xf32> to vector<16x32xbf16>
      %c0_19 = arith.constant 0 : index
      %c0_20 = arith.constant 0 : index
      %35 = vector.load %arg8[%c0_19, %c0_20] : memref<16x32xbf16, #tpu.memory_space<vmem>>, vector<16x32xbf16>
      tpu.vector_store %arg8[%c0_19, %c0_20], %34 {strides = array<i32>} : memref<16x32xbf16, #tpu.memory_space<vmem>>, vector<16x32xbf16>,
    } else {
    }
    %c0 = arith.constant 0 : index
    %c0_1 = arith.constant 0 : index
    %3 = vector.load %arg8[%c0, %c0_1] : memref<16x32xbf16, #tpu.memory_space<vmem>>, vector<16x32xbf16>
    %c0_2 = arith.constant 0 : index
    %c0_3 = arith.constant 0 : index
    %4 = vector.load %arg5[%c0_2, %c0_3] : memref<32x32xbf16, #tpu.memory_space<vmem>>, vector<32x32xbf16>
    %cst = arith.constant dense<0.000000e+00> : vector<16x32xf32>
    %5 = tpu.matmul %3, %4, %cst {dimension_numbers = #tpu.dot_dimension_numbers<[1], [0], [0], [1], [0, 0, 1, 1], [], []>} : vector<16x32xbf16>, vector<32x32xbf16>, vector<16x32xf32> -> vector<16x32xf32>
    %c0_4 = arith.constant 0 : index
    %c0_5 = arith.constant 0 : index
    %6 = vector.load %arg6[%c0_4, %c0_5] : memref<1x32xf32, #tpu.memory_space<vmem>>, vector<1x32xf32>
    %7 = vector.broadcast %6 : vector<1x32xf32> to vector<16x32xf32>
    %8 = arith.addf %5, %7 : vector<16x32xf32>
    %9 = arith.truncf %8 : vector<16x32xf32> to vector<16x32xbf16>
    %c0_6 = arith.constant 0 : index
    %c0_7 = arith.constant 0 : index
    %10 = vector.load %arg7[%c0_6, %c0_7] : memref<16x32xbf16, #tpu.memory_space<vmem>>, vector<16x32xbf16>
    tpu.vector_store %arg7[%c0_6, %c0_7], %9 {strides = array<i32>} : memref<16x32xbf16, #tpu.memory_space<vmem>>, vector<16x32xbf16>,
    return
  }
  func.func @transform_0(%arg0: i32, %arg1: i32) -> (i32, i32) {
    %c0_i32 = arith.constant 0 : i32
    %c0_i32_0 = arith.constant 0 : i32
    return %arg0, %c0_i32 : i32, i32
  }
  func.func @transform_1(%arg0: i32, %arg1: i32) -> (i32, i32) {
    %c0_i32 = arith.constant 0 : i32
    %c0_i32_0 = arith.constant 0 : i32
    %c0_i32_1 = arith.constant 0 : i32
    return %c0_i32, %c0_i32_0 : i32, i32
  }
  func.func @transform_2(%arg0: i32, %arg1: i32) -> (i32, i32) {
    %c0_i32 = arith.constant 0 : i32
    %c0_i32_0 = arith.constant 0 : i32
    %c0_i32_1 = arith.constant 0 : i32
    return %c0_i32, %c0_i32_0 : i32, i32
  }
  func.func @transform_3(%arg0: i32, %arg1: i32) -> (i32, i32) {
    %c0_i32 = arith.constant 0 : i32
    %c0_i32_0 = arith.constant 0 : i32
    return %c0_i32, %arg1 : i32, i32
  }
  func.func @transform_4(%arg0: i32, %arg1: i32) -> (i32, i32) {
    %c0_i32 = arith.constant 0 : i32
    %c0_i32_0 = arith.constant 0 : i32
    return %c0_i32, %arg1 : i32, i32
  }
  func.func @transform_5(%arg0: i32, %arg1: i32) -> (i32, i32) {
    %c0_i32 = arith.constant 0 : i32
    return %arg0, %arg1 : i32, i32
  }
}

module attributes {stable_mosaic.version = 11 : i64} {
  func.func @_matmul_kernel(%arg0: i32, %arg1: i32, %arg2: i32, %arg3: memref<8x32xbf16, #tpu.memory_space<vmem>>, %arg4: memref<32x64xbf16, #tpu.memory_space<vmem>>, %arg5: memref<1x64xf32, #tpu.memory_space<vmem>>, %arg6: memref<8x64xbf16, #tpu.memory_space<vmem>>, %arg7: memref<8x64xf32, #tpu.memory_space<vmem>>) attributes {dimension_semantics = [#tpu.dimension_semantics<parallel>, #tpu.dimension_semantics<parallel>, #tpu.dimension_semantics<arbitrary>], iteration_bounds = array<i64: 1, 1, 1>, scalar_prefetch = 0 : i64, scratch_operands = 1 : i64, tpu.core_type = #tpu.core_type<tc>, window_params = [{transform_indices = @transform_0, window_bounds = array<i64: 8, 32>}, {transform_indices = @transform_1, window_bounds = array<i64: 32, 64>}, {transform_indices = @transform_2, window_bounds = array<i64: 1, 64>}, {transform_indices = @transform_3, window_bounds = array<i64: 8, 64>}]} {
    %c0_i32 = arith.constant 0 : i32
    %0 = arith.cmpi eq, %arg2, %c0_i32 : i32
    %1 = arith.extui %0 : i1 to i32
    %c0_i32_0 = arith.constant 0 : i32
    %2 = arith.cmpi ne, %1, %c0_i32_0 : i32
    scf.if %2 {
      %cst_10 = arith.constant 0.000000e+00 : f32
      %12 = vector.broadcast %cst_10 : f32 to vector<8x64xf32>
      %c0_11 = arith.constant 0 : index
      %c0_12 = arith.constant 0 : index
      %13 = vector.load %arg7[%c0_11, %c0_12] : memref<8x64xf32, #tpu.memory_space<vmem>>, vector<8x64xf32>
      tpu.vector_store %arg7[%c0_11, %c0_12], %12 {strides = array<i32>} : memref<8x64xf32, #tpu.memory_space<vmem>>, vector<8x64xf32>,
    } else {
    }
    %c0 = arith.constant 0 : index
    %c0_1 = arith.constant 0 : index
    %3 = vector.load %arg7[%c0, %c0_1] : memref<8x64xf32, #tpu.memory_space<vmem>>, vector<8x64xf32>
    %c0_2 = arith.constant 0 : index
    %c0_3 = arith.constant 0 : index
    %4 = vector.load %arg3[%c0_2, %c0_3] : memref<8x32xbf16, #tpu.memory_space<vmem>>, vector<8x32xbf16>
    %c0_4 = arith.constant 0 : index
    %c0_5 = arith.constant 0 : index
    %5 = vector.load %arg4[%c0_4, %c0_5] : memref<32x64xbf16, #tpu.memory_space<vmem>>, vector<32x64xbf16>
    %cst = arith.constant dense<0.000000e+00> : vector<8x64xf32>
    %6 = tpu.matmul %4, %5, %cst {dimension_numbers = #tpu.dot_dimension_numbers<[1], [0], [0], [1], [0, 0, 1, 1], [], []>} : vector<8x32xbf16>, vector<32x64xbf16>, vector<8x64xf32> -> vector<8x64xf32>
    %7 = arith.addf %3, %6 : vector<8x64xf32>
    %c0_6 = arith.constant 0 : index
    %c0_7 = arith.constant 0 : index
    %8 = vector.load %arg7[%c0_6, %c0_7] : memref<8x64xf32, #tpu.memory_space<vmem>>, vector<8x64xf32>
    tpu.vector_store %arg7[%c0_6, %c0_7], %7 {strides = array<i32>} : memref<8x64xf32, #tpu.memory_space<vmem>>, vector<8x64xf32>,
    %c0_i32_8 = arith.constant 0 : i32
    %9 = arith.cmpi eq, %arg2, %c0_i32_8 : i32
    %10 = arith.extui %9 : i1 to i32
    %c0_i32_9 = arith.constant 0 : i32
    %11 = arith.cmpi ne, %10, %c0_i32_9 : i32
    scf.if %11 {
      %c0_10 = arith.constant 0 : index
      %c0_11 = arith.constant 0 : index
      %12 = vector.load %arg7[%c0_10, %c0_11] : memref<8x64xf32, #tpu.memory_space<vmem>>, vector<8x64xf32>
      %c0_12 = arith.constant 0 : index
      %c0_13 = arith.constant 0 : index
      %13 = vector.load %arg5[%c0_12, %c0_13] : memref<1x64xf32, #tpu.memory_space<vmem>>, vector<1x64xf32>
      %14 = vector.broadcast %13 : vector<1x64xf32> to vector<8x64xf32>
      %15 = arith.addf %12, %14 : vector<8x64xf32>
      %16 = arith.truncf %15 : vector<8x64xf32> to vector<8x64xbf16>
      %c0_14 = arith.constant 0 : index
      %c0_15 = arith.constant 0 : index
      %17 = vector.load %arg6[%c0_14, %c0_15] : memref<8x64xbf16, #tpu.memory_space<vmem>>, vector<8x64xbf16>
      tpu.vector_store %arg6[%c0_14, %c0_15], %16 {strides = array<i32>} : memref<8x64xbf16, #tpu.memory_space<vmem>>, vector<8x64xbf16>,
    } else {
    }
    return
  }
  func.func @transform_0(%arg0: i32, %arg1: i32, %arg2: i32) -> (i32, i32) {
    %c0_i32 = arith.constant 0 : i32
    return %arg0, %arg2 : i32, i32
  }
  func.func @transform_1(%arg0: i32, %arg1: i32, %arg2: i32) -> (i32, i32) {
    %c0_i32 = arith.constant 0 : i32
    return %arg2, %arg1 : i32, i32
  }
  func.func @transform_2(%arg0: i32, %arg1: i32, %arg2: i32) -> (i32, i32) {
    %c0_i32 = arith.constant 0 : i32
    %c0_i32_0 = arith.constant 0 : i32
    return %c0_i32, %arg1 : i32, i32
  }
  func.func @transform_3(%arg0: i32, %arg1: i32, %arg2: i32) -> (i32, i32) {
    %c0_i32 = arith.constant 0 : i32
    return %arg0, %arg1 : i32, i32
  }
}

module attributes {stable_mosaic.version = 11 : i64} {
  func.func @_cross_attn_kernel(%arg0: i32, %arg1: memref<1x8x1xi32, #tpu.memory_space<vmem>>, %arg2: memref<1x8x32xbf16, #tpu.memory_space<vmem>>, %arg3: memref<1x4x64xbf16, #tpu.memory_space<vmem>>, %arg4: memref<1x8x32xbf16, #tpu.memory_space<vmem>>) attributes {dimension_semantics = [#tpu.dimension_semantics<parallel>], iteration_bounds = array<i64: 2>, scalar_prefetch = 0 : i64, scratch_operands = 0 : i64, tpu.core_type = #tpu.core_type<tc>, window_params = [{transform_indices = @transform_0, window_bounds = array<i64: 1, 8, 1>}, {transform_indices = @transform_1, window_bounds = array<i64: 1, 8, 32>}, {transform_indices = @transform_2, window_bounds = array<i64: 1, 4, 64>}, {transform_indices = @transform_3, window_bounds = array<i64: 1, 8, 32>}]} {
    %c0 = arith.constant 0 : index
    %c0_0 = arith.constant 0 : index
    %c0_1 = arith.constant 0 : index
    %0 = vector.load %arg2[%c0, %c0_0, %c0_1] : memref<1x8x32xbf16, #tpu.memory_space<vmem>>, vector<1x8x32xbf16>
    %1 = vector.shape_cast %0 : vector<1x8x32xbf16> to vector<8x32xbf16>
    %c0_2 = arith.constant 0 : index
    %c0_3 = arith.constant 0 : index
    %c0_4 = arith.constant 0 : index
    %2 = vector.load %arg3[%c0_2, %c0_3, %c0_4] : memref<1x4x64xbf16, #tpu.memory_space<vmem>>, vector<1x4x64xbf16>
    %3 = vector.shape_cast %2 : vector<1x4x64xbf16> to vector<4x64xbf16>
    %c0_5 = arith.constant 0 : index
    %c0_6 = arith.constant 0 : index
    %c0_7 = arith.constant 0 : index
    %4 = vector.load %arg1[%c0_5, %c0_6, %c0_7] : memref<1x8x1xi32, #tpu.memory_space<vmem>>, vector<1x8x1xi32>
    %5 = vector.shape_cast %4 : vector<1x8x1xi32> to vector<8x1xi32>
    %6 = tpu.iota {dimensions = array<i32: 1>} : vector<8x4xi32>
    %7 = vector.broadcast %5 : vector<8x1xi32> to vector<8x4xi32>
    %8 = arith.cmpi sgt, %6, %7 : vector<8x4xi32>
    %9 = vector.extract_strided_slice %1 {offsets = [0, 0], sizes = [8, 8], strides = [1, 1]} : vector<8x32xbf16> to vector<8x8xbf16>
    %10 = arith.extf %9 : vector<8x8xbf16> to vector<8x8xf32>
    %cst = arith.constant 0.353553385 : f32
    %11 = vector.broadcast %cst : f32 to vector<8x8xf32>
    %12 = arith.mulf %10, %11 : vector<8x8xf32>
    %13 = arith.truncf %12 : vector<8x8xf32> to vector<8x8xbf16>
    %14 = vector.extract_strided_slice %3 {offsets = [0, 0], sizes = [4, 8], strides = [1, 1]} : vector<4x64xbf16> to vector<4x8xbf16>
    %15 = vector.extract_strided_slice %3 {offsets = [0, 32], sizes = [4, 8], strides = [1, 1]} : vector<4x64xbf16> to vector<4x8xbf16>
    %cst_8 = arith.constant dense<0.000000e+00> : vector<8x4xf32>
    %16 = tpu.matmul %13, %14, %cst_8 {dimension_numbers = #tpu.dot_dimension_numbers<[1], [1], [0], [0], [0, 0, 1, 0], [], []>} : vector<8x8xbf16>, vector<4x8xbf16>, vector<8x4xf32> -> vector<8x4xf32>
    %cst_9 = arith.constant -1.000000e+30 : f32
    %17 = vector.broadcast %cst_9 : f32 to vector<8x4xf32>
    %18 = arith.select %8, %17, %16 : vector<8x4xi1>, vector<8x4xf32>
    %cst_10 = arith.constant dense<0xFF800000> : vector<8xf32>
    %19 = vector.multi_reduction <maximumf>, %18, %cst_10 [1] : vector<8x4xf32> to vector<8xf32>
    %20 = vector.shape_cast %19 : vector<8xf32> to vector<8x1xf32>
    %21 = vector.broadcast %20 : vector<8x1xf32> to vector<8x4xf32>
    %22 = arith.subf %18, %21 : vector<8x4xf32>
    %23 = math.exp %22 : vector<8x4xf32>
    %cst_11 = arith.constant dense<0.000000e+00> : vector<8xf32>
    %24 = vector.multi_reduction <add>, %23, %cst_11 [1] : vector<8x4xf32> to vector<8xf32>
    %25 = vector.shape_cast %24 : vector<8xf32> to vector<8x1xf32>
    %26 = tpu.reciprocal %25 {approx = true} : vector<8x1xf32> -> vector<8x1xf32>
    %27 = vector.broadcast %26 : vector<8x1xf32> to vector<8x4xf32>
    %28 = arith.mulf %23, %27 : vector<8x4xf32>
    %29 = arith.truncf %28 : vector<8x4xf32> to vector<8x4xbf16>
    %cst_12 = arith.constant dense<0.000000e+00> : vector<8x8xf32>
    %30 = tpu.matmul %29, %15, %cst_12 {dimension_numbers = #tpu.dot_dimension_numbers<[1], [0], [0], [1], [0, 0, 1, 1], [], []>} : vector<8x4xbf16>, vector<4x8xbf16>, vector<8x8xf32> -> vector<8x8xf32>
    %31 = vector.extract_strided_slice %1 {offsets = [0, 8], sizes = [8, 8], strides = [1, 1]} : vector<8x32xbf16> to vector<8x8xbf16>
    %32 = arith.extf %31 : vector<8x8xbf16> to vector<8x8xf32>
    %cst_13 = arith.constant 0.353553385 : f32
    %33 = vector.broadcast %cst_13 : f32 to vector<8x8xf32>
    %34 = arith.mulf %32, %33 : vector<8x8xf32>
    %35 = arith.truncf %34 : vector<8x8xf32> to vector<8x8xbf16>
    %36 = vector.extract_strided_slice %3 {offsets = [0, 8], sizes = [4, 8], strides = [1, 1]} : vector<4x64xbf16> to vector<4x8xbf16>
    %37 = vector.extract_strided_slice %3 {offsets = [0, 40], sizes = [4, 8], strides = [1, 1]} : vector<4x64xbf16> to vector<4x8xbf16>
    %cst_14 = arith.constant dense<0.000000e+00> : vector<8x4xf32>
    %38 = tpu.matmul %35, %36, %cst_14 {dimension_numbers = #tpu.dot_dimension_numbers<[1], [1], [0], [0], [0, 0, 1, 0], [], []>} : vector<8x8xbf16>, vector<4x8xbf16>, vector<8x4xf32> -> vector<8x4xf32>
    %cst_15 = arith.constant -1.000000e+30 : f32
    %39 = vector.broadcast %cst_15 : f32 to vector<8x4xf32>
    %40 = arith.select %8, %39, %38 : vector<8x4xi1>, vector<8x4xf32>
    %cst_16 = arith.constant dense<0xFF800000> : vector<8xf32>
    %41 = vector.multi_reduction <maximumf>, %40, %cst_16 [1] : vector<8x4xf32> to vector<8xf32>
    %42 = vector.shape_cast %41 : vector<8xf32> to vector<8x1xf32>
    %43 = vector.broadcast %42 : vector<8x1xf32> to vector<8x4xf32>
    %44 = arith.subf %40, %43 : vector<8x4xf32>
    %45 = math.exp %44 : vector<8x4xf32>
    %cst_17 = arith.constant dense<0.000000e+00> : vector<8xf32>
    %46 = vector.multi_reduction <add>, %45, %cst_17 [1] : vector<8x4xf32> to vector<8xf32>
    %47 = vector.shape_cast %46 : vector<8xf32> to vector<8x1xf32>
    %48 = tpu.reciprocal %47 {approx = true} : vector<8x1xf32> -> vector<8x1xf32>
    %49 = vector.broadcast %48 : vector<8x1xf32> to vector<8x4xf32>
    %50 = arith.mulf %45, %49 : vector<8x4xf32>
    %51 = arith.truncf %50 : vector<8x4xf32> to vector<8x4xbf16>
    %cst_18 = arith.constant dense<0.000000e+00> : vector<8x8xf32>
    %52 = tpu.matmul %51, %37, %cst_18 {dimension_numbers = #tpu.dot_dimension_numbers<[1], [0], [0], [1], [0, 0, 1, 1], [], []>} : vector<8x4xbf16>, vector<4x8xbf16>, vector<8x8xf32> -> vector<8x8xf32>
    %53 = vector.extract_strided_slice %1 {offsets = [0, 16], sizes = [8, 8], strides = [1, 1]} : vector<8x32xbf16> to vector<8x8xbf16>
    %54 = arith.extf %53 : vector<8x8xbf16> to vector<8x8xf32>
    %cst_19 = arith.constant 0.353553385 : f32
    %55 = vector.broadcast %cst_19 : f32 to vector<8x8xf32>
    %56 = arith.mulf %54, %55 : vector<8x8xf32>
    %57 = arith.truncf %56 : vector<8x8xf32> to vector<8x8xbf16>
    %58 = vector.extract_strided_slice %3 {offsets = [0, 16], sizes = [4, 8], strides = [1, 1]} : vector<4x64xbf16> to vector<4x8xbf16>
    %59 = vector.extract_strided_slice %3 {offsets = [0, 48], sizes = [4, 8], strides = [1, 1]} : vector<4x64xbf16> to vector<4x8xbf16>
    %cst_20 = arith.constant dense<0.000000e+00> : vector<8x4xf32>
    %60 = tpu.matmul %57, %58, %cst_20 {dimension_numbers = #tpu.dot_dimension_numbers<[1], [1], [0], [0], [0, 0, 1, 0], [], []>} : vector<8x8xbf16>, vector<4x8xbf16>, vector<8x4xf32> -> vector<8x4xf32>
    %cst_21 = arith.constant -1.000000e+30 : f32
    %61 = vector.broadcast %cst_21 : f32 to vector<8x4xf32>
    %62 = arith.select %8, %61, %60 : vector<8x4xi1>, vector<8x4xf32>
    %cst_22 = arith.constant dense<0xFF800000> : vector<8xf32>
    %63 = vector.multi_reduction <maximumf>, %62, %cst_22 [1] : vector<8x4xf32> to vector<8xf32>
    %64 = vector.shape_cast %63 : vector<8xf32> to vector<8x1xf32>
    %65 = vector.broadcast %64 : vector<8x1xf32> to vector<8x4xf32>
    %66 = arith.subf %62, %65 : vector<8x4xf32>
    %67 = math.exp %66 : vector<8x4xf32>
    %cst_23 = arith.constant dense<0.000000e+00> : vector<8xf32>
    %68 = vector.multi_reduction <add>, %67, %cst_23 [1] : vector<8x4xf32> to vector<8xf32>
    %69 = vector.shape_cast %68 : vector<8xf32> to vector<8x1xf32>
    %70 = tpu.reciprocal %69 {approx = true} : vector<8x1xf32> -> vector<8x1xf32>
    %71 = vector.broadcast %70 : vector<8x1xf32> to vector<8x4xf32>
    %72 = arith.mulf %67, %71 : vector<8x4xf32>
    %73 = arith.truncf %72 : vector<8x4xf32> to vector<8x4xbf16>
    %cst_24 = arith.constant dense<0.000000e+00> : vector<8x8xf32>
    %74 = tpu.matmul %73, %59, %cst_24 {dimension_numbers = #tpu.dot_dimension_numbers<[1], [0], [0], [1], [0, 0, 1, 1], [], []>} : vector<8x4xbf16>, vector<4x8xbf16>, vector<8x8xf32> -> vector<8x8xf32>
    %75 = vector.extract_strided_slice %1 {offsets = [0, 24], sizes = [8, 8], strides = [1, 1]} : vector<8x32xbf16> to vector<8x8xbf16>
    %76 = arith.extf %75 : vector<8x8xbf16> to vector<8x8xf32>
    %cst_25 = arith.constant 0.353553385 : f32
    %77 = vector.broadcast %cst_25 : f32 to vector<8x8xf32>
    %78 = arith.mulf %76, %77 : vector<8x8xf32>
    %79 = arith.truncf %78 : vector<8x8xf32> to vector<8x8xbf16>
    %80 = vector.extract_strided_slice %3 {offsets = [0, 24], sizes = [4, 8], strides = [1, 1]} : vector<4x64xbf16> to vector<4x8xbf16>
    %81 = vector.extract_strided_slice %3 {offsets = [0, 56], sizes = [4, 8], strides = [1, 1]} : vector<4x64xbf16> to vector<4x8xbf16>
    %cst_26 = arith.constant dense<0.000000e+00> : vector<8x4xf32>
    %82 = tpu.matmul %79, %80, %cst_26 {dimension_numbers = #tpu.dot_dimension_numbers<[1], [1], [0], [0], [0, 0, 1, 0], [], []>} : vector<8x8xbf16>, vector<4x8xbf16>, vector<8x4xf32> -> vector<8x4xf32>
    %cst_27 = arith.constant -1.000000e+30 : f32
    %83 = vector.broadcast %cst_27 : f32 to vector<8x4xf32>
    %84 = arith.select %8, %83, %82 : vector<8x4xi1>, vector<8x4xf32>
    %cst_28 = arith.constant dense<0xFF800000> : vector<8xf32>
    %85 = vector.multi_reduction <maximumf>, %84, %cst_28 [1] : vector<8x4xf32> to vector<8xf32>
    %86 = vector.shape_cast %85 : vector<8xf32> to vector<8x1xf32>
    %87 = vector.broadcast %86 : vector<8x1xf32> to vector<8x4xf32>
    %88 = arith.subf %84, %87 : vector<8x4xf32>
    %89 = math.exp %88 : vector<8x4xf32>
    %cst_29 = arith.constant dense<0.000000e+00> : vector<8xf32>
    %90 = vector.multi_reduction <add>, %89, %cst_29 [1] : vector<8x4xf32> to vector<8xf32>
    %91 = vector.shape_cast %90 : vector<8xf32> to vector<8x1xf32>
    %92 = tpu.reciprocal %91 {approx = true} : vector<8x1xf32> -> vector<8x1xf32>
    %93 = vector.broadcast %92 : vector<8x1xf32> to vector<8x4xf32>
    %94 = arith.mulf %89, %93 : vector<8x4xf32>
    %95 = arith.truncf %94 : vector<8x4xf32> to vector<8x4xbf16>
    %cst_30 = arith.constant dense<0.000000e+00> : vector<8x8xf32>
    %96 = tpu.matmul %95, %81, %cst_30 {dimension_numbers = #tpu.dot_dimension_numbers<[1], [0], [0], [1], [0, 0, 1, 1], [], []>} : vector<8x4xbf16>, vector<4x8xbf16>, vector<8x8xf32> -> vector<8x8xf32>
    %97 = tpu.concatenate %30, %52, %74, %96 in 1 : vector<8x8xf32>, vector<8x8xf32>, vector<8x8xf32>, vector<8x8xf32> -> vector<8x32xf32>
    %98 = arith.truncf %97 : vector<8x32xf32> to vector<8x32xbf16>
    %c0_31 = arith.constant 0 : index
    %c0_32 = arith.constant 0 : index
    %c0_33 = arith.constant 0 : index
    %99 = vector.load %arg4[%c0_31, %c0_32, %c0_33] : memref<1x8x32xbf16, #tpu.memory_space<vmem>>, vector<1x8x32xbf16>
    %100 = vector.shape_cast %99 : vector<1x8x32xbf16> to vector<8x32xbf16>
    %101 = vector.shape_cast %98 : vector<8x32xbf16> to vector<1x8x32xbf16>
    tpu.vector_store %arg4[%c0_31, %c0_32, %c0_33], %101 {strides = array<i32>} : memref<1x8x32xbf16, #tpu.memory_space<vmem>>, vector<1x8x32xbf16>,
    return
  }
  func.func @transform_0(%arg0: i32) -> (i32, i32, i32) {
    %c0_i32 = arith.constant 0 : i32
    %c0_i32_0 = arith.constant 0 : i32
    %c0_i32_1 = arith.constant 0 : i32
    return %arg0, %c0_i32, %c0_i32_0 : i32, i32, i32
  }
  func.func @transform_1(%arg0: i32) -> (i32, i32, i32) {
    %c0_i32 = arith.constant 0 : i32
    %c0_i32_0 = arith.constant 0 : i32
    %c0_i32_1 = arith.constant 0 : i32
    return %arg0, %c0_i32, %c0_i32_0 : i32, i32, i32
  }
  func.func @transform_2(%arg0: i32) -> (i32, i32, i32) {
    %c0_i32 = arith.constant 0 : i32
    %c0_i32_0 = arith.constant 0 : i32
    %c0_i32_1 = arith.constant 0 : i32
    return %arg0, %c0_i32, %c0_i32_0 : i32, i32, i32
  }
  func.func @transform_3(%arg0: i32) -> (i32, i32, i32) {
    %c0_i32 = arith.constant 0 : i32
    %c0_i32_0 = arith.constant 0 : i32
    %c0_i32_1 = arith.constant 0 : i32
    return %arg0, %c0_i32, %c0_i32_0 : i32, i32, i32
  }
}

module attributes {stable_mosaic.version = 11 : i64} {
  func.func @_ln_matmul_kernel(%arg0: i32, %arg1: i32, %arg2: memref<16x32xf32, #tpu.memory_space<vmem>>, %arg3: memref<1x32xf32, #tpu.memory_space<vmem>>, %arg4: memref<1x32xf32, #tpu.memory_space<vmem>>, %arg5: memref<32x128xbf16, #tpu.memory_space<vmem>>, %arg6: memref<1x128xf32, #tpu.memory_space<vmem>>, %arg7: memref<16x128xbf16, #tpu.memory_space<vmem>>, %arg8: memref<16x32xbf16, #tpu.memory_space<vmem>>) attributes {dimension_semantics = [#tpu.dimension_semantics<parallel>, #tpu.dimension_semantics<arbitrary>], iteration_bounds = array<i64: 1, 1>, scalar_prefetch = 0 : i64, scratch_operands = 1 : i64, tpu.core_type = #tpu.core_type<tc>, window_params = [{transform_indices = @transform_0, window_bounds = array<i64: 16, 32>}, {pipeline_mode = #tpu.pipeline_mode<synchronous>, transform_indices = @transform_1, window_bounds = array<i64: 1, 32>}, {pipeline_mode = #tpu.pipeline_mode<synchronous>, transform_indices = @transform_2, window_bounds = array<i64: 1, 32>}, {transform_indices = @transform_3, window_bounds = array<i64: 32, 128>}, {transform_indices = @transform_4, window_bounds = array<i64: 1, 128>}, {transform_indices = @transform_5, window_bounds = array<i64: 16, 128>}]} {
    %c0_i32 = arith.constant 0 : i32
    %0 = arith.cmpi eq, %arg1, %c0_i32 : i32
    %1 = arith.extui %0 : i1 to i32
    %c0_i32_0 = arith.constant 0 : i32
    %2 = arith.cmpi ne, %1, %c0_i32_0 : i32
    scf.if %2 {
      %c0_12 = arith.constant 0 : index
      %c0_13 = arith.constant 0 : index
      %24 = vector.load %arg2[%c0_12, %c0_13] : memref<16x32xf32, #tpu.memory_space<vmem>>, vector<16x32xf32>
      %cst_14 = arith.constant dense<0.000000e+00> : vector<16xf32>
      %25 = vector.multi_reduction <add>, %24, %cst_14 [1] : vector<16x32xf32> to vector<16xf32>
      %26 = vector.shape_cast %25 : vector<16xf32> to vector<16x1xf32>
      %cst_15 = arith.constant 3.200000e+01 : f32
      %27 = vector.broadcast %cst_15 : f32 to vector<16x1xf32>
      %28 = arith.divf %26, %27 : vector<16x1xf32>
      %29 = vector.broadcast %28 : vector<16x1xf32> to vector<16x32xf32>
      %30 = arith.subf %24, %29 : vector<16x32xf32>
      %31 = arith.mulf %30, %30 : vector<16x32xf32>
      %cst_16 = arith.constant dense<0.000000e+00> : vector<16xf32>
      %32 = vector.multi_reduction <add>, %31, %cst_16 [1] : vector<16x32xf32> to vector<16xf32>
      %33 = vector.shape_cast %32 : vector<16xf32> to vector<16x1xf32>
      %cst_17 = arith.constant 3.200000e+01 : f32
      %34 = vector.broadcast %cst_17 : f32 to vector<16x1xf32>
      %35 = arith.divf %33, %34 : vector<16x1xf32>
      %cst_18 = arith.constant 9.99999974E-6 : f32
      %36 = vector.broadcast %cst_18 : f32 to vector<16x1xf32>
      %37 = arith.addf %35, %36 : vector<16x1xf32>
      %38 = math.rsqrt %37 : vector<16x1xf32>
      %39 = vector.broadcast %38 : vector<16x1xf32> to vector<16x32xf32>
      %40 = arith.mulf %30, %39 : vector<16x32xf32>
      %c0_19 = arith.constant 0 : index
      %c0_20 = arith.constant 0 : index
      %41 = vector.load %arg3[%c0_19, %c0_20] : memref<1x32xf32, #tpu.memory_space<vmem>>, vector<1x32xf32>
      %42 = vector.broadcast %41 : vector<1x32xf32> to vector<16x32xf32>
      %43 = arith.mulf %40, %42 : vector<16x32xf32>
      %c0_21 = arith.constant 0 : index
      %c0_22 = arith.constant 0 : index
      %44 = vector.load %arg4[%c0_21, %c0_22] : memref<1x32xf32, #tpu.memory_space<vmem>>, vector<1x32xf32>
      %45 = vector.broadcast %44 : vector<1x32xf32> to vector<16x32xf32>
      %46 = arith.addf %43, %45 : vector<16x32xf32>
      %47 = arith.truncf %46 : vector<16x32xf32> to vector<16x32xbf16>
      %c0_23 = arith.constant 0 : index
      %c0_24 = arith.constant 0 : index
      %48 = vector.load %arg8[%c0_23, %c0_24] : memref<16x32xbf16, #tpu.memory_space<vmem>>, vector<16x32xbf16>
      tpu.vector_store %arg8[%c0_23, %c0_24], %47 {strides = array<i32>} : memref<16x32xbf16, #tpu.memory_space<vmem>>, vector<16x32xbf16>,
    } else {
    }
    %c0 = arith.constant 0 : index
    %c0_1 = arith.constant 0 : index
    %3 = vector.load %arg8[%c0, %c0_1] : memref<16x32xbf16, #tpu.memory_space<vmem>>, vector<16x32xbf16>
    %c0_2 = arith.constant 0 : index
    %c0_3 = arith.constant 0 : index
    %4 = vector.load %arg5[%c0_2, %c0_3] : memref<32x128xbf16, #tpu.memory_space<vmem>>, vector<32x128xbf16>
    %cst = arith.constant dense<0.000000e+00> : vector<16x128xf32>
    %5 = tpu.matmul %3, %4, %cst {dimension_numbers = #tpu.dot_dimension_numbers<[1], [0], [0], [1], [0, 0, 1, 1], [], []>} : vector<16x32xbf16>, vector<32x128xbf16>, vector<16x128xf32> -> vector<16x128xf32>
    %c0_4 = arith.constant 0 : index
    %c0_5 = arith.constant 0 : index
    %6 = vector.load %arg6[%c0_4, %c0_5] : memref<1x128xf32, #tpu.memory_space<vmem>>, vector<1x128xf32>
    %7 = vector.broadcast %6 : vector<1x128xf32> to vector<16x128xf32>
    %8 = arith.addf %5, %7 : vector<16x128xf32>
    %9 = arith.mulf %8, %8 : vector<16x128xf32>
    %10 = arith.mulf %8, %9 : vector<16x128xf32>
    %cst_6 = arith.constant 4.471500e-02 : f32
    %11 = vector.broadcast %cst_6 : f32 to vector<16x128xf32>
    %12 = arith.mulf %11, %10 : vector<16x128xf32>
    %13 = arith.addf %8, %12 : vector<16x128xf32>
    %cst_7 = arith.constant 0.797884583 : f32
    %14 = vector.broadcast %cst_7 : f32 to vector<16x128xf32>
    %15 = arith.mulf %14, %13 : vector<16x128xf32>
    %16 = math.tanh %15 : vector<16x128xf32>
    %cst_8 = arith.constant 1.000000e+00 : f32
    %17 = vector.broadcast %cst_8 : f32 to vector<16x128xf32>
    %18 = arith.addf %17, %16 : vector<16x128xf32>
    %cst_9 = arith.constant 5.000000e-01 : f32
    %19 = vector.broadcast %cst_9 : f32 to vector<16x128xf32>
    %20 = arith.mulf %19, %18 : vector<16x128xf32>
    %21 = arith.mulf %8, %20 : vector<16x128xf32>
    %22 = arith.truncf %21 : vector<16x128xf32> to vector<16x128xbf16>
    %c0_10 = arith.constant 0 : index
    %c0_11 = arith.constant 0 : index
    %23 = vector.load %arg7[%c0_10, %c0_11] : memref<16x128xbf16, #tpu.memory_space<vmem>>, vector<16x128xbf16>
    tpu.vector_store %arg7[%c0_10, %c0_11], %22 {strides = array<i32>} : memref<16x128xbf16, #tpu.memory_space<vmem>>, vector<16x128xbf16>,
    return
  }
  func.func @transform_0(%arg0: i32, %arg1: i32) -> (i32, i32) {
    %c0_i32 = arith.constant 0 : i32
    %c0_i32_0 = arith.constant 0 : i32
    return %arg0, %c0_i32 : i32, i32
  }
  func.func @transform_1(%arg0: i32, %arg1: i32) -> (i32, i32) {
    %c0_i32 = arith.constant 0 : i32
    %c0_i32_0 = arith.constant 0 : i32
    %c0_i32_1 = arith.constant 0 : i32
    return %c0_i32, %c0_i32_0 : i32, i32
  }
  func.func @transform_2(%arg0: i32, %arg1: i32) -> (i32, i32) {
    %c0_i32 = arith.constant 0 : i32
    %c0_i32_0 = arith.constant 0 : i32
    %c0_i32_1 = arith.constant 0 : i32
    return %c0_i32, %c0_i32_0 : i32, i32
  }
  func.func @transform_3(%arg0: i32, %arg1: i32) -> (i32, i32) {
    %c0_i32 = arith.constant 0 : i32
    %c0_i32_0 = arith.constant 0 : i32
    return %c0_i32, %arg1 : i32, i32
  }
  func.func @transform_4(%arg0: i32, %arg1: i32) -> (i32, i32) {
    %c0_i32 = arith.constant 0 : i32
    %c0_i32_0 = arith.constant 0 : i32
    return %c0_i32, %arg1 : i32, i32
  }
  func.func @transform_5(%arg0: i32, %arg1: i32) -> (i32, i32) {
    %c0_i32 = arith.constant 0 : i32
    return %arg0, %arg1 : i32, i32
  }
}

module attributes {stable_mosaic.version = 11 : i64} {
  func.func @_matmul_kernel(%arg0: i32, %arg1: i32, %arg2: i32, %arg3: memref<16x128xbf16, #tpu.memory_space<vmem>>, %arg4: memref<128x32xbf16, #tpu.memory_space<vmem>>, %arg5: memref<1x32xf32, #tpu.memory_space<vmem>>, %arg6: memref<16x32xf32, #tpu.memory_space<vmem>>, %arg7: memref<16x32xf32, #tpu.memory_space<vmem>>, %arg8: memref<16x32xf32, #tpu.memory_space<vmem>>) attributes {dimension_semantics = [#tpu.dimension_semantics<parallel>, #tpu.dimension_semantics<parallel>, #tpu.dimension_semantics<arbitrary>], iteration_bounds = array<i64: 1, 1, 1>, scalar_prefetch = 0 : i64, scratch_operands = 1 : i64, tpu.core_type = #tpu.core_type<tc>, window_params = [{transform_indices = @transform_0, window_bounds = array<i64: 16, 128>}, {transform_indices = @transform_1, window_bounds = array<i64: 128, 32>}, {transform_indices = @transform_2, window_bounds = array<i64: 1, 32>}, {transform_indices = @transform_3, window_bounds = array<i64: 16, 32>}, {transform_indices = @transform_4, window_bounds = array<i64: 16, 32>}]} {
    %c0_i32 = arith.constant 0 : i32
    %0 = arith.cmpi eq, %arg2, %c0_i32 : i32
    %1 = arith.extui %0 : i1 to i32
    %c0_i32_0 = arith.constant 0 : i32
    %2 = arith.cmpi ne, %1, %c0_i32_0 : i32
    scf.if %2 {
      %cst_10 = arith.constant 0.000000e+00 : f32
      %12 = vector.broadcast %cst_10 : f32 to vector<16x32xf32>
      %c0_11 = arith.constant 0 : index
      %c0_12 = arith.constant 0 : index
      %13 = vector.load %arg8[%c0_11, %c0_12] : memref<16x32xf32, #tpu.memory_space<vmem>>, vector<16x32xf32>
      tpu.vector_store %arg8[%c0_11, %c0_12], %12 {strides = array<i32>} : memref<16x32xf32, #tpu.memory_space<vmem>>, vector<16x32xf32>,
    } else {
    }
    %c0 = arith.constant 0 : index
    %c0_1 = arith.constant 0 : index
    %3 = vector.load %arg8[%c0, %c0_1] : memref<16x32xf32, #tpu.memory_space<vmem>>, vector<16x32xf32>
    %c0_2 = arith.constant 0 : index
    %c0_3 = arith.constant 0 : index
    %4 = vector.load %arg3[%c0_2, %c0_3] : memref<16x128xbf16, #tpu.memory_space<vmem>>, vector<16x128xbf16>
    %c0_4 = arith.constant 0 : index
    %c0_5 = arith.constant 0 : index
    %5 = vector.load %arg4[%c0_4, %c0_5] : memref<128x32xbf16, #tpu.memory_space<vmem>>, vector<128x32xbf16>
    %cst = arith.constant dense<0.000000e+00> : vector<16x32xf32>
    %6 = tpu.matmul %4, %5, %cst {dimension_numbers = #tpu.dot_dimension_numbers<[1], [0], [0], [1], [0, 0, 1, 1], [], []>} : vector<16x128xbf16>, vector<128x32xbf16>, vector<16x32xf32> -> vector<16x32xf32>
    %7 = arith.addf %3, %6 : vector<16x32xf32>
    %c0_6 = arith.constant 0 : index
    %c0_7 = arith.constant 0 : index
    %8 = vector.load %arg8[%c0_6, %c0_7] : memref<16x32xf32, #tpu.memory_space<vmem>>, vector<16x32xf32>
    tpu.vector_store %arg8[%c0_6, %c0_7], %7 {strides = array<i32>} : memref<16x32xf32, #tpu.memory_space<vmem>>, vector<16x32xf32>,
    %c0_i32_8 = arith.constant 0 : i32
    %9 = arith.cmpi eq, %arg2, %c0_i32_8 : i32
    %10 = arith.extui %9 : i1 to i32
    %c0_i32_9 = arith.constant 0 : i32
    %11 = arith.cmpi ne, %10, %c0_i32_9 : i32
    scf.if %11 {
      %c0_10 = arith.constant 0 : index
      %c0_11 = arith.constant 0 : index
      %12 = vector.load %arg8[%c0_10, %c0_11] : memref<16x32xf32, #tpu.memory_space<vmem>>, vector<16x32xf32>
      %c0_12 = arith.constant 0 : index
      %c0_13 = arith.constant 0 : index
      %13 = vector.load %arg5[%c0_12, %c0_13] : memref<1x32xf32, #tpu.memory_space<vmem>>, vector<1x32xf32>
      %14 = vector.broadcast %13 : vector<1x32xf32> to vector<16x32xf32>
      %15 = arith.addf %12, %14 : vector<16x32xf32>
      %c0_14 = arith.constant 0 : index
      %c0_15 = arith.constant 0 : index
      %16 = vector.load %arg6[%c0_14, %c0_15] : memref<16x32xf32, #tpu.memory_space<vmem>>, vector<16x32xf32>
      %17 = arith.addf %15, %16 : vector<16x32xf32>
      %c0_16 = arith.constant 0 : index
      %c0_17 = arith.constant 0 : index
      %18 = vector.load %arg7[%c0_16, %c0_17] : memref<16x32xf32, #tpu.memory_space<vmem>>, vector<16x32xf32>
      tpu.vector_store %arg7[%c0_16, %c0_17], %17 {strides = array<i32>} : memref<16x32xf32, #tpu.memory_space<vmem>>, vector<16x32xf32>,
    } else {
    }
    return
  }
  func.func @transform_0(%arg0: i32, %arg1: i32, %arg2: i32) -> (i32, i32) {
    %c0_i32 = arith.constant 0 : i32
    return %arg0, %arg2 : i32, i32
  }
  func.func @transform_1(%arg0: i32, %arg1: i32, %arg2: i32) -> (i32, i32) {
    %c0_i32 = arith.constant 0 : i32
    return %arg2, %arg1 : i32, i32
  }
  func.func @transform_2(%arg0: i32, %arg1: i32, %arg2: i32) -> (i32, i32) {
    %c0_i32 = arith.constant 0 : i32
    %c0_i32_0 = arith.constant 0 : i32
    return %c0_i32, %arg1 : i32, i32
  }
  func.func @transform_3(%arg0: i32, %arg1: i32, %arg2: i32) -> (i32, i32) {
    %c0_i32 = arith.constant 0 : i32
    return %arg0, %arg1 : i32, i32
  }
  func.func @transform_4(%arg0: i32, %arg1: i32, %arg2: i32) -> (i32, i32) {
    %c0_i32 = arith.constant 0 : i32
    return %arg0, %arg1 : i32, i32
  }
}

module attributes {stable_mosaic.version = 11 : i64} {
  func.func @_ln_matmul_kernel(%arg0: i32, %arg1: i32, %arg2: memref<16x32xf32, #tpu.memory_space<vmem>>, %arg3: memref<1x32xf32, #tpu.memory_space<vmem>>, %arg4: memref<1x32xf32, #tpu.memory_space<vmem>>, %arg5: memref<32x256xbf16, #tpu.memory_space<vmem>>, %arg6: memref<16x256xf32, #tpu.memory_space<vmem>>, %arg7: memref<16x32xbf16, #tpu.memory_space<vmem>>) attributes {dimension_semantics = [#tpu.dimension_semantics<parallel>, #tpu.dimension_semantics<arbitrary>], iteration_bounds = array<i64: 1, 1>, scalar_prefetch = 0 : i64, scratch_operands = 1 : i64, tpu.core_type = #tpu.core_type<tc>, window_params = [{transform_indices = @transform_0, window_bounds = array<i64: 16, 32>}, {pipeline_mode = #tpu.pipeline_mode<synchronous>, transform_indices = @transform_1, window_bounds = array<i64: 1, 32>}, {pipeline_mode = #tpu.pipeline_mode<synchronous>, transform_indices = @transform_2, window_bounds = array<i64: 1, 32>}, {transform_indices = @transform_3, window_bounds = array<i64: 32, 256>}, {transform_indices = @transform_4, window_bounds = array<i64: 16, 256>}]} {
    %c0_i32 = arith.constant 0 : i32
    %0 = arith.cmpi eq, %arg1, %c0_i32 : i32
    %1 = arith.extui %0 : i1 to i32
    %c0_i32_0 = arith.constant 0 : i32
    %2 = arith.cmpi ne, %1, %c0_i32_0 : i32
    scf.if %2 {
      %c0_6 = arith.constant 0 : index
      %c0_7 = arith.constant 0 : index
      %7 = vector.load %arg2[%c0_6, %c0_7] : memref<16x32xf32, #tpu.memory_space<vmem>>, vector<16x32xf32>
      %cst_8 = arith.constant dense<0.000000e+00> : vector<16xf32>
      %8 = vector.multi_reduction <add>, %7, %cst_8 [1] : vector<16x32xf32> to vector<16xf32>
      %9 = vector.shape_cast %8 : vector<16xf32> to vector<16x1xf32>
      %cst_9 = arith.constant 3.200000e+01 : f32
      %10 = vector.broadcast %cst_9 : f32 to vector<16x1xf32>
      %11 = arith.divf %9, %10 : vector<16x1xf32>
      %12 = vector.broadcast %11 : vector<16x1xf32> to vector<16x32xf32>
      %13 = arith.subf %7, %12 : vector<16x32xf32>
      %14 = arith.mulf %13, %13 : vector<16x32xf32>
      %cst_10 = arith.constant dense<0.000000e+00> : vector<16xf32>
      %15 = vector.multi_reduction <add>, %14, %cst_10 [1] : vector<16x32xf32> to vector<16xf32>
      %16 = vector.shape_cast %15 : vector<16xf32> to vector<16x1xf32>
      %cst_11 = arith.constant 3.200000e+01 : f32
      %17 = vector.broadcast %cst_11 : f32 to vector<16x1xf32>
      %18 = arith.divf %16, %17 : vector<16x1xf32>
      %cst_12 = arith.constant 9.99999974E-6 : f32
      %19 = vector.broadcast %cst_12 : f32 to vector<16x1xf32>
      %20 = arith.addf %18, %19 : vector<16x1xf32>
      %21 = math.rsqrt %20 : vector<16x1xf32>
      %22 = vector.broadcast %21 : vector<16x1xf32> to vector<16x32xf32>
      %23 = arith.mulf %13, %22 : vector<16x32xf32>
      %c0_13 = arith.constant 0 : index
      %c0_14 = arith.constant 0 : index
      %24 = vector.load %arg3[%c0_13, %c0_14] : memref<1x32xf32, #tpu.memory_space<vmem>>, vector<1x32xf32>
      %25 = vector.broadcast %24 : vector<1x32xf32> to vector<16x32xf32>
      %26 = arith.mulf %23, %25 : vector<16x32xf32>
      %c0_15 = arith.constant 0 : index
      %c0_16 = arith.constant 0 : index
      %27 = vector.load %arg4[%c0_15, %c0_16] : memref<1x32xf32, #tpu.memory_space<vmem>>, vector<1x32xf32>
      %28 = vector.broadcast %27 : vector<1x32xf32> to vector<16x32xf32>
      %29 = arith.addf %26, %28 : vector<16x32xf32>
      %30 = arith.truncf %29 : vector<16x32xf32> to vector<16x32xbf16>
      %c0_17 = arith.constant 0 : index
      %c0_18 = arith.constant 0 : index
      %31 = vector.load %arg7[%c0_17, %c0_18] : memref<16x32xbf16, #tpu.memory_space<vmem>>, vector<16x32xbf16>
      tpu.vector_store %arg7[%c0_17, %c0_18], %30 {strides = array<i32>} : memref<16x32xbf16, #tpu.memory_space<vmem>>, vector<16x32xbf16>,
    } else {
    }
    %c0 = arith.constant 0 : index
    %c0_1 = arith.constant 0 : index
    %3 = vector.load %arg7[%c0, %c0_1] : memref<16x32xbf16, #tpu.memory_space<vmem>>, vector<16x32xbf16>
    %c0_2 = arith.constant 0 : index
    %c0_3 = arith.constant 0 : index
    %4 = vector.load %arg5[%c0_2, %c0_3] : memref<32x256xbf16, #tpu.memory_space<vmem>>, vector<32x256xbf16>
    %cst = arith.constant dense<0.000000e+00> : vector<16x256xf32>
    %5 = tpu.matmul %3, %4, %cst {dimension_numbers = #tpu.dot_dimension_numbers<[1], [0], [0], [1], [0, 0, 1, 1], [], []>} : vector<16x32xbf16>, vector<32x256xbf16>, vector<16x256xf32> -> vector<16x256xf32>
    %c0_4 = arith.constant 0 : index
    %c0_5 = arith.constant 0 : index
    %6 = vector.load %arg6[%c0_4, %c0_5] : memref<16x256xf32, #tpu.memory_space<vmem>>, vector<16x256xf32>
    tpu.vector_store %arg6[%c0_4, %c0_5], %5 {strides = array<i32>} : memref<16x256xf32, #tpu.memory_space<vmem>>, vector<16x256xf32>,
    return
  }
  func.func @transform_0(%arg0: i32, %arg1: i32) -> (i32, i32) {
    %c0_i32 = arith.constant 0 : i32
    %c0_i32_0 = arith.constant 0 : i32
    return %arg0, %c0_i32 : i32, i32
  }
  func.func @transform_1(%arg0: i32, %arg1: i32) -> (i32, i32) {
    %c0_i32 = arith.constant 0 : i32
    %c0_i32_0 = arith.constant 0 : i32
    %c0_i32_1 = arith.constant 0 : i32
    return %c0_i32, %c0_i32_0 : i32, i32
  }
  func.func @transform_2(%arg0: i32, %arg1: i32) -> (i32, i32) {
    %c0_i32 = arith.constant 0 : i32
    %c0_i32_0 = arith.constant 0 : i32
    %c0_i32_1 = arith.constant 0 : i32
    return %c0_i32, %c0_i32_0 : i32, i32
  }
  func.func @transform_3(%arg0: i32, %arg1: i32) -> (i32, i32) {
    %c0_i32 = arith.constant 0 : i32
    %c0_i32_0 = arith.constant 0 : i32
    return %c0_i32, %arg1 : i32, i32
  }
  func.func @transform_4(%arg0: i32, %arg1: i32) -> (i32, i32) {
    %c0_i32 = arith.constant 0 : i32
    return %arg0, %arg1 : i32, i32
  }
}

</mosaic_0001>

<llo_original>
// kernel: byte_decoder_forward.21
$region0: #{byte_decoder_forward.21}
  #allocation0 [shape = 'u32[]', space=smem, size = 0x4, offset = 0x4, fixed_abs, tag = 'smem constant byte address 0x4 - core index']
  #allocation1 [shape = 'u32[144,128]{1,0:T(1,128)}', space=vmem, size = 0x12000, scoped, tag = 'internal scratch']
  #allocation2 [shape = 'f32[16,32]{1,0:T(8,128)}', space=vmem, size = 0x2000, scoped, tag = 'scratch operand']
  %s0 = inlined_call_operand.vmem [shape: bf16[16,32], index: 0, kind: input, shape index: {}]
  %s1 = inlined_call_operand.vmem [shape: bf16[32,32], index: 1, kind: input, shape index: {}]
  %s2 = inlined_call_operand.vmem [shape: f32[1,32], index: 2, kind: input, shape index: {}]
  %s3 = inlined_call_operand.vmem [shape: f32[16,32], index: 3, kind: input, shape index: {}]
  %s4 = inlined_call_operand.vmem [shape: f32[16,32], index: 4, kind: output, shape index: {}]
  %s5 = sld [smem:[#allocation0]]
  $region34: #{byte_decoder_forward.21} parent=0
    _
  %s7 = ssub.s32 1, %s5
  %s8 = scalar_select 0, %s7, %s5
  // Predicated region
  $region2: #{byte_decoder_forward.21} parent=0 // pred_check
    _
  $region3: #{byte_decoder_forward.21} parent=0 // pred_check_branch
    %10 = sbr.rel (0) target = $region5
  $region4: #{byte_decoder_forward.21} parent=0 // pred_region
    _
  $region5: #{byte_decoder_forward.21} parent=0 // pred_fallthru
    _
  // Predicated region
  $region6: #{byte_decoder_forward.21} parent=0 // pred_check
    _
  $region7: #{byte_decoder_forward.21} parent=0 // pred_check_branch
    %12 = sbr.rel (0) target = $region9
  $region8: #{byte_decoder_forward.21} parent=0 // pred_region
    _
  $region9: #{byte_decoder_forward.21} parent=0 // pred_fallthru
    _
  // Predicated region
  $region10: #{byte_decoder_forward.21} parent=0 // pred_check
    _
  $region11: #{byte_decoder_forward.21} parent=0 // pred_check_branch
    %14 = sbr.rel (0) target = $region13
  $region12: #{byte_decoder_forward.21} parent=0 // pred_region
    _
  $region13: #{byte_decoder_forward.21} parent=0 // pred_fallthru
    _
  // Predicated region
  $region14: #{byte_decoder_forward.21} parent=0 // pred_check
    _
  $region15: #{byte_decoder_forward.21} parent=0 // pred_check_branch
    %16 = sbr.rel (0) target = $region17
  $region16: #{byte_decoder_forward.21} parent=0 // pred_region
    _
  $region17: #{byte_decoder_forward.21} parent=0 // pred_fallthru
    _
  %p18 = scmp.eq.s32.totalorder 0, 0
  // Predicated region
  $region18: #{byte_decoder_forward.21} parent=0 // pred_check
    %p19 = pneg %p18
  $region19: #{byte_decoder_forward.21} parent=0 // pred_check_branch
    %21 = sbr.rel (%p19) target = $region21
  $region20: #{byte_decoder_forward.21} parent=0 // pred_region
    %vm22 = vcmask 261120
    %23 = vst.msk [vmem:[#allocation2] sm:$0xff] %vm22, 0.0
    %24 = vst.msk [vmem:[#allocation2 + $0x8] sm:$0xff] %vm22, 0.0
  $region21: #{byte_decoder_forward.21} parent=0 // pred_fallthru
    _
  %v25 = vld [vmem:[#allocation2] sm:$0xff]
  %v26 = vld [vmem:[#allocation2 + $0x8] sm:$0xff]
  %v27 = vld [vmem:[%s0] sm:$0xf]
  %v28 = vld [vmem:[%s0 + $0x4] sm:$0xf]
  %v29 = vld [vmem:[%s1] sm:$0xf]
  %v30 = vld [vmem:[%s1 + $0x4] sm:$0xf]
  %v31 = vld [vmem:[%s1 + $0x8] sm:$0xf]
  %v32 = vld [vmem:[%s1 + $0xc] sm:$0xf]
  %v35 = vunpack.c.l.b16 %v27
  %v36 = vunpack.c.l.b16 %v28
  %v37 = vpack.c.b16 %v36, %v35
  %v42 = vunpack.c.l.b16 %v29
  %v43 = vunpack.c.l.b16 %v30
  %v44 = vunpack.c.l.b16 %v31
  %v45 = vunpack.c.l.b16 %v32
  %v46 = vpack.c.b16 %v43, %v42
  %v47 = vpack.c.b16 %v45, %v44
  %vm50 = vcmask 261120
  %v52 = vsel %vm50, %v37, 0
  %54 = vmatprep.subr.bf16.mxu0 0
  %55 = vmatpush1.bf16.msra.mxu0 %v46
  %56 = vmatprep.subr.bf16.mxu0 0
  %57 = vmatpush1.bf16.msra.mxu0 %v47
  %58 = vmatprep.subr.bf16.mxu0 0
  %59 = vmatpush1.bf16.msra.mxu0 0
  %60 = vmatprep.subr.bf16.mxu0 0
  %61 = vmatpush1.bf16.msra.mxu0 0
  %62 = vmatprep.subr.bf16.mxu0 0
  %63 = vmatpush1.bf16.msra.mxu0 0
  %64 = vmatprep.subr.bf16.mxu0 0
  %65 = vmatpush1.bf16.msra.mxu0 0
  %66 = vmatprep.subr.bf16.mxu0 0
  %67 = vmatpush1.bf16.msra.mxu0 0
  %68 = vmatprep.subr.bf16.mxu0 0
  %69 = vmatpush1.bf16.msra.mxu0 0
  %70 = vmatprep.subr.bf16.mxu0 0
  %71 = vmatpush1.bf16.msra.mxu0 0
  %72 = vmatprep.subr.bf16.mxu0 0
  %73 = vmatpush1.bf16.msra.mxu0 0
  %74 = vmatprep.subr.bf16.mxu0 0
  %75 = vmatpush1.bf16.msra.mxu0 0
  %76 = vmatprep.subr.bf16.mxu0 0
  %77 = vmatpush1.bf16.msra.mxu0 0
  %78 = vmatprep.subr.bf16.mxu0 0
  %79 = vmatpush1.bf16.msra.mxu0 0
  %80 = vmatprep.subr.bf16.mxu0 0
  %81 = vmatpush1.bf16.msra.mxu0 0
  %82 = vmatprep.subr.bf16.mxu0 0
  %83 = vmatpush1.bf16.msra.mxu0 0
  %84 = vmatprep.subr.bf16.mxu0 0
  %85 = vmatpush1.bf16.msra.mxu0 0
  %86 = vmatprep.mubr.bf16.mxu0 0
  %87 = vmatmul.mubr.bf16.gmra.mrb[0].mxu0 %v52
  %v88 = vpop.f32.mrb[0].mxu0
  %v89 = vadd.f32 0.0, %v88
  %v90 = vpop.f32.mrb[0].mxu0
  %v91 = vpop.f32.mrb[0].mxu0
  %v92 = vadd.f32 0.0, %v91
  %v93 = vpop.f32.mrb[0].mxu0
  %94 = vdwg.mxu0
  %v95 = vadd.f32 %v25, %v89
  %v96 = vadd.f32 %v26, %v92
  %97 = vst.msk [vmem:[#allocation2] sm:$0xff] %vm50, %v95
  %98 = vst.msk [vmem:[#allocation2 + $0x8] sm:$0xff] %vm50, %v96
  // Predicated region
  $region22: #{byte_decoder_forward.21} parent=0 // pred_check
    %p99 = pneg %p18
  $region23: #{byte_decoder_forward.21} parent=0 // pred_check_branch
    %101 = sbr.rel (%p99) target = $region25
  $region24: #{byte_decoder_forward.21} parent=0 // pred_region
    %v102 = vld [vmem:[#allocation2] sm:$0xff]
    %v103 = vld [vmem:[#allocation2 + $0x8] sm:$0xff]
    %v104 = vld [vmem:[%s2] sm:$0x1]
    %v106 = vlaneseq
    %v107 = vshrl.u32 %v106, 7
    %v108 = vsub.s32 0, %v107
    %v109 = vrot.slane %v104, %v108
    %v111 = vadd.f32 %v102, %v109
    %v112 = vadd.f32 %v103, %v109
    %v113 = vld [vmem:[%s3] sm:$0xff]
    %v114 = vld [vmem:[%s3 + $0x8] sm:$0xff]
    %v115 = vadd.f32 %v111, %v113
    %v116 = vadd.f32 %v112, %v114
    %117 = vst.msk [vmem:[%s4] sm:$0xff] %vm50, %v115
    %118 = vst.msk [vmem:[%s4 + $0x8] sm:$0xff] %vm50, %v116
  $region25: #{byte_decoder_forward.21} parent=0 // pred_fallthru
    _
  // Predicated region
  $region26: #{byte_decoder_forward.21} parent=0 // pred_check
    _
  $region27: #{byte_decoder_forward.21} parent=0 // pred_check_branch
    %120 = sbr.rel (0) target = $region29
  $region28: #{byte_decoder_forward.21} parent=0 // pred_region
    _
  $region29: #{byte_decoder_forward.21} parent=0 // pred_fallthru
    _
  // Predicated region
  $region30: #{byte_decoder_forward.21} parent=0 // pred_check
    _
  $region31: #{byte_decoder_forward.21} parent=0 // pred_check_branch
    %122 = sbr.rel (0) target = $region33
  $region32: #{byte_decoder_forward.21} parent=0 // pred_region
    _
  $region33: #{byte_decoder_forward.21} parent=0 // pred_fallthru
    _

// kernel: byte_decoder_forward.19
$region0: #{byte_decoder_forward.19}
  #allocation0 [shape = 'u32[]', space=smem, size = 0x4, offset = 0x4, fixed_abs, tag = 'smem constant byte address 0x4 - core index']
  #allocation1 [shape = 'u32[144,128]{1,0:T(1,128)}', space=vmem, size = 0x12000, scoped, tag = 'internal scratch']
  #allocation2 [shape = 'bf16[16,32]{1,0:T(16,128)(2,1)}', space=vmem, size = 0x1000, scoped, tag = 'scratch operand']
  %s0 = inlined_call_operand.vmem [shape: f32[16,32], index: 0, kind: input, shape index: {}]
  %s1 = inlined_call_operand.vmem [shape: f32[1,32], index: 1, kind: input, shape index: {}]
  %s2 = inlined_call_operand.vmem [shape: f32[1,32], index: 2, kind: input, shape index: {}]
  %s3 = inlined_call_operand.vmem [shape: bf16[32,96], index: 3, kind: input, shape index: {}]
  %s4 = inlined_call_operand.vmem [shape: f32[1,96], index: 4, kind: input, shape index: {}]
  %s5 = inlined_call_operand.vmem [shape: bf16[16,96], index: 5, kind: output, shape index: {}]
  %s6 = sld [smem:[#allocation0]]
  $region34: #{byte_decoder_forward.19} parent=0
    _
  %s8 = ssub.s32 1, %s6
  %s9 = scalar_select 0, %s8, %s6
  // Predicated region
  $region2: #{byte_decoder_forward.19} parent=0 // pred_check
    _
  $region3: #{byte_decoder_forward.19} parent=0 // pred_check_branch
    %11 = sbr.rel (0) target = $region5
  $region4: #{byte_decoder_forward.19} parent=0 // pred_region
    _
  $region5: #{byte_decoder_forward.19} parent=0 // pred_fallthru
    _
  // Predicated region
  $region6: #{byte_decoder_forward.19} parent=0 // pred_check
    _
  $region7: #{byte_decoder_forward.19} parent=0 // pred_check_branch
    %13 = sbr.rel (0) target = $region9
  $region8: #{byte_decoder_forward.19} parent=0 // pred_region
    _
  $region9: #{byte_decoder_forward.19} parent=0 // pred_fallthru
    _
  // Predicated region
  $region10: #{byte_decoder_forward.19} parent=0 // pred_check
    _
  $region11: #{byte_decoder_forward.19} parent=0 // pred_check_branch
    %15 = sbr.rel (0) target = $region13
  $region12: #{byte_decoder_forward.19} parent=0 // pred_region
    _
  $region13: #{byte_decoder_forward.19} parent=0 // pred_fallthru
    _
  // Predicated region
  $region14: #{byte_decoder_forward.19} parent=0 // pred_check
    _
  $region15: #{byte_decoder_forward.19} parent=0 // pred_check_branch
    %17 = sbr.rel (0) target = $region17
  $region16: #{byte_decoder_forward.19} parent=0 // pred_region
    _
  $region17: #{byte_decoder_forward.19} parent=0 // pred_fallthru
    _
  // Predicated region
  $region18: #{byte_decoder_forward.19} parent=0 // pred_check
    _
  $region19: #{byte_decoder_forward.19} parent=0 // pred_check_branch
    %19 = sbr.rel (0) target = $region21
  $region20: #{byte_decoder_forward.19} parent=0 // pred_region
    _
  $region21: #{byte_decoder_forward.19} parent=0 // pred_fallthru
    _
  %p21 = scmp.eq.s32.totalorder 0, 0
  // Predicated region
  $region22: #{byte_decoder_forward.19} parent=0 // pred_check
    %p22 = pneg %p21
  $region23: #{byte_decoder_forward.19} parent=0 // pred_check_branch
    %24 = sbr.rel (%p22) target = $region25
  $region24: #{byte_decoder_forward.19} parent=0 // pred_region
    %v25 = vld [vmem:[%s0] sm:$0xff]
    %v26 = vld [vmem:[%s0 + $0x8] sm:$0xff]
    %vm27 = vcmask 261120
    %v28 = vsel %vm27, %v25, 0.0
    %29 = vadd.xlane.f32.xlu0 %v28
    %v30 = vpop.xlane.xlu0 %29
    %v31 = vsel %vm27, %v26, 0.0
    %32 = vadd.xlane.f32.xlu0 %v31
    %v33 = vpop.xlane.xlu0 %32
    %v34 = vrcp.pop 32.0
    %v35 = vmul.f32 %v30, %v34
    %v36 = vmul.f32 %v33, %v34
    %v37 = vsub.f32 %v25, %v35
    %v38 = vsub.f32 %v26, %v36
    %v39 = vmul.f32 %v37, %v37
    %v40 = vmul.f32 %v38, %v38
    %v41 = vsel %vm27, %v39, 0.0
    %42 = vadd.xlane.f32.xlu0 %v41
    %v43 = vpop.xlane.xlu0 %42
    %v44 = vsel %vm27, %v40, 0.0
    %45 = vadd.xlane.f32.xlu0 %v44
    %v46 = vpop.xlane.xlu0 %45
    %v47 = vmul.f32 %v43, %v34
    %v48 = vmul.f32 %v46, %v34
    %v49 = vadd.f32 %v47, 1e-05
    %v50 = vadd.f32 %v48, 1e-05
    %v51 = vrsqrt.pop %v49
    %v52 = vrsqrt.pop %v50
    %v53 = vmul.f32 %v37, %v51
    %v54 = vmul.f32 %v38, %v52
    %v55 = vld [vmem:[%s1] sm:$0x1]
    %v57 = vlaneseq
    %v58 = vshrl.u32 %v57, 7
    %v59 = vsub.s32 0, %v58
    %v60 = vrot.slane %v55, %v59
    %v62 = vmul.f32 %v53, %v60
    %v63 = vmul.f32 %v54, %v60
    %v64 = vld [vmem:[%s2] sm:$0x1]
    %v66 = vlaneseq
    %v67 = vshrl.u32 %v66, 7
    %v68 = vsub.s32 0, %v67
    %v69 = vrot.slane %v64, %v68
    %v71 = vadd.f32 %v62, %v69
    %v72 = vadd.f32 %v63, %v69
    %v73 = vpack.c.bf16 %v72, %v71
    %74 = vst.msk [vmem:[#allocation2] sm:$0xff] %vm27, %v73
  $region25: #{byte_decoder_forward.19} parent=0 // pred_fallthru
    _
  %v75 = vld [vmem:[#allocation2] sm:$0xff]
  %v76 = vld [vmem:[%s3] sm:$0xf]
  %v77 = vld [vmem:[%s3 + $0x4] sm:$0xf]
  %v78 = vld [vmem:[%s3 + $0x8] sm:$0xf]
  %v79 = vld [vmem:[%s3 + $0xc] sm:$0xf]
  %v80 = vld [vmem:[%s4] sm:$0x1]
  %v82 = vlaneseq
  %v83 = vshrl.u32 %v82, 7
  %v84 = vsub.s32 0, %v83
  %v85 = vrot.slane %v80, %v84
  %v91 = vunpack.c.l.b16 %v76
  %v92 = vunpack.c.l.b16 %v77
  %v93 = vunpack.c.l.b16 %v78
  %v94 = vunpack.c.l.b16 %v79
  %v95 = vpack.c.b16 %v92, %v91
  %v96 = vpack.c.b16 %v94, %v93
  %vm99 = vcmask 261120
  %v101 = vsel %vm99, %v75, 0
  %103 = vmatprep.subr.bf16.mxu0 0
  %104 = vmatpush1.bf16.msra.mxu0 %v95
  %105 = vmatprep.subr.bf16.mxu0 0
  %106 = vmatpush1.bf16.msra.mxu0 %v96
  %107 = vmatprep.subr.bf16.mxu0 0
  %108 = vmatpush1.bf16.msra.mxu0 0
  %109 = vmatprep.subr.bf16.mxu0 0
  %110 = vmatpush1.bf16.msra.mxu0 0
  %111 = vmatprep.subr.bf16.mxu0 0
  %112 = vmatpush1.bf16.msra.mxu0 0
  %113 = vmatprep.subr.bf16.mxu0 0
  %114 = vmatpush1.bf16.msra.mxu0 0
  %115 = vmatprep.subr.bf16.mxu0 0
  %116 = vmatpush1.bf16.msra.mxu0 0
  %117 = vmatprep.subr.bf16.mxu0 0
  %118 = vmatpush1.bf16.msra.mxu0 0
  %119 = vmatprep.subr.bf16.mxu0 0
  %120 = vmatpush1.bf16.msra.mxu0 0
  %121 = vmatprep.subr.bf16.mxu0 0
  %122 = vmatpush1.bf16.msra.mxu0 0
  %123 = vmatprep.subr.bf16.mxu0 0
  %124 = vmatpush1.bf16.msra.mxu0 0
  %125 = vmatprep.subr.bf16.mxu0 0
  %126 = vmatpush1.bf16.msra.mxu0 0
  %127 = vmatprep.subr.bf16.mxu0 0
  %128 = vmatpush1.bf16.msra.mxu0 0
  %129 = vmatprep.subr.bf16.mxu0 0
  %130 = vmatpush1.bf16.msra.mxu0 0
  %131 = vmatprep.subr.bf16.mxu0 0
  %132 = vmatpush1.bf16.msra.mxu0 0
  %133 = vmatprep.subr.bf16.mxu0 0
  %134 = vmatpush1.bf16.msra.mxu0 0
  %135 = vmatprep.mubr.bf16.mxu0 0
  %136 = vmatmul.mubr.bf16.gmra.mrb[0].mxu0 %v101
  %v137 = vpop.f32.mrb[0].mxu0
  %v138 = vadd.f32 %v85, %v137
  %v139 = vpop.f32.mrb[0].mxu0
  %v140 = vpop.f32.mrb[0].mxu0
  %v141 = vadd.f32 %v85, %v140
  %v142 = vpop.f32.mrb[0].mxu0
  %143 = vdwg.mxu0
  %v144 = vpack.c.bf16 %v141, %v138
  %v146 = vunpack.c.l.b16 %v144
  %v147 = vunpack.c.h.b16 %v144
  %v148 = vpack.c.b16 %v146, %v146
  %v149 = vpack.c.b16 %v147, %v147
  %vm152 = vcmask 781312
  %153 = vst.msk [vmem:[%s5] sm:$0xf] %vm152, %v148
  %154 = vst.msk [vmem:[%s5 + $0x4] sm:$0xf] %vm152, %v149
  // Predicated region
  $region26: #{byte_decoder_forward.19} parent=0 // pred_check
    _
  $region27: #{byte_decoder_forward.19} parent=0 // pred_check_branch
    %156 = sbr.rel (0) target = $region29
  $region28: #{byte_decoder_forward.19} parent=0 // pred_region
    _
  $region29: #{byte_decoder_forward.19} parent=0 // pred_fallthru
    _
  // Predicated region
  $region30: #{byte_decoder_forward.19} parent=0 // pred_check
    _
  $region31: #{byte_decoder_forward.19} parent=0 // pred_check_branch
    %158 = sbr.rel (0) target = $region33
  $region32: #{byte_decoder_forward.19} parent=0 // pred_region
    _
  $region33: #{byte_decoder_forward.19} parent=0 // pred_fallthru
    _

// kernel: byte_decoder_forward.20
$region0: #{byte_decoder_forward.20}
  #allocation0 [shape = 'u32[]', space=smem, size = 0x4, offset = 0x4, fixed_abs, tag = 'smem constant byte address 0x4 - core index']
  #allocation1 [shape = 'u32[144,128]{1,0:T(1,128)}', space=vmem, size = 0x12000, scoped, tag = 'internal scratch']
  %s0 = inlined_call_operand.vmem [shape: bf16[2,8,96], index: 0, kind: input, shape index: {}]
  %s1 = inlined_call_operand.vmem [shape: bf16[2,8,32], index: 1, kind: output, shape index: {}]
  %s2 = sld [smem:[#allocation0]]
  $region37: #{byte_decoder_forward.20} parent=0
    _
  %s4 = ssub.s32 1, %s2
  %s5 = scalar_select 0, %s4, %s2
  loop: start=0, step=1, limit=4
  $region2: #{byte_decoder_forward.20} parent=0 // loop_pre_header
    _
  $region3: #{byte_decoder_forward.20} parent=0 // loop_header
    %s7 = sphi 0, %s11
    %p8 = scmp.ge.s32.totalorder %s7, 4
    %s17 = sphi 0, %s19
    %s20 = sphi 0, %s17
    %s21 = sphi 0, %s20
    %s37 = sphi 0, %s21
    %s43 = sphi 0, %s45
    %s46 = sphi 0, %s43
    %s47 = sphi 0, %s46
    %s63 = sphi 0, %s47
  $region4: #{byte_decoder_forward.20} parent=0 // loop_header_branch
    %10 = sbr.rel (%p8) target = $region8
  $region5: #{byte_decoder_forward.20} parent=0 // loop_body
    %s12 = ssub.s32 %s7, 1
    %s13 = ssub.s32 %s7, 2
    %s14 = sadd.s32 %s7, 1
    %s15 = ssub.s32 %s7, %s14
    %p16 = scmp.eq.s32.totalorder %s15, 0
    %s18 = sadd.s32 %s17, 1
    %s19 = scalar_select %p16, %s17, %s18
    %p22 = pneg %p16
    %p23 = scmp.eq.s32.totalorder %s7, 1
    %p24 = por %p22, %p23
    %p25 = scmp.ne.s32.totalorder %s17, %s20
    %p26 = scmp.eq.s32.totalorder %s7, 0
    %p27 = por %p25, %p26
    %p28 = scmp.ne.s32.totalorder %s17, %s20
    %p29 = scmp.eq.s32.totalorder %s12, 1
    %p30 = por %p28, %p29
    %p31 = scmp.ne.s32.totalorder %s20, %s21
    %p32 = scmp.eq.s32.totalorder %s12, 0
    %p33 = por %p31, %p32
    %p34 = scmp.ne.s32.totalorder %s20, %s21
    %p35 = scmp.eq.s32.totalorder %s13, 1
    %p36 = por %p34, %p35
    %p38 = scmp.ne.s32.totalorder %s21, %s37
    %p39 = scmp.eq.s32.totalorder %s13, 0
    %p40 = por %p38, %p39
    %s41 = ssub.s32 %s7, %s14
    %p42 = scmp.eq.s32.totalorder %s41, 0
    %s44 = sadd.s32 %s43, 1
    %s45 = scalar_select %p42, %s43, %s44
    %p48 = pneg %p42
    %p49 = scmp.eq.s32.totalorder %s7, 1
    %p50 = por %p48, %p49
    %p51 = scmp.ne.s32.totalorder %s43, %s46
    %p52 = scmp.eq.s32.totalorder %s7, 0
    %p53 = por %p51, %p52
    %p54 = scmp.ne.s32.totalorder %s43, %s46
    %p55 = scmp.eq.s32.totalorder %s12, 1
    %p56 = por %p54, %p55
    %p57 = scmp.ne.s32.totalorder %s46, %s47
    %p58 = scmp.eq.s32.totalorder %s12, 0
    %p59 = por %p57, %p58
    %p60 = scmp.ne.s32.totalorder %s46, %s47
    %p61 = scmp.eq.s32.totalorder %s13, 1
    %p62 = por %p60, %p61
    %p64 = scmp.ne.s32.totalorder %s47, %s63
    %p65 = scmp.eq.s32.totalorder %s13, 0
    %p66 = por %p64, %p65
    %p67 = scmp.le.s32.totalorder 1, %s7
    %p68 = scmp.lt.s32.totalorder %s7, 3
    %p69 = pnand %p67, %p68
    %p70 = pneg %p69
    // Predicated region
    $region9: #{byte_decoder_forward.20} parent=5 // pred_check
      _
    $region10: #{byte_decoder_forward.20} parent=5 // pred_check_branch
      %72 = sbr.rel (%p69) target = $region12
    $region11: #{byte_decoder_forward.20} parent=5 // pred_region
      %s73 = ssub.s32 %s7, 1
    $region12: #{byte_decoder_forward.20} parent=5 // pred_fallthru
      _
    %p74 = scmp.lt.s32.totalorder %s7, 2
    // Predicated region
    $region13: #{byte_decoder_forward.20} parent=5 // pred_check
      %p75 = pneg %p74
    $region14: #{byte_decoder_forward.20} parent=5 // pred_check_branch
      %77 = sbr.rel (%p75) target = $region16
    $region15: #{byte_decoder_forward.20} parent=5 // pred_region
      // Predicated region
      $region17: #{byte_decoder_forward.20} parent=15 // pred_check
        %p78 = pneg %p27
      $region18: #{byte_decoder_forward.20} parent=15 // pred_check_branch
        %80 = sbr.rel (%p78) target = $region20
      $region19: #{byte_decoder_forward.20} parent=15 // pred_region
        %p81 = scmp.lt.s32.totalorder %s7, 1
        %s82 = scalar_select %p81, %s7, 1
        %s83 = smul.addr %s82, 4
        %s84 = scalar_lea.vmem %s0, %s83
      $region20: #{byte_decoder_forward.20} parent=15 // pred_fallthru
        _
    $region16: #{byte_decoder_forward.20} parent=5 // pred_fallthru
      _
    %p85 = scmp.le.s32.totalorder 1, %s7
    %p86 = scmp.lt.s32.totalorder %s7, 3
    %p87 = pnand %p85, %p86
    %p88 = pneg %p87
    // Predicated region
    $region21: #{byte_decoder_forward.20} parent=5 // pred_check
      _
    $region22: #{byte_decoder_forward.20} parent=5 // pred_check_branch
      %90 = sbr.rel (%p87) target = $region24
    $region23: #{byte_decoder_forward.20} parent=5 // pred_region
      %s91 = ssub.s32 %s7, 1
      %p92 = scmp.lt.s32.totalorder %s12, 1
      %s93 = scalar_select %p92, %s12, 1
      %s94 = smul.addr %s93, 4
      %s95 = scalar_lea.vmem %s0, %s94
      %p96 = pneg %p33
      %p97 = pneg %p30
      %p98 = pneg %p59
      %p99 = pneg %p56
      %p100 = scmp.lt.s32.totalorder %s12, 1
      %s101 = scalar_select %p100, %s12, 1
      %s102 = smul.addr %s101, 4
      %s103 = scalar_lea.vmem %s1, %s102
      %p104 = scmp.lt.s32.totalorder %s12, 1
      %s105 = scalar_select %p104, %s12, 1
      %s106 = smul.addr %s105, 4
      %s107 = scalar_lea.vmem %s0, %s106
      %p108 = scmp.lt.s32.totalorder %s12, 1
      %s109 = scalar_select %p108, %s12, 1
      %s110 = smul.addr %s109, 4
      %s111 = scalar_lea.vmem %s1, %s110
      %v113 = vld [vmem:[%s107] sm:$0xf]
      %v114 = vlaneseq
      %v115 = vshrl.u32 %v114, 7
      %v116 = vlaneseq
      %v117 = vand.u32 %v116, 127
      %vm118 = vcmp.gt.s32.totalorder %v117, %v115
      %v119 = vsub.s32 %v115, 7
      %vm120 = vcmp.lt.s32.totalorder %v117, %v119
      %vm121 = vmor %vm118, %vm120
      %v122 = vunpack.c.l.bf16 %v113
      %v123 = vmul.f32 %v122, 0.35355338
      %v124 = vpack.c.bf16 %v123, %v123
      %v126 = vunpack.c.l.b16 %v113
      %v127 = vpack.c.b16 %v126, %v126
      %128 = vrot.lane.b32.xlu0 %v127, 96
      %v129 = vpop.permute.xlu0 %128
      %vm130 = vcmask 64512
      %v132 = vsel %vm130, %v124, 0
      %v135 = vsel %vm130, %v129, 0
      %137 = vmatprep.subr.bf16.mxu0 0
      %138 = vmatpush1.bf16.xpose.msra.mxu0 %v135
      %139 = vmatprep.subr.bf16.mxu0 0
      %140 = vmatpush1.bf16.xpose.msra.mxu0 0
      %141 = vmatprep.subr.bf16.mxu0 0
      %142 = vmatpush1.bf16.xpose.msra.mxu0 0
      %143 = vmatprep.subr.bf16.mxu0 0
      %144 = vmatpush1.bf16.xpose.msra.mxu0 0
      %145 = vmatprep.subr.bf16.mxu0 0
      %146 = vmatpush1.bf16.xpose.msra.mxu0 0
      %147 = vmatprep.subr.bf16.mxu0 0
      %148 = vmatpush1.bf16.xpose.msra.mxu0 0
      %149 = vmatprep.subr.bf16.mxu0 0
      %150 = vmatpush1.bf16.xpose.msra.mxu0 0
      %151 = vmatprep.subr.bf16.mxu0 0
      %152 = vmatpush1.bf16.xpose.msra.mxu0 0
      %153 = vmatprep.subr.bf16.mxu0 0
      %154 = vmatpush1.bf16.xpose.msra.mxu0 0
      %155 = vmatprep.subr.bf16.mxu0 0
      %156 = vmatpush1.bf16.xpose.msra.mxu0 0
      %157 = vmatprep.subr.bf16.mxu0 0
      %158 = vmatpush1.bf16.xpose.msra.mxu0 0
      %159 = vmatprep.subr.bf16.mxu0 0
      %160 = vmatpush1.bf16.xpose.msra.mxu0 0
      %161 = vmatprep.subr.bf16.mxu0 0
      %162 = vmatpush1.bf16.xpose.msra.mxu0 0
      %163 = vmatprep.subr.bf16.mxu0 0
      %164 = vmatpush1.bf16.xpose.msra.mxu0 0
      %165 = vmatprep.subr.bf16.mxu0 0
      %166 = vmatpush1.bf16.xpose.msra.mxu0 0
      %167 = vmatprep.subr.bf16.mxu0 0
      %168 = vmatpush1.bf16.xpose.msra.mxu0 0
      %169 = vmatprep.mubr.bf16.mxu0 0
      %170 = vmatmul.mubr.bf16.gmra.mrb[0].mxu0 %v132
      %v171 = vpop.f32.mrb[0].mxu0
      %v172 = vadd.f32 0.0, %v171
      %v173 = vpop.f32.mrb[0].mxu0
      %v174 = vpop.f32.mrb[0].mxu0
      %v175 = vpop.f32.mrb[0].mxu0
      %176 = vdwg.mxu0
      %v177 = vsel %vm121, -1e+30, %v172
      %v178 = vsel %vm130, %v177, -inf
      %179 = vmax.xlane.f32.xlu0 %v178
      %v180 = vpop.xlane.xlu0 %179
      %v181 = vsub.f32 %v177, %v180
      %v182 = vmul.f32 %v181, 1.442695
      %v183 = vpow.pop %v182
      %v184 = vsel %vm130, %v183, 0.0
      %185 = vadd.xlane.f32.xlu0 %v184
      %v186 = vpop.xlane.xlu0 %185
      %v187 = vrcp.pop %v186
      %v188 = vmul.f32 %v183, %v187
      %v189 = vpack.c.bf16 %v188, %v188
      %190 = vrot.lane.b32.xlu0 %v127, 64
      %v191 = vpop.permute.xlu0 %190
      %v193 = vsel %vm130, %v189, 0
      %vm195 = vcmask 1043456
      %v197 = vsel %vm195, %v191, 0
      %199 = vmatprep.subr.bf16.mxu0 0
      %200 = vmatpush1.bf16.msra.mxu0 %v197
      %201 = vmatprep.subr.bf16.mxu0 0
      %202 = vmatpush1.bf16.msra.mxu0 0
      %203 = vmatprep.subr.bf16.mxu0 0
      %204 = vmatpush1.bf16.msra.mxu0 0
      %205 = vmatprep.subr.bf16.mxu0 0
      %206 = vmatpush1.bf16.msra.mxu0 0
      %207 = vmatprep.subr.bf16.mxu0 0
      %208 = vmatpush1.bf16.msra.mxu0 0
      %209 = vmatprep.subr.bf16.mxu0 0
      %210 = vmatpush1.bf16.msra.mxu0 0
      %211 = vmatprep.subr.bf16.mxu0 0
      %212 = vmatpush1.bf16.msra.mxu0 0
      %213 = vmatprep.subr.bf16.mxu0 0
      %214 = vmatpush1.bf16.msra.mxu0 0
      %215 = vmatprep.subr.bf16.mxu0 0
      %216 = vmatpush1.bf16.msra.mxu0 0
      %217 = vmatprep.subr.bf16.mxu0 0
      %218 = vmatpush1.bf16.msra.mxu0 0
      %219 = vmatprep.subr.bf16.mxu0 0
      %220 = vmatpush1.bf16.msra.mxu0 0
      %221 = vmatprep.subr.bf16.mxu0 0
      %222 = vmatpush1.bf16.msra.mxu0 0
      %223 = vmatprep.subr.bf16.mxu0 0
      %224 = vmatpush1.bf16.msra.mxu0 0
      %225 = vmatprep.subr.bf16.mxu0 0
      %226 = vmatpush1.bf16.msra.mxu0 0
      %227 = vmatprep.subr.bf16.mxu0 0
      %228 = vmatpush1.bf16.msra.mxu0 0
      %229 = vmatprep.subr.bf16.mxu0 0
      %230 = vmatpush1.bf16.msra.mxu0 0
      %231 = vmatprep.mubr.bf16.mxu0 0
      %232 = vmatmul.mubr.bf16.gmra.mrb[0].mxu0 %v193
      %v233 = vpop.f32.mrb[0].mxu0
      %v234 = vadd.f32 0.0, %v233
      %v235 = vpop.f32.mrb[0].mxu0
      %v236 = vpop.f32.mrb[0].mxu0
      %v237 = vpop.f32.mrb[0].mxu0
      %238 = vdwg.mxu0
      %240 = vrot.lane.b32.xlu0 %v124, 120
      %v241 = vpop.permute.xlu0 %240
      %242 = vrot.lane.b32.xlu0 %v127, 88
      %v243 = vpop.permute.xlu0 %242
      %v245 = vsel %vm130, %v241, 0
      %v248 = vsel %vm130, %v243, 0
      %250 = vmatprep.subr.bf16.mxu0 0
      %251 = vmatpush1.bf16.xpose.msra.mxu0 %v248
      %252 = vmatprep.subr.bf16.mxu0 0
      %253 = vmatpush1.bf16.xpose.msra.mxu0 0
      %254 = vmatprep.subr.bf16.mxu0 0
      %255 = vmatpush1.bf16.xpose.msra.mxu0 0
      %256 = vmatprep.subr.bf16.mxu0 0
      %257 = vmatpush1.bf16.xpose.msra.mxu0 0
      %258 = vmatprep.subr.bf16.mxu0 0
      %259 = vmatpush1.bf16.xpose.msra.mxu0 0
      %260 = vmatprep.subr.bf16.mxu0 0
      %261 = vmatpush1.bf16.xpose.msra.mxu0 0
      %262 = vmatprep.subr.bf16.mxu0 0
      %263 = vmatpush1.bf16.xpose.msra.mxu0 0
      %264 = vmatprep.subr.bf16.mxu0 0
      %265 = vmatpush1.bf16.xpose.msra.mxu0 0
      %266 = vmatprep.subr.bf16.mxu0 0
      %267 = vmatpush1.bf16.xpose.msra.mxu0 0
      %268 = vmatprep.subr.bf16.mxu0 0
      %269 = vmatpush1.bf16.xpose.msra.mxu0 0
      %270 = vmatprep.subr.bf16.mxu0 0
      %271 = vmatpush1.bf16.xpose.msra.mxu0 0
      %272 = vmatprep.subr.bf16.mxu0 0
      %273 = vmatpush1.bf16.xpose.msra.mxu0 0
      %274 = vmatprep.subr.bf16.mxu0 0
      %275 = vmatpush1.bf16.xpose.msra.mxu0 0
      %276 = vmatprep.subr.bf16.mxu0 0
      %277 = vmatpush1.bf16.xpose.msra.mxu0 0
      %278 = vmatprep.subr.bf16.mxu0 0
      %279 = vmatpush1.bf16.xpose.msra.mxu0 0
      %280 = vmatprep.subr.bf16.mxu0 0
      %281 = vmatpush1.bf16.xpose.msra.mxu0 0
      %282 = vmatprep.mubr.bf16.mxu0 0
      %283 = vmatmul.mubr.bf16.gmra.mrb[0].mxu0 %v245
      %v284 = vpop.f32.mrb[0].mxu0
      %v285 = vadd.f32 0.0, %v284
      %v286 = vpop.f32.mrb[0].mxu0
      %v287 = vpop.f32.mrb[0].mxu0
      %v288 = vpop.f32.mrb[0].mxu0
      %289 = vdwg.mxu0
      %v290 = vsel %vm121, -1e+30, %v285
      %v291 = vsel %vm130, %v290, -inf
      %292 = vmax.xlane.f32.xlu0 %v291
      %v293 = vpop.xlane.xlu0 %292
      %v294 = vsub.f32 %v290, %v293
      %v295 = vmul.f32 %v294, 1.442695
      %v296 = vpow.pop %v295
      %v297 = vsel %vm130, %v296, 0.0
      %298 = vadd.xlane.f32.xlu0 %v297
      %v299 = vpop.xlane.xlu0 %298
      %v300 = vrcp.pop %v299
      %v301 = vmul.f32 %v296, %v300
      %v302 = vpack.c.bf16 %v301, %v301
      %303 = vrot.lane.b32.xlu0 %v127, 56
      %v304 = vpop.permute.xlu0 %303
      %v306 = vsel %vm130, %v302, 0
      %v309 = vsel %vm195, %v304, 0
      %311 = vmatprep.subr.bf16.mxu0 0
      %312 = vmatpush1.bf16.msra.mxu0 %v309
      %313 = vmatprep.subr.bf16.mxu0 0
      %314 = vmatpush1.bf16.msra.mxu0 0
      %315 = vmatprep.subr.bf16.mxu0 0
      %316 = vmatpush1.bf16.msra.mxu0 0
      %317 = vmatprep.subr.bf16.mxu0 0
      %318 = vmatpush1.bf16.msra.mxu0 0
      %319 = vmatprep.subr.bf16.mxu0 0
      %320 = vmatpush1.bf16.msra.mxu0 0
      %321 = vmatprep.subr.bf16.mxu0 0
      %322 = vmatpush1.bf16.msra.mxu0 0
      %323 = vmatprep.subr.bf16.mxu0 0
      %324 = vmatpush1.bf16.msra.mxu0 0
      %325 = vmatprep.subr.bf16.mxu0 0
      %326 = vmatpush1.bf16.msra.mxu0 0
      %327 = vmatprep.subr.bf16.mxu0 0
      %328 = vmatpush1.bf16.msra.mxu0 0
      %329 = vmatprep.subr.bf16.mxu0 0
      %330 = vmatpush1.bf16.msra.mxu0 0
      %331 = vmatprep.subr.bf16.mxu0 0
      %332 = vmatpush1.bf16.msra.mxu0 0
      %333 = vmatprep.subr.bf16.mxu0 0
      %334 = vmatpush1.bf16.msra.mxu0 0
      %335 = vmatprep.subr.bf16.mxu0 0
      %336 = vmatpush1.bf16.msra.mxu0 0
      %337 = vmatprep.subr.bf16.mxu0 0
      %338 = vmatpush1.bf16.msra.mxu0 0
      %339 = vmatprep.subr.bf16.mxu0 0
      %340 = vmatpush1.bf16.msra.mxu0 0
      %341 = vmatprep.subr.bf16.mxu0 0
      %342 = vmatpush1.bf16.msra.mxu0 0
      %343 = vmatprep.mubr.bf16.mxu0 0
      %344 = vmatmul.mubr.bf16.gmra.mrb[0].mxu0 %v306
      %v345 = vpop.f32.mrb[0].mxu0
      %v346 = vadd.f32 0.0, %v345
      %v347 = vpop.f32.mrb[0].mxu0
      %v348 = vpop.f32.mrb[0].mxu0
      %v349 = vpop.f32.mrb[0].mxu0
      %350 = vdwg.mxu0
      %351 = vrot.lane.b32.xlu0 %v124, 112
      %v352 = vpop.permute.xlu0 %351
      %353 = vrot.lane.b32.xlu0 %v127, 80
      %v354 = vpop.permute.xlu0 %353
      %v356 = vsel %vm130, %v352, 0
      %v359 = vsel %vm130, %v354, 0
      %361 = vmatprep.subr.bf16.mxu0 0
      %362 = vmatpush1.bf16.xpose.msra.mxu0 %v359
      %363 = vmatprep.subr.bf16.mxu0 0
      %364 = vmatpush1.bf16.xpose.msra.mxu0 0
      %365 = vmatprep.subr.bf16.mxu0 0
      %366 = vmatpush1.bf16.xpose.msra.mxu0 0
      %367 = vmatprep.subr.bf16.mxu0 0
      %368 = vmatpush1.bf16.xpose.msra.mxu0 0
      %369 = vmatprep.subr.bf16.mxu0 0
      %370 = vmatpush1.bf16.xpose.msra.mxu0 0
      %371 = vmatprep.subr.bf16.mxu0 0
      %372 = vmatpush1.bf16.xpose.msra.mxu0 0
      %373 = vmatprep.subr.bf16.mxu0 0
      %374 = vmatpush1.bf16.xpose.msra.mxu0 0
      %375 = vmatprep.subr.bf16.mxu0 0
      %376 = vmatpush1.bf16.xpose.msra.mxu0 0
      %377 = vmatprep.subr.bf16.mxu0 0
      %378 = vmatpush1.bf16.xpose.msra.mxu0 0
      %379 = vmatprep.subr.bf16.mxu0 0
      %380 = vmatpush1.bf16.xpose.msra.mxu0 0
      %381 = vmatprep.subr.bf16.mxu0 0
      %382 = vmatpush1.bf16.xpose.msra.mxu0 0
      %383 = vmatprep.subr.bf16.mxu0 0
      %384 = vmatpush1.bf16.xpose.msra.mxu0 0
      %385 = vmatprep.subr.bf16.mxu0 0
      %386 = vmatpush1.bf16.xpose.msra.mxu0 0
      %387 = vmatprep.subr.bf16.mxu0 0
      %388 = vmatpush1.bf16.xpose.msra.mxu0 0
      %389 = vmatprep.subr.bf16.mxu0 0
      %390 = vmatpush1.bf16.xpose.msra.mxu0 0
      %391 = vmatprep.subr.bf16.mxu0 0
      %392 = vmatpush1.bf16.xpose.msra.mxu0 0
      %393 = vmatprep.mubr.bf16.mxu0 0
      %394 = vmatmul.mubr.bf16.gmra.mrb[0].mxu0 %v356
      %v395 = vpop.f32.mrb[0].mxu0
      %v396 = vadd.f32 0.0, %v395
      %v397 = vpop.f32.mrb[0].mxu0
      %v398 = vpop.f32.mrb[0].mxu0
      %v399 = vpop.f32.mrb[0].mxu0
      %400 = vdwg.mxu0
      %v401 = vsel %vm121, -1e+30, %v396
      %v402 = vsel %vm130, %v401, -inf
      %403 = vmax.xlane.f32.xlu0 %v402
      %v404 = vpop.xlane.xlu0 %403
      %v405 = vsub.f32 %v401, %v404
      %v406 = vmul.f32 %v405, 1.442695
      %v407 = vpow.pop %v406
      %v408 = vsel %vm130, %v407, 0.0
      %409 = vadd.xlane.f32.xlu0 %v408
      %v410 = vpop.xlane.xlu0 %409
      %v411 = vrcp.pop %v410
      %v412 = vmul.f32 %v407, %v411
      %v413 = vpack.c.bf16 %v412, %v412
      %414 = vrot.lane.b32.xlu0 %v127, 48
      %v415 = vpop.permute.xlu0 %414
      %v417 = vsel %vm130, %v413, 0
      %v420 = vsel %vm195, %v415, 0
      %422 = vmatprep.subr.bf16.mxu0 0
      %423 = vmatpush1.bf16.msra.mxu0 %v420
      %424 = vmatprep.subr.bf16.mxu0 0
      %425 = vmatpush1.bf16.msra.mxu0 0
      %426 = vmatprep.subr.bf16.mxu0 0
      %427 = vmatpush1.bf16.msra.mxu0 0
      %428 = vmatprep.subr.bf16.mxu0 0
      %429 = vmatpush1.bf16.msra.mxu0 0
      %430 = vmatprep.subr.bf16.mxu0 0
      %431 = vmatpush1.bf16.msra.mxu0 0
      %432 = vmatprep.subr.bf16.mxu0 0
      %433 = vmatpush1.bf16.msra.mxu0 0
      %434 = vmatprep.subr.bf16.mxu0 0
      %435 = vmatpush1.bf16.msra.mxu0 0
      %436 = vmatprep.subr.bf16.mxu0 0
      %437 = vmatpush1.bf16.msra.mxu0 0
      %438 = vmatprep.subr.bf16.mxu0 0
      %439 = vmatpush1.bf16.msra.mxu0 0
      %440 = vmatprep.subr.bf16.mxu0 0
      %441 = vmatpush1.bf16.msra.mxu0 0
      %442 = vmatprep.subr.bf16.mxu0 0
      %443 = vmatpush1.bf16.msra.mxu0 0
      %444 = vmatprep.subr.bf16.mxu0 0
      %445 = vmatpush1.bf16.msra.mxu0 0
      %446 = vmatprep.subr.bf16.mxu0 0
      %447 = vmatpush1.bf16.msra.mxu0 0
      %448 = vmatprep.subr.bf16.mxu0 0
      %449 = vmatpush1.bf16.msra.mxu0 0
      %450 = vmatprep.subr.bf16.mxu0 0
      %451 = vmatpush1.bf16.msra.mxu0 0
      %452 = vmatprep.subr.bf16.mxu0 0
      %453 = vmatpush1.bf16.msra.mxu0 0
      %454 = vmatprep.mubr.bf16.mxu0 0
      %455 = vmatmul.mubr.bf16.gmra.mrb[0].mxu0 %v417
      %v456 = vpop.f32.mrb[0].mxu0
      %v457 = vadd.f32 0.0, %v456
      %v458 = vpop.f32.mrb[0].mxu0
      %v459 = vpop.f32.mrb[0].mxu0
      %v460 = vpop.f32.mrb[0].mxu0
      %461 = vdwg.mxu0
      %462 = vrot.lane.b32.xlu0 %v124, 104
      %v463 = vpop.permute.xlu0 %462
      %464 = vrot.lane.b32.xlu0 %v127, 72
      %v465 = vpop.permute.xlu0 %464
      %v467 = vsel %vm130, %v463, 0
      %v470 = vsel %vm130, %v465, 0
      %472 = vmatprep.subr.bf16.mxu0 0
      %473 = vmatpush1.bf16.xpose.msra.mxu0 %v470
      %474 = vmatprep.subr.bf16.mxu0 0
      %475 = vmatpush1.bf16.xpose.msra.mxu0 0
      %476 = vmatprep.subr.bf16.mxu0 0
      %477 = vmatpush1.bf16.xpose.msra.mxu0 0
      %478 = vmatprep.subr.bf16.mxu0 0
      %479 = vmatpush1.bf16.xpose.msra.mxu0 0
      %480 = vmatprep.subr.bf16.mxu0 0
      %481 = vmatpush1.bf16.xpose.msra.mxu0 0
      %482 = vmatprep.subr.bf16.mxu0 0
      %483 = vmatpush1.bf16.xpose.msra.mxu0 0
      %484 = vmatprep.subr.bf16.mxu0 0
      %485 = vmatpush1.bf16.xpose.msra.mxu0 0
      %486 = vmatprep.subr.bf16.mxu0 0
      %487 = vmatpush1.bf16.xpose.msra.mxu0 0
      %488 = vmatprep.subr.bf16.mxu0 0
      %489 = vmatpush1.bf16.xpose.msra.mxu0 0
      %490 = vmatprep.subr.bf16.mxu0 0
      %491 = vmatpush1.bf16.xpose.msra.mxu0 0
      %492 = vmatprep.subr.bf16.mxu0 0
      %493 = vmatpush1.bf16.xpose.msra.mxu0 0
      %494 = vmatprep.subr.bf16.mxu0 0
      %495 = vmatpush1.bf16.xpose.msra.mxu0 0
      %496 = vmatprep.subr.bf16.mxu0 0
      %497 = vmatpush1.bf16.xpose.msra.mxu0 0
      %498 = vmatprep.subr.bf16.mxu0 0
      %499 = vmatpush1.bf16.xpose.msra.mxu0 0
      %500 = vmatprep.subr.bf16.mxu0 0
      %501 = vmatpush1.bf16.xpose.msra.mxu0 0
      %502 = vmatprep.subr.bf16.mxu0 0
      %503 = vmatpush1.bf16.xpose.msra.mxu0 0
      %504 = vmatprep.mubr.bf16.mxu0 0
      %505 = vmatmul.mubr.bf16.gmra.mrb[0].mxu0 %v467
      %v506 = vpop.f32.mrb[0].mxu0
      %v507 = vadd.f32 0.0, %v506
      %v508 = vpop.f32.mrb[0].mxu0
      %v509 = vpop.f32.mrb[0].mxu0
      %v510 = vpop.f32.mrb[0].mxu0
      %511 = vdwg.mxu0
      %v512 = vsel %vm121, -1e+30, %v507
      %v513 = vsel %vm130, %v512, -inf
      %514 = vmax.xlane.f32.xlu0 %v513
      %v515 = vpop.xlane.xlu0 %514
      %v516 = vsub.f32 %v512, %v515
      %v517 = vmul.f32 %v516, 1.442695
      %v518 = vpow.pop %v517
      %v519 = vsel %vm130, %v518, 0.0
      %520 = vadd.xlane.f32.xlu0 %v519
      %v521 = vpop.xlane.xlu0 %520
      %v522 = vrcp.pop %v521
      %v523 = vmul.f32 %v518, %v522
      %v524 = vpack.c.bf16 %v523, %v523
      %525 = vrot.lane.b32.xlu0 %v127, 40
      %v526 = vpop.permute.xlu0 %525
      %v528 = vsel %vm130, %v524, 0
      %v531 = vsel %vm195, %v526, 0
      %533 = vmatprep.subr.bf16.mxu0 0
      %534 = vmatpush1.bf16.msra.mxu0 %v531
      %535 = vmatprep.subr.bf16.mxu0 0
      %536 = vmatpush1.bf16.msra.mxu0 0
      %537 = vmatprep.subr.bf16.mxu0 0
      %538 = vmatpush1.bf16.msra.mxu0 0
      %539 = vmatprep.subr.bf16.mxu0 0
      %540 = vmatpush1.bf16.msra.mxu0 0
      %541 = vmatprep.subr.bf16.mxu0 0
      %542 = vmatpush1.bf16.msra.mxu0 0
      %543 = vmatprep.subr.bf16.mxu0 0
      %544 = vmatpush1.bf16.msra.mxu0 0
      %545 = vmatprep.subr.bf16.mxu0 0
      %546 = vmatpush1.bf16.msra.mxu0 0
      %547 = vmatprep.subr.bf16.mxu0 0
      %548 = vmatpush1.bf16.msra.mxu0 0
      %549 = vmatprep.subr.bf16.mxu0 0
      %550 = vmatpush1.bf16.msra.mxu0 0
      %551 = vmatprep.subr.bf16.mxu0 0
      %552 = vmatpush1.bf16.msra.mxu0 0
      %553 = vmatprep.subr.bf16.mxu0 0
      %554 = vmatpush1.bf16.msra.mxu0 0
      %555 = vmatprep.subr.bf16.mxu0 0
      %556 = vmatpush1.bf16.msra.mxu0 0
      %557 = vmatprep.subr.bf16.mxu0 0
      %558 = vmatpush1.bf16.msra.mxu0 0
      %559 = vmatprep.subr.bf16.mxu0 0
      %560 = vmatpush1.bf16.msra.mxu0 0
      %561 = vmatprep.subr.bf16.mxu0 0
      %562 = vmatpush1.bf16.msra.mxu0 0
      %563 = vmatprep.subr.bf16.mxu0 0
      %564 = vmatpush1.bf16.msra.mxu0 0
      %565 = vmatprep.mubr.bf16.mxu0 0
      %566 = vmatmul.mubr.bf16.gmra.mrb[0].mxu0 %v528
      %v567 = vpop.f32.mrb[0].mxu0
      %v568 = vadd.f32 0.0, %v567
      %v569 = vpop.f32.mrb[0].mxu0
      %v570 = vpop.f32.mrb[0].mxu0
      %v571 = vpop.f32.mrb[0].mxu0
      %572 = vdwg.mxu0
      %574 = vrot.lane.b32.xlu0 %v346, 8
      %v575 = vpop.permute.xlu0 %574
      %578 = vrot.lane.b32.xlu0 %v457, 16
      %v579 = vpop.permute.xlu0 %578
      %582 = vrot.lane.b32.xlu0 %v568, 24
      %v583 = vpop.permute.xlu0 %582
      %v585 = vsel %vm130, %v234, %v575
      %vm586 = vcmask 130048
      %v587 = vsel %vm586, %v585, %v579
      %vm588 = vcmask 195584
      %v589 = vsel %vm588, %v587, %v583
      %v590 = vpack.c.bf16 %v589, %v589
      %vm591 = vcmask 257024
      %592 = vst.msk [vmem:[%s111] sm:$0xf] %vm591, %v590
      %p593 = scmp.lt.s32.totalorder %s12, 1
      %s594 = scalar_select %p593, %s12, 1
      %s595 = smul.addr %s594, 4
      %s596 = scalar_lea.vmem %s1, %s595
      // Predicated region
      $region25: #{byte_decoder_forward.20} parent=23 // pred_check
        %p597 = pneg %p56
      $region26: #{byte_decoder_forward.20} parent=23 // pred_check_branch
        %599 = sbr.rel (%p597) target = $region28
      $region27: #{byte_decoder_forward.20} parent=23 // pred_region
        _
      $region28: #{byte_decoder_forward.20} parent=23 // pred_fallthru
        _
    $region24: #{byte_decoder_forward.20} parent=5 // pred_fallthru
      _
    %p600 = scmp.le.s32.totalorder 2, %s7
    // Predicated region
    $region29: #{byte_decoder_forward.20} parent=5 // pred_check
      %p601 = pneg %p600
    $region30: #{byte_decoder_forward.20} parent=5 // pred_check_branch
      %603 = sbr.rel (%p601) target = $region32
    $region31: #{byte_decoder_forward.20} parent=5 // pred_region
      %s604 = ssub.s32 %s7, 2
      // Predicated region
      $region33: #{byte_decoder_forward.20} parent=31 // pred_check
        %p605 = pneg %p62
      $region34: #{byte_decoder_forward.20} parent=31 // pred_check_branch
        %607 = sbr.rel (%p605) target = $region36
      $region35: #{byte_decoder_forward.20} parent=31 // pred_region
        %p608 = scmp.lt.s32.totalorder %s13, 1
        %s609 = scalar_select %p608, %s13, 1
        %s610 = smul.addr %s609, 4
        %s611 = scalar_lea.vmem %s1, %s610
      $region36: #{byte_decoder_forward.20} parent=31 // pred_fallthru
        _
    $region32: #{byte_decoder_forward.20} parent=5 // pred_fallthru
      _
  $region6: #{byte_decoder_forward.20} parent=0 // loop_footer
    %s11 = sadd.s32 1, %s7
  $region7: #{byte_decoder_forward.20} parent=0 // loop_footer_branch
    %6 = sbr.rel target = $region3
  $region8: #{byte_decoder_forward.20} parent=0 // loop_exit
    _

// kernel: byte_decoder_forward.22
$region0: #{byte_decoder_forward.22}
  #allocation0 [shape = 'u32[]', space=smem, size = 0x4, offset = 0x4, fixed_abs, tag = 'smem constant byte address 0x4 - core index']
  #allocation1 [shape = 'u32[144,128]{1,0:T(1,128)}', space=vmem, size = 0x12000, scoped, tag = 'internal scratch']
  #allocation2 [shape = 'bf16[16,32]{1,0:T(16,128)(2,1)}', space=vmem, size = 0x1000, scoped, tag = 'scratch operand']
  %s0 = inlined_call_operand.vmem [shape: f32[16,32], index: 0, kind: input, shape index: {}]
  %s1 = inlined_call_operand.vmem [shape: f32[1,32], index: 1, kind: input, shape index: {}]
  %s2 = inlined_call_operand.vmem [shape: f32[1,32], index: 2, kind: input, shape index: {}]
  %s3 = inlined_call_operand.vmem [shape: bf16[32,32], index: 3, kind: input, shape index: {}]
  %s4 = inlined_call_operand.vmem [shape: f32[1,32], index: 4, kind: input, shape index: {}]
  %s5 = inlined_call_operand.vmem [shape: bf16[16,32], index: 5, kind: output, shape index: {}]
  %s6 = sld [smem:[#allocation0]]
  $region34: #{byte_decoder_forward.22} parent=0
    _
  %s8 = ssub.s32 1, %s6
  %s9 = scalar_select 0, %s8, %s6
  // Predicated region
  $region2: #{byte_decoder_forward.22} parent=0 // pred_check
    _
  $region3: #{byte_decoder_forward.22} parent=0 // pred_check_branch
    %11 = sbr.rel (0) target = $region5
  $region4: #{byte_decoder_forward.22} parent=0 // pred_region
    _
  $region5: #{byte_decoder_forward.22} parent=0 // pred_fallthru
    _
  // Predicated region
  $region6: #{byte_decoder_forward.22} parent=0 // pred_check
    _
  $region7: #{byte_decoder_forward.22} parent=0 // pred_check_branch
    %13 = sbr.rel (0) target = $region9
  $region8: #{byte_decoder_forward.22} parent=0 // pred_region
    _
  $region9: #{byte_decoder_forward.22} parent=0 // pred_fallthru
    _
  // Predicated region
  $region10: #{byte_decoder_forward.22} parent=0 // pred_check
    _
  $region11: #{byte_decoder_forward.22} parent=0 // pred_check_branch
    %15 = sbr.rel (0) target = $region13
  $region12: #{byte_decoder_forward.22} parent=0 // pred_region
    _
  $region13: #{byte_decoder_forward.22} parent=0 // pred_fallthru
    _
  // Predicated region
  $region14: #{byte_decoder_forward.22} parent=0 // pred_check
    _
  $region15: #{byte_decoder_forward.22} parent=0 // pred_check_branch
    %17 = sbr.rel (0) target = $region17
  $region16: #{byte_decoder_forward.22} parent=0 // pred_region
    _
  $region17: #{byte_decoder_forward.22} parent=0 // pred_fallthru
    _
  // Predicated region
  $region18: #{byte_decoder_forward.22} parent=0 // pred_check
    _
  $region19: #{byte_decoder_forward.22} parent=0 // pred_check_branch
    %19 = sbr.rel (0) target = $region21
  $region20: #{byte_decoder_forward.22} parent=0 // pred_region
    _
  $region21: #{byte_decoder_forward.22} parent=0 // pred_fallthru
    _
  %p21 = scmp.eq.s32.totalorder 0, 0
  // Predicated region
  $region22: #{byte_decoder_forward.22} parent=0 // pred_check
    %p22 = pneg %p21
  $region23: #{byte_decoder_forward.22} parent=0 // pred_check_branch
    %24 = sbr.rel (%p22) target = $region25
  $region24: #{byte_decoder_forward.22} parent=0 // pred_region
    %v25 = vld [vmem:[%s0] sm:$0xff]
    %v26 = vld [vmem:[%s0 + $0x8] sm:$0xff]
    %vm27 = vcmask 261120
    %v28 = vsel %vm27, %v25, 0.0
    %29 = vadd.xlane.f32.xlu0 %v28
    %v30 = vpop.xlane.xlu0 %29
    %v31 = vsel %vm27, %v26, 0.0
    %32 = vadd.xlane.f32.xlu0 %v31
    %v33 = vpop.xlane.xlu0 %32
    %v34 = vrcp.pop 32.0
    %v35 = vmul.f32 %v30, %v34
    %v36 = vmul.f32 %v33, %v34
    %v37 = vsub.f32 %v25, %v35
    %v38 = vsub.f32 %v26, %v36
    %v39 = vmul.f32 %v37, %v37
    %v40 = vmul.f32 %v38, %v38
    %v41 = vsel %vm27, %v39, 0.0
    %42 = vadd.xlane.f32.xlu0 %v41
    %v43 = vpop.xlane.xlu0 %42
    %v44 = vsel %vm27, %v40, 0.0
    %45 = vadd.xlane.f32.xlu0 %v44
    %v46 = vpop.xlane.xlu0 %45
    %v47 = vmul.f32 %v43, %v34
    %v48 = vmul.f32 %v46, %v34
    %v49 = vadd.f32 %v47, 1e-05
    %v50 = vadd.f32 %v48, 1e-05
    %v51 = vrsqrt.pop %v49
    %v52 = vrsqrt.pop %v50
    %v53 = vmul.f32 %v37, %v51
    %v54 = vmul.f32 %v38, %v52
    %v55 = vld [vmem:[%s1] sm:$0x1]
    %v57 = vlaneseq
    %v58 = vshrl.u32 %v57, 7
    %v59 = vsub.s32 0, %v58
    %v60 = vrot.slane %v55, %v59
    %v62 = vmul.f32 %v53, %v60
    %v63 = vmul.f32 %v54, %v60
    %v64 = vld [vmem:[%s2] sm:$0x1]
    %v66 = vlaneseq
    %v67 = vshrl.u32 %v66, 7
    %v68 = vsub.s32 0, %v67
    %v69 = vrot.slane %v64, %v68
    %v71 = vadd.f32 %v62, %v69
    %v72 = vadd.f32 %v63, %v69
    %v73 = vpack.c.bf16 %v72, %v71
    %74 = vst.msk [vmem:[#allocation2] sm:$0xff] %vm27, %v73
  $region25: #{byte_decoder_forward.22} parent=0 // pred_fallthru
    _
  %v75 = vld [vmem:[#allocation2] sm:$0xff]
  %v76 = vld [vmem:[%s3] sm:$0xf]
  %v77 = vld [vmem:[%s3 + $0x4] sm:$0xf]
  %v78 = vld [vmem:[%s3 + $0x8] sm:$0xf]
  %v79 = vld [vmem:[%s3 + $0xc] sm:$0xf]
  %v80 = vld [vmem:[%s4] sm:$0x1]
  %v82 = vlaneseq
  %v83 = vshrl.u32 %v82, 7
  %v84 = vsub.s32 0, %v83
  %v85 = vrot.slane %v80, %v84
  %v91 = vunpack.c.l.b16 %v76
  %v92 = vunpack.c.l.b16 %v77
  %v93 = vunpack.c.l.b16 %v78
  %v94 = vunpack.c.l.b16 %v79
  %v95 = vpack.c.b16 %v92, %v91
  %v96 = vpack.c.b16 %v94, %v93
  %vm99 = vcmask 261120
  %v101 = vsel %vm99, %v75, 0
  %103 = vmatprep.subr.bf16.mxu0 0
  %104 = vmatpush1.bf16.msra.mxu0 %v95
  %105 = vmatprep.subr.bf16.mxu0 0
  %106 = vmatpush1.bf16.msra.mxu0 %v96
  %107 = vmatprep.subr.bf16.mxu0 0
  %108 = vmatpush1.bf16.msra.mxu0 0
  %109 = vmatprep.subr.bf16.mxu0 0
  %110 = vmatpush1.bf16.msra.mxu0 0
  %111 = vmatprep.subr.bf16.mxu0 0
  %112 = vmatpush1.bf16.msra.mxu0 0
  %113 = vmatprep.subr.bf16.mxu0 0
  %114 = vmatpush1.bf16.msra.mxu0 0
  %115 = vmatprep.subr.bf16.mxu0 0
  %116 = vmatpush1.bf16.msra.mxu0 0
  %117 = vmatprep.subr.bf16.mxu0 0
  %118 = vmatpush1.bf16.msra.mxu0 0
  %119 = vmatprep.subr.bf16.mxu0 0
  %120 = vmatpush1.bf16.msra.mxu0 0
  %121 = vmatprep.subr.bf16.mxu0 0
  %122 = vmatpush1.bf16.msra.mxu0 0
  %123 = vmatprep.subr.bf16.mxu0 0
  %124 = vmatpush1.bf16.msra.mxu0 0
  %125 = vmatprep.subr.bf16.mxu0 0
  %126 = vmatpush1.bf16.msra.mxu0 0
  %127 = vmatprep.subr.bf16.mxu0 0
  %128 = vmatpush1.bf16.msra.mxu0 0
  %129 = vmatprep.subr.bf16.mxu0 0
  %130 = vmatpush1.bf16.msra.mxu0 0
  %131 = vmatprep.subr.bf16.mxu0 0
  %132 = vmatpush1.bf16.msra.mxu0 0
  %133 = vmatprep.subr.bf16.mxu0 0
  %134 = vmatpush1.bf16.msra.mxu0 0
  %135 = vmatprep.mubr.bf16.mxu0 0
  %136 = vmatmul.mubr.bf16.gmra.mrb[0].mxu0 %v101
  %v137 = vpop.f32.mrb[0].mxu0
  %v138 = vadd.f32 %v85, %v137
  %v139 = vpop.f32.mrb[0].mxu0
  %v140 = vpop.f32.mrb[0].mxu0
  %v141 = vadd.f32 %v85, %v140
  %v142 = vpop.f32.mrb[0].mxu0
  %143 = vdwg.mxu0
  %v144 = vpack.c.bf16 %v141, %v138
  %v146 = vunpack.c.l.b16 %v144
  %v147 = vunpack.c.h.b16 %v144
  %v148 = vpack.c.b16 %v146, %v146
  %v149 = vpack.c.b16 %v147, %v147
  %vm152 = vcmask 257024
  %153 = vst.msk [vmem:[%s5] sm:$0xf] %vm152, %v148
  %154 = vst.msk [vmem:[%s5 + $0x4] sm:$0xf] %vm152, %v149
  // Predicated region
  $region26: #{byte_decoder_forward.22} parent=0 // pred_check
    _
  $region27: #{byte_decoder_forward.22} parent=0 // pred_check_branch
    %156 = sbr.rel (0) target = $region29
  $region28: #{byte_decoder_forward.22} parent=0 // pred_region
    _
  $region29: #{byte_decoder_forward.22} parent=0 // pred_fallthru
    _
  // Predicated region
  $region30: #{byte_decoder_forward.22} parent=0 // pred_check
    _
  $region31: #{byte_decoder_forward.22} parent=0 // pred_check_branch
    %158 = sbr.rel (0) target = $region33
  $region32: #{byte_decoder_forward.22} parent=0 // pred_region
    _
  $region33: #{byte_decoder_forward.22} parent=0 // pred_fallthru
    _

// kernel: byte_decoder_forward.23
$region0: #{byte_decoder_forward.23}
  #allocation0 [shape = 'u32[]', space=smem, size = 0x4, offset = 0x4, fixed_abs, tag = 'smem constant byte address 0x4 - core index']
  #allocation1 [shape = 'u32[144,128]{1,0:T(1,128)}', space=vmem, size = 0x12000, scoped, tag = 'internal scratch']
  #allocation2 [shape = 'f32[8,64]{1,0:T(8,128)}', space=vmem, size = 0x1000, scoped, tag = 'scratch operand']
  %s0 = inlined_call_operand.vmem [shape: bf16[8,32], index: 0, kind: input, shape index: {}]
  %s1 = inlined_call_operand.vmem [shape: bf16[32,64], index: 1, kind: input, shape index: {}]
  %s2 = inlined_call_operand.vmem [shape: f32[1,64], index: 2, kind: input, shape index: {}]
  %s3 = inlined_call_operand.vmem [shape: bf16[8,64], index: 3, kind: output, shape index: {}]
  %s4 = sld [smem:[#allocation0]]
  $region30: #{byte_decoder_forward.23} parent=0
    _
  %s6 = ssub.s32 1, %s4
  %s7 = scalar_select 0, %s6, %s4
  // Predicated region
  $region2: #{byte_decoder_forward.23} parent=0 // pred_check
    _
  $region3: #{byte_decoder_forward.23} parent=0 // pred_check_branch
    %9 = sbr.rel (0) target = $region5
  $region4: #{byte_decoder_forward.23} parent=0 // pred_region
    _
  $region5: #{byte_decoder_forward.23} parent=0 // pred_fallthru
    _
  // Predicated region
  $region6: #{byte_decoder_forward.23} parent=0 // pred_check
    _
  $region7: #{byte_decoder_forward.23} parent=0 // pred_check_branch
    %11 = sbr.rel (0) target = $region9
  $region8: #{byte_decoder_forward.23} parent=0 // pred_region
    _
  $region9: #{byte_decoder_forward.23} parent=0 // pred_fallthru
    _
  // Predicated region
  $region10: #{byte_decoder_forward.23} parent=0 // pred_check
    _
  $region11: #{byte_decoder_forward.23} parent=0 // pred_check_branch
    %13 = sbr.rel (0) target = $region13
  $region12: #{byte_decoder_forward.23} parent=0 // pred_region
    _
  $region13: #{byte_decoder_forward.23} parent=0 // pred_fallthru
    _
  %p15 = scmp.eq.s32.totalorder 0, 0
  // Predicated region
  $region14: #{byte_decoder_forward.23} parent=0 // pred_check
    %p16 = pneg %p15
  $region15: #{byte_decoder_forward.23} parent=0 // pred_check_branch
    %18 = sbr.rel (%p16) target = $region17
  $region16: #{byte_decoder_forward.23} parent=0 // pred_region
    %vm19 = vcmask 523264
    %20 = vst.msk [vmem:[#allocation2] sm:$0xff] %vm19, 0.0
  $region17: #{byte_decoder_forward.23} parent=0 // pred_fallthru
    _
  %v21 = vld [vmem:[#allocation2] sm:$0xff]
  %v22 = vld [vmem:[%s0] sm:$0xf]
  %v23 = vld [vmem:[%s1] sm:$0xf]
  %v24 = vld [vmem:[%s1 + $0x4] sm:$0xf]
  %v25 = vld [vmem:[%s1 + $0x8] sm:$0xf]
  %v26 = vld [vmem:[%s1 + $0xc] sm:$0xf]
  %v31 = vunpack.c.l.b16 %v23
  %v32 = vunpack.c.l.b16 %v24
  %v33 = vunpack.c.l.b16 %v25
  %v34 = vunpack.c.l.b16 %v26
  %v35 = vpack.c.b16 %v32, %v31
  %v36 = vpack.c.b16 %v34, %v33
  %vm39 = vcmask 261120
  %v41 = vsel %vm39, %v22, 0
  %43 = vmatprep.subr.bf16.mxu0 0
  %44 = vmatpush1.bf16.msra.mxu0 %v35
  %45 = vmatprep.subr.bf16.mxu0 0
  %46 = vmatpush1.bf16.msra.mxu0 %v36
  %47 = vmatprep.subr.bf16.mxu0 0
  %48 = vmatpush1.bf16.msra.mxu0 0
  %49 = vmatprep.subr.bf16.mxu0 0
  %50 = vmatpush1.bf16.msra.mxu0 0
  %51 = vmatprep.subr.bf16.mxu0 0
  %52 = vmatpush1.bf16.msra.mxu0 0
  %53 = vmatprep.subr.bf16.mxu0 0
  %54 = vmatpush1.bf16.msra.mxu0 0
  %55 = vmatprep.subr.bf16.mxu0 0
  %56 = vmatpush1.bf16.msra.mxu0 0
  %57 = vmatprep.subr.bf16.mxu0 0
  %58 = vmatpush1.bf16.msra.mxu0 0
  %59 = vmatprep.subr.bf16.mxu0 0
  %60 = vmatpush1.bf16.msra.mxu0 0
  %61 = vmatprep.subr.bf16.mxu0 0
  %62 = vmatpush1.bf16.msra.mxu0 0
  %63 = vmatprep.subr.bf16.mxu0 0
  %64 = vmatpush1.bf16.msra.mxu0 0
  %65 = vmatprep.subr.bf16.mxu0 0
  %66 = vmatpush1.bf16.msra.mxu0 0
  %67 = vmatprep.subr.bf16.mxu0 0
  %68 = vmatpush1.bf16.msra.mxu0 0
  %69 = vmatprep.subr.bf16.mxu0 0
  %70 = vmatpush1.bf16.msra.mxu0 0
  %71 = vmatprep.subr.bf16.mxu0 0
  %72 = vmatpush1.bf16.msra.mxu0 0
  %73 = vmatprep.subr.bf16.mxu0 0
  %74 = vmatpush1.bf16.msra.mxu0 0
  %75 = vmatprep.mubr.bf16.mxu0 0
  %76 = vmatmul.mubr.bf16.gmra.mrb[0].mxu0 %v41
  %v77 = vpop.f32.mrb[0].mxu0
  %v78 = vadd.f32 0.0, %v77
  %v79 = vpop.f32.mrb[0].mxu0
  %v80 = vpop.f32.mrb[0].mxu0
  %v81 = vpop.f32.mrb[0].mxu0
  %82 = vdwg.mxu0
  %v83 = vadd.f32 %v21, %v78
  %vm84 = vcmask 523264
  %85 = vst.msk [vmem:[#allocation2] sm:$0xff] %vm84, %v83
  // Predicated region
  $region18: #{byte_decoder_forward.23} parent=0 // pred_check
    %p86 = pneg %p15
  $region19: #{byte_decoder_forward.23} parent=0 // pred_check_branch
    %88 = sbr.rel (%p86) target = $region21
  $region20: #{byte_decoder_forward.23} parent=0 // pred_region
    %v89 = vld [vmem:[#allocation2] sm:$0xff]
    %v90 = vld [vmem:[%s2] sm:$0x1]
    %v92 = vlaneseq
    %v93 = vshrl.u32 %v92, 7
    %v94 = vsub.s32 0, %v93
    %v95 = vrot.slane %v90, %v94
    %v97 = vadd.f32 %v89, %v95
    %v98 = vpack.c.bf16 %v97, %v97
    %vm99 = vcmask 519168
    %100 = vst.msk [vmem:[%s3] sm:$0xf] %vm99, %v98
  $region21: #{byte_decoder_forward.23} parent=0 // pred_fallthru
    _
  // Predicated region
  $region22: #{byte_decoder_forward.23} parent=0 // pred_check
    _
  $region23: #{byte_decoder_forward.23} parent=0 // pred_check_branch
    %102 = sbr.rel (0) target = $region25
  $region24: #{byte_decoder_forward.23} parent=0 // pred_region
    _
  $region25: #{byte_decoder_forward.23} parent=0 // pred_fallthru
    _
  // Predicated region
  $region26: #{byte_decoder_forward.23} parent=0 // pred_check
    _
  $region27: #{byte_decoder_forward.23} parent=0 // pred_check_branch
    %104 = sbr.rel (0) target = $region29
  $region28: #{byte_decoder_forward.23} parent=0 // pred_region
    _
  $region29: #{byte_decoder_forward.23} parent=0 // pred_fallthru
    _

// kernel: byte_decoder_forward.26
$region0: #{byte_decoder_forward.26}
  #allocation0 [shape = 'u32[]', space=smem, size = 0x4, offset = 0x4, fixed_abs, tag = 'smem constant byte address 0x4 - core index']
  #allocation1 [shape = 'u32[144,128]{1,0:T(1,128)}', space=vmem, size = 0x12000, scoped, tag = 'internal scratch']
  #allocation2 [shape = 'bf16[16,32]{1,0:T(16,128)(2,1)}', space=vmem, size = 0x1000, scoped, tag = 'scratch operand']
  %s0 = inlined_call_operand.vmem [shape: f32[16,32], index: 0, kind: input, shape index: {}]
  %s1 = inlined_call_operand.vmem [shape: f32[1,32], index: 1, kind: input, shape index: {}]
  %s2 = inlined_call_operand.vmem [shape: f32[1,32], index: 2, kind: input, shape index: {}]
  %s3 = inlined_call_operand.vmem [shape: bf16[32,128], index: 3, kind: input, shape index: {}]
  %s4 = inlined_call_operand.vmem [shape: f32[1,128], index: 4, kind: input, shape index: {}]
  %s5 = inlined_call_operand.vmem [shape: bf16[16,128], index: 5, kind: output, shape index: {}]
  %s6 = sld [smem:[#allocation0]]
  $region34: #{byte_decoder_forward.26} parent=0
    _
  %s8 = ssub.s32 1, %s6
  %s9 = scalar_select 0, %s8, %s6
  // Predicated region
  $region2: #{byte_decoder_forward.26} parent=0 // pred_check
    _
  $region3: #{byte_decoder_forward.26} parent=0 // pred_check_branch
    %11 = sbr.rel (0) target = $region5
  $region4: #{byte_decoder_forward.26} parent=0 // pred_region
    _
  $region5: #{byte_decoder_forward.26} parent=0 // pred_fallthru
    _
  // Predicated region
  $region6: #{byte_decoder_forward.26} parent=0 // pred_check
    _
  $region7: #{byte_decoder_forward.26} parent=0 // pred_check_branch
    %13 = sbr.rel (0) target = $region9
  $region8: #{byte_decoder_forward.26} parent=0 // pred_region
    _
  $region9: #{byte_decoder_forward.26} parent=0 // pred_fallthru
    _
  // Predicated region
  $region10: #{byte_decoder_forward.26} parent=0 // pred_check
    _
  $region11: #{byte_decoder_forward.26} parent=0 // pred_check_branch
    %15 = sbr.rel (0) target = $region13
  $region12: #{byte_decoder_forward.26} parent=0 // pred_region
    _
  $region13: #{byte_decoder_forward.26} parent=0 // pred_fallthru
    _
  // Predicated region
  $region14: #{byte_decoder_forward.26} parent=0 // pred_check
    _
  $region15: #{byte_decoder_forward.26} parent=0 // pred_check_branch
    %17 = sbr.rel (0) target = $region17
  $region16: #{byte_decoder_forward.26} parent=0 // pred_region
    _
  $region17: #{byte_decoder_forward.26} parent=0 // pred_fallthru
    _
  // Predicated region
  $region18: #{byte_decoder_forward.26} parent=0 // pred_check
    _
  $region19: #{byte_decoder_forward.26} parent=0 // pred_check_branch
    %19 = sbr.rel (0) target = $region21
  $region20: #{byte_decoder_forward.26} parent=0 // pred_region
    _
  $region21: #{byte_decoder_forward.26} parent=0 // pred_fallthru
    _
  %p21 = scmp.eq.s32.totalorder 0, 0
  // Predicated region
  $region22: #{byte_decoder_forward.26} parent=0 // pred_check
    %p22 = pneg %p21
  $region23: #{byte_decoder_forward.26} parent=0 // pred_check_branch
    %24 = sbr.rel (%p22) target = $region25
  $region24: #{byte_decoder_forward.26} parent=0 // pred_region
    %v25 = vld [vmem:[%s0] sm:$0xff]
    %v26 = vld [vmem:[%s0 + $0x8] sm:$0xff]
    %vm27 = vcmask 261120
    %v28 = vsel %vm27, %v25, 0.0
    %29 = vadd.xlane.f32.xlu0 %v28
    %v30 = vpop.xlane.xlu0 %29
    %v31 = vsel %vm27, %v26, 0.0
    %32 = vadd.xlane.f32.xlu0 %v31
    %v33 = vpop.xlane.xlu0 %32
    %v34 = vrcp.pop 32.0
    %v35 = vmul.f32 %v30, %v34
    %v36 = vmul.f32 %v33, %v34
    %v37 = vsub.f32 %v25, %v35
    %v38 = vsub.f32 %v26, %v36
    %v39 = vmul.f32 %v37, %v37
    %v40 = vmul.f32 %v38, %v38
    %v41 = vsel %vm27, %v39, 0.0
    %42 = vadd.xlane.f32.xlu0 %v41
    %v43 = vpop.xlane.xlu0 %42
    %v44 = vsel %vm27, %v40, 0.0
    %45 = vadd.xlane.f32.xlu0 %v44
    %v46 = vpop.xlane.xlu0 %45
    %v47 = vmul.f32 %v43, %v34
    %v48 = vmul.f32 %v46, %v34
    %v49 = vadd.f32 %v47, 1e-05
    %v50 = vadd.f32 %v48, 1e-05
    %v51 = vrsqrt.pop %v49
    %v52 = vrsqrt.pop %v50
    %v53 = vmul.f32 %v37, %v51
    %v54 = vmul.f32 %v38, %v52
    %v55 = vld [vmem:[%s1] sm:$0x1]
    %v57 = vlaneseq
    %v58 = vshrl.u32 %v57, 7
    %v59 = vsub.s32 0, %v58
    %v60 = vrot.slane %v55, %v59
    %v62 = vmul.f32 %v53, %v60
    %v63 = vmul.f32 %v54, %v60
    %v64 = vld [vmem:[%s2] sm:$0x1]
    %v66 = vlaneseq
    %v67 = vshrl.u32 %v66, 7
    %v68 = vsub.s32 0, %v67
    %v69 = vrot.slane %v64, %v68
    %v71 = vadd.f32 %v62, %v69
    %v72 = vadd.f32 %v63, %v69
    %v73 = vpack.c.bf16 %v72, %v71
    %74 = vst.msk [vmem:[#allocation2] sm:$0xff] %vm27, %v73
  $region25: #{byte_decoder_forward.26} parent=0 // pred_fallthru
    _
  %v75 = vld [vmem:[#allocation2] sm:$0xff]
  %v76 = vld [vmem:[%s3] sm:$0xf]
  %v77 = vld [vmem:[%s3 + $0x4] sm:$0xf]
  %v78 = vld [vmem:[%s3 + $0x8] sm:$0xf]
  %v79 = vld [vmem:[%s3 + $0xc] sm:$0xf]
  %v80 = vld [vmem:[%s4] sm:$0x1]
  %v82 = vlaneseq
  %v83 = vshrl.u32 %v82, 7
  %v84 = vsub.s32 0, %v83
  %v85 = vrot.slane %v80, %v84
  %v91 = vunpack.c.l.b16 %v76
  %v92 = vunpack.c.l.b16 %v77
  %v93 = vunpack.c.l.b16 %v78
  %v94 = vunpack.c.l.b16 %v79
  %v95 = vpack.c.b16 %v92, %v91
  %v96 = vpack.c.b16 %v94, %v93
  %vm99 = vcmask 261120
  %v101 = vsel %vm99, %v75, 0
  %103 = vmatprep.subr.bf16.mxu0 0
  %104 = vmatpush1.bf16.msra.mxu0 %v95
  %105 = vmatprep.subr.bf16.mxu0 0
  %106 = vmatpush1.bf16.msra.mxu0 %v96
  %107 = vmatprep.subr.bf16.mxu0 0
  %108 = vmatpush1.bf16.msra.mxu0 0
  %109 = vmatprep.subr.bf16.mxu0 0
  %110 = vmatpush1.bf16.msra.mxu0 0
  %111 = vmatprep.subr.bf16.mxu0 0
  %112 = vmatpush1.bf16.msra.mxu0 0
  %113 = vmatprep.subr.bf16.mxu0 0
  %114 = vmatpush1.bf16.msra.mxu0 0
  %115 = vmatprep.subr.bf16.mxu0 0
  %116 = vmatpush1.bf16.msra.mxu0 0
  %117 = vmatprep.subr.bf16.mxu0 0
  %118 = vmatpush1.bf16.msra.mxu0 0
  %119 = vmatprep.subr.bf16.mxu0 0
  %120 = vmatpush1.bf16.msra.mxu0 0
  %121 = vmatprep.subr.bf16.mxu0 0
  %122 = vmatpush1.bf16.msra.mxu0 0
  %123 = vmatprep.subr.bf16.mxu0 0
  %124 = vmatpush1.bf16.msra.mxu0 0
  %125 = vmatprep.subr.bf16.mxu0 0
  %126 = vmatpush1.bf16.msra.mxu0 0
  %127 = vmatprep.subr.bf16.mxu0 0
  %128 = vmatpush1.bf16.msra.mxu0 0
  %129 = vmatprep.subr.bf16.mxu0 0
  %130 = vmatpush1.bf16.msra.mxu0 0
  %131 = vmatprep.subr.bf16.mxu0 0
  %132 = vmatpush1.bf16.msra.mxu0 0
  %133 = vmatprep.subr.bf16.mxu0 0
  %134 = vmatpush1.bf16.msra.mxu0 0
  %135 = vmatprep.mubr.bf16.mxu0 0
  %136 = vmatmul.mubr.bf16.gmra.mrb[0].mxu0 %v101
  %v137 = vpop.f32.mrb[0].mxu0
  %v138 = vadd.f32 %v85, %v137
  %v139 = vpop.f32.mrb[0].mxu0
  %v140 = vpop.f32.mrb[0].mxu0
  %v141 = vadd.f32 %v85, %v140
  %v142 = vpop.f32.mrb[0].mxu0
  %143 = vdwg.mxu0
  %v144 = vmul.f32 %v138, %v138
  %v145 = vmul.f32 %v141, %v141
  %v146 = vmul.f32 %v138, %v144
  %v147 = vmul.f32 %v141, %v145
  %v148 = vmul.f32 %v146, 0.044715
  %v149 = vmul.f32 %v147, 0.044715
  %v150 = vadd.f32 %v138, %v148
  %v151 = vadd.f32 %v141, %v149
  %v152 = vmul.f32 %v150, 0.7978846
  %v153 = vmul.f32 %v151, 0.7978846
  %v154 = vtanh.pop %v152
  %v155 = vtanh.pop %v153
  %v156 = vadd.f32 %v154, 1.0
  %v157 = vadd.f32 %v155, 1.0
  %v158 = vmul.f32 %v156, 0.5
  %v159 = vmul.f32 %v157, 0.5
  %v160 = vmul.f32 %v138, %v158
  %v161 = vmul.f32 %v141, %v159
  %v162 = vpack.c.bf16 %v161, %v160
  %v164 = vunpack.c.l.b16 %v162
  %v165 = vunpack.c.h.b16 %v162
  %v166 = vpack.c.b16 %v164, %v164
  %v167 = vpack.c.b16 %v165, %v165
  %170 = vst [vmem:[%s5] sm:$0xf] %v166
  %171 = vst [vmem:[%s5 + $0x4] sm:$0xf] %v167
  // Predicated region
  $region26: #{byte_decoder_forward.26} parent=0 // pred_check
    _
  $region27: #{byte_decoder_forward.26} parent=0 // pred_check_branch
    %173 = sbr.rel (0) target = $region29
  $region28: #{byte_decoder_forward.26} parent=0 // pred_region
    _
  $region29: #{byte_decoder_forward.26} parent=0 // pred_fallthru
    _
  // Predicated region
  $region30: #{byte_decoder_forward.26} parent=0 // pred_check
    _
  $region31: #{byte_decoder_forward.26} parent=0 // pred_check_branch
    %175 = sbr.rel (0) target = $region33
  $region32: #{byte_decoder_forward.26} parent=0 // pred_region
    _
  $region33: #{byte_decoder_forward.26} parent=0 // pred_fallthru
    _

// kernel: byte_decoder_forward.24
$region0: #{byte_decoder_forward.24}
  #allocation0 [shape = 'u32[]', space=smem, size = 0x4, offset = 0x4, fixed_abs, tag = 'smem constant byte address 0x4 - core index']
  #allocation1 [shape = 'u32[144,128]{1,0:T(1,128)}', space=vmem, size = 0x12000, scoped, tag = 'internal scratch']
  %s0 = inlined_call_operand.vmem [shape: s32[2,8,1], index: 0, kind: input, shape index: {}]
  %s1 = inlined_call_operand.vmem [shape: bf16[2,8,32], index: 1, kind: input, shape index: {}]
  %s2 = inlined_call_operand.vmem [shape: bf16[2,4,64], index: 2, kind: input, shape index: {}]
  %s3 = inlined_call_operand.vmem [shape: bf16[2,8,32], index: 3, kind: output, shape index: {}]
  %s4 = sld [smem:[#allocation0]]
  $region45: #{byte_decoder_forward.24} parent=0
    _
  %s6 = ssub.s32 1, %s4
  %s7 = scalar_select 0, %s6, %s4
  loop: start=0, step=1, limit=4
  $region2: #{byte_decoder_forward.24} parent=0 // loop_pre_header
    _
  $region3: #{byte_decoder_forward.24} parent=0 // loop_header
    %s9 = sphi 0, %s13
    %p10 = scmp.ge.s32.totalorder %s9, 4
    %s19 = sphi 0, %s21
    %s22 = sphi 0, %s19
    %s23 = sphi 0, %s22
    %s39 = sphi 0, %s23
    %s45 = sphi 0, %s47
    %s48 = sphi 0, %s45
    %s49 = sphi 0, %s48
    %s65 = sphi 0, %s49
    %s71 = sphi 0, %s73
    %s74 = sphi 0, %s71
    %s75 = sphi 0, %s74
    %s91 = sphi 0, %s75
    %s97 = sphi 0, %s99
    %s100 = sphi 0, %s97
    %s101 = sphi 0, %s100
    %s117 = sphi 0, %s101
  $region4: #{byte_decoder_forward.24} parent=0 // loop_header_branch
    %12 = sbr.rel (%p10) target = $region8
  $region5: #{byte_decoder_forward.24} parent=0 // loop_body
    %s14 = ssub.s32 %s9, 1
    %s15 = ssub.s32 %s9, 2
    %s16 = sadd.s32 %s9, 1
    %s17 = ssub.s32 %s9, %s16
    %p18 = scmp.eq.s32.totalorder %s17, 0
    %s20 = sadd.s32 %s19, 1
    %s21 = scalar_select %p18, %s19, %s20
    %p24 = pneg %p18
    %p25 = scmp.eq.s32.totalorder %s9, 1
    %p26 = por %p24, %p25
    %p27 = scmp.ne.s32.totalorder %s19, %s22
    %p28 = scmp.eq.s32.totalorder %s9, 0
    %p29 = por %p27, %p28
    %p30 = scmp.ne.s32.totalorder %s19, %s22
    %p31 = scmp.eq.s32.totalorder %s14, 1
    %p32 = por %p30, %p31
    %p33 = scmp.ne.s32.totalorder %s22, %s23
    %p34 = scmp.eq.s32.totalorder %s14, 0
    %p35 = por %p33, %p34
    %p36 = scmp.ne.s32.totalorder %s22, %s23
    %p37 = scmp.eq.s32.totalorder %s15, 1
    %p38 = por %p36, %p37
    %p40 = scmp.ne.s32.totalorder %s23, %s39
    %p41 = scmp.eq.s32.totalorder %s15, 0
    %p42 = por %p40, %p41
    %s43 = ssub.s32 %s9, %s16
    %p44 = scmp.eq.s32.totalorder %s43, 0
    %s46 = sadd.s32 %s45, 1
    %s47 = scalar_select %p44, %s45, %s46
    %p50 = pneg %p44
    %p51 = scmp.eq.s32.totalorder %s9, 1
    %p52 = por %p50, %p51
    %p53 = scmp.ne.s32.totalorder %s45, %s48
    %p54 = scmp.eq.s32.totalorder %s9, 0
    %p55 = por %p53, %p54
    %p56 = scmp.ne.s32.totalorder %s45, %s48
    %p57 = scmp.eq.s32.totalorder %s14, 1
    %p58 = por %p56, %p57
    %p59 = scmp.ne.s32.totalorder %s48, %s49
    %p60 = scmp.eq.s32.totalorder %s14, 0
    %p61 = por %p59, %p60
    %p62 = scmp.ne.s32.totalorder %s48, %s49
    %p63 = scmp.eq.s32.totalorder %s15, 1
    %p64 = por %p62, %p63
    %p66 = scmp.ne.s32.totalorder %s49, %s65
    %p67 = scmp.eq.s32.totalorder %s15, 0
    %p68 = por %p66, %p67
    %s69 = ssub.s32 %s9, %s16
    %p70 = scmp.eq.s32.totalorder %s69, 0
    %s72 = sadd.s32 %s71, 1
    %s73 = scalar_select %p70, %s71, %s72
    %p76 = pneg %p70
    %p77 = scmp.eq.s32.totalorder %s9, 1
    %p78 = por %p76, %p77
    %p79 = scmp.ne.s32.totalorder %s71, %s74
    %p80 = scmp.eq.s32.totalorder %s9, 0
    %p81 = por %p79, %p80
    %p82 = scmp.ne.s32.totalorder %s71, %s74
    %p83 = scmp.eq.s32.totalorder %s14, 1
    %p84 = por %p82, %p83
    %p85 = scmp.ne.s32.totalorder %s74, %s75
    %p86 = scmp.eq.s32.totalorder %s14, 0
    %p87 = por %p85, %p86
    %p88 = scmp.ne.s32.totalorder %s74, %s75
    %p89 = scmp.eq.s32.totalorder %s15, 1
    %p90 = por %p88, %p89
    %p92 = scmp.ne.s32.totalorder %s75, %s91
    %p93 = scmp.eq.s32.totalorder %s15, 0
    %p94 = por %p92, %p93
    %s95 = ssub.s32 %s9, %s16
    %p96 = scmp.eq.s32.totalorder %s95, 0
    %s98 = sadd.s32 %s97, 1
    %s99 = scalar_select %p96, %s97, %s98
    %p102 = pneg %p96
    %p103 = scmp.eq.s32.totalorder %s9, 1
    %p104 = por %p102, %p103
    %p105 = scmp.ne.s32.totalorder %s97, %s100
    %p106 = scmp.eq.s32.totalorder %s9, 0
    %p107 = por %p105, %p106
    %p108 = scmp.ne.s32.totalorder %s97, %s100
    %p109 = scmp.eq.s32.totalorder %s14, 1
    %p110 = por %p108, %p109
    %p111 = scmp.ne.s32.totalorder %s100, %s101
    %p112 = scmp.eq.s32.totalorder %s14, 0
    %p113 = por %p111, %p112
    %p114 = scmp.ne.s32.totalorder %s100, %s101
    %p115 = scmp.eq.s32.totalorder %s15, 1
    %p116 = por %p114, %p115
    %p118 = scmp.ne.s32.totalorder %s101, %s117
    %p119 = scmp.eq.s32.totalorder %s15, 0
    %p120 = por %p118, %p119
    %p121 = scmp.le.s32.totalorder 1, %s9
    %p122 = scmp.lt.s32.totalorder %s9, 3
    %p123 = pnand %p121, %p122
    %p124 = pneg %p123
    // Predicated region
    $region9: #{byte_decoder_forward.24} parent=5 // pred_check
      _
    $region10: #{byte_decoder_forward.24} parent=5 // pred_check_branch
      %126 = sbr.rel (%p123) target = $region12
    $region11: #{byte_decoder_forward.24} parent=5 // pred_region
      %s127 = ssub.s32 %s9, 1
    $region12: #{byte_decoder_forward.24} parent=5 // pred_fallthru
      _
    %p128 = scmp.lt.s32.totalorder %s9, 2
    // Predicated region
    $region13: #{byte_decoder_forward.24} parent=5 // pred_check
      %p129 = pneg %p128
    $region14: #{byte_decoder_forward.24} parent=5 // pred_check_branch
      %131 = sbr.rel (%p129) target = $region16
    $region15: #{byte_decoder_forward.24} parent=5 // pred_region
      // Predicated region
      $region17: #{byte_decoder_forward.24} parent=15 // pred_check
        %p132 = pneg %p29
      $region18: #{byte_decoder_forward.24} parent=15 // pred_check_branch
        %134 = sbr.rel (%p132) target = $region20
      $region19: #{byte_decoder_forward.24} parent=15 // pred_region
        %p135 = scmp.lt.s32.totalorder %s9, 1
        %s136 = scalar_select %p135, %s9, 1
        %s137 = smul.addr %s136, 8
        %s138 = scalar_lea.vmem %s0, %s137
      $region20: #{byte_decoder_forward.24} parent=15 // pred_fallthru
        _
      // Predicated region
      $region21: #{byte_decoder_forward.24} parent=15 // pred_check
        %p139 = pneg %p55
      $region22: #{byte_decoder_forward.24} parent=15 // pred_check_branch
        %141 = sbr.rel (%p139) target = $region24
      $region23: #{byte_decoder_forward.24} parent=15 // pred_region
        %p142 = scmp.lt.s32.totalorder %s9, 1
        %s143 = scalar_select %p142, %s9, 1
        %s144 = smul.addr %s143, 4
        %s145 = scalar_lea.vmem %s1, %s144
      $region24: #{byte_decoder_forward.24} parent=15 // pred_fallthru
        _
      // Predicated region
      $region25: #{byte_decoder_forward.24} parent=15 // pred_check
        %p146 = pneg %p81
      $region26: #{byte_decoder_forward.24} parent=15 // pred_check_branch
        %148 = sbr.rel (%p146) target = $region28
      $region27: #{byte_decoder_forward.24} parent=15 // pred_region
        %p149 = scmp.lt.s32.totalorder %s9, 1
        %s150 = scalar_select %p149, %s9, 1
        %s151 = smul.addr %s150, 2
        %s152 = scalar_lea.vmem %s2, %s151
      $region28: #{byte_decoder_forward.24} parent=15 // pred_fallthru
        _
    $region16: #{byte_decoder_forward.24} parent=5 // pred_fallthru
      _
    %p153 = scmp.le.s32.totalorder 1, %s9
    %p154 = scmp.lt.s32.totalorder %s9, 3
    %p155 = pnand %p153, %p154
    %p156 = pneg %p155
    // Predicated region
    $region29: #{byte_decoder_forward.24} parent=5 // pred_check
      _
    $region30: #{byte_decoder_forward.24} parent=5 // pred_check_branch
      %158 = sbr.rel (%p155) target = $region32
    $region31: #{byte_decoder_forward.24} parent=5 // pred_region
      %s159 = ssub.s32 %s9, 1
      %p160 = scmp.lt.s32.totalorder %s14, 1
      %s161 = scalar_select %p160, %s14, 1
      %s162 = smul.addr %s161, 8
      %s163 = scalar_lea.vmem %s0, %s162
      %p164 = pneg %p35
      %p165 = pneg %p32
      %p166 = scmp.lt.s32.totalorder %s14, 1
      %s167 = scalar_select %p166, %s14, 1
      %s168 = smul.addr %s167, 4
      %s169 = scalar_lea.vmem %s1, %s168
      %p170 = pneg %p61
      %p171 = pneg %p58
      %p172 = scmp.lt.s32.totalorder %s14, 1
      %s173 = scalar_select %p172, %s14, 1
      %s174 = smul.addr %s173, 2
      %s175 = scalar_lea.vmem %s2, %s174
      %p176 = pneg %p87
      %p177 = pneg %p84
      %p178 = pneg %p113
      %p179 = pneg %p110
      %p180 = scmp.lt.s32.totalorder %s14, 1
      %s181 = scalar_select %p180, %s14, 1
      %s182 = smul.addr %s181, 4
      %s183 = scalar_lea.vmem %s3, %s182
      %p184 = scmp.lt.s32.totalorder %s14, 1
      %s185 = scalar_select %p184, %s14, 1
      %s186 = smul.addr %s185, 8
      %s187 = scalar_lea.vmem %s0, %s186
      %p188 = scmp.lt.s32.totalorder %s14, 1
      %s189 = scalar_select %p188, %s14, 1
      %s190 = smul.addr %s189, 4
      %s191 = scalar_lea.vmem %s1, %s190
      %p192 = scmp.lt.s32.totalorder %s14, 1
      %s193 = scalar_select %p192, %s14, 1
      %s194 = smul.addr %s193, 2
      %s195 = scalar_lea.vmem %s2, %s194
      %p196 = scmp.lt.s32.totalorder %s14, 1
      %s197 = scalar_select %p196, %s14, 1
      %s198 = smul.addr %s197, 4
      %s199 = scalar_lea.vmem %s3, %s198
      %v201 = vld [vmem:[%s191] sm:$0xf]
      %v202 = vld [vmem:[%s195] sm:$0x3]
      %v203 = vld [vmem:[%s187] sm:$0xff]
      %v204 = vlaneseq
      %v205 = vand.u32 %v204, 127
      %206 = vset.pattern.permute.xlu0 0
      %207 = vperm.xlu0 %206, %v203
      %v208 = vpop.permute.xlu0 %207
      %vm209 = vcmp.gt.s32.totalorder %v205, %v208
      %v210 = vunpack.c.l.bf16 %v201
      %v211 = vmul.f32 %v210, 0.35355338
      %v212 = vpack.c.bf16 %v211, %v211
      %vm213 = vcmask 64512
      %v215 = vsel %vm213, %v212, 0
      %v218 = vsel %vm213, %v202, 0
      %220 = vmatprep.subr.bf16.mxu0 0
      %221 = vmatpush1.bf16.xpose.msra.mxu0 %v218
      %222 = vmatprep.subr.bf16.mxu0 0
      %223 = vmatpush1.bf16.xpose.msra.mxu0 0
      %224 = vmatprep.subr.bf16.mxu0 0
      %225 = vmatpush1.bf16.xpose.msra.mxu0 0
      %226 = vmatprep.subr.bf16.mxu0 0
      %227 = vmatpush1.bf16.xpose.msra.mxu0 0
      %228 = vmatprep.subr.bf16.mxu0 0
      %229 = vmatpush1.bf16.xpose.msra.mxu0 0
      %230 = vmatprep.subr.bf16.mxu0 0
      %231 = vmatpush1.bf16.xpose.msra.mxu0 0
      %232 = vmatprep.subr.bf16.mxu0 0
      %233 = vmatpush1.bf16.xpose.msra.mxu0 0
      %234 = vmatprep.subr.bf16.mxu0 0
      %235 = vmatpush1.bf16.xpose.msra.mxu0 0
      %236 = vmatprep.subr.bf16.mxu0 0
      %237 = vmatpush1.bf16.xpose.msra.mxu0 0
      %238 = vmatprep.subr.bf16.mxu0 0
      %239 = vmatpush1.bf16.xpose.msra.mxu0 0
      %240 = vmatprep.subr.bf16.mxu0 0
      %241 = vmatpush1.bf16.xpose.msra.mxu0 0
      %242 = vmatprep.subr.bf16.mxu0 0
      %243 = vmatpush1.bf16.xpose.msra.mxu0 0
      %244 = vmatprep.subr.bf16.mxu0 0
      %245 = vmatpush1.bf16.xpose.msra.mxu0 0
      %246 = vmatprep.subr.bf16.mxu0 0
      %247 = vmatpush1.bf16.xpose.msra.mxu0 0
      %248 = vmatprep.subr.bf16.mxu0 0
      %249 = vmatpush1.bf16.xpose.msra.mxu0 0
      %250 = vmatprep.subr.bf16.mxu0 0
      %251 = vmatpush1.bf16.xpose.msra.mxu0 0
      %252 = vmatprep.mubr.bf16.mxu0 0
      %253 = vmatmul.mubr.bf16.gmra.mrb[0].mxu0 %v215
      %v254 = vpop.f32.mrb[0].mxu0
      %v255 = vadd.f32 0.0, %v254
      %v256 = vpop.f32.mrb[0].mxu0
      %v257 = vpop.f32.mrb[0].mxu0
      %v258 = vpop.f32.mrb[0].mxu0
      %259 = vdwg.mxu0
      %v260 = vsel %vm209, -1e+30, %v255
      %vm261 = vcmask 31744
      %v262 = vsel %vm261, %v260, -inf
      %263 = vmax.xlane.f32.xlu0 %v262
      %v264 = vpop.xlane.xlu0 %263
      %v265 = vsub.f32 %v260, %v264
      %v266 = vmul.f32 %v265, 1.442695
      %v267 = vpow.pop %v266
      %v268 = vsel %vm261, %v267, 0.0
      %269 = vadd.xlane.f32.xlu0 %v268
      %v270 = vpop.xlane.xlu0 %269
      %v271 = vrcp.pop %v270
      %v272 = vmul.f32 %v267, %v271
      %v273 = vpack.c.bf16 %v272, %v272
      %v276 = vunpack.c.l.s4 1983009808
      %v277 = vunpack.c.0.s8 %v276
      %v278 = vlaneseq
      %v279 = vshrl.u32 %v278, 7
      %v280 = vsub.s32 %v277, %v279
      %v281 = vrot.slane %v202, %v280
      %282 = vrot.lane.b32.xlu0 %v281, 96
      %v283 = vpop.permute.xlu0 %282
      %v285 = vsel %vm261, %v273, 0
      %vm287 = vcmask 1041408
      %v289 = vsel %vm287, %v283, 0
      %291 = vmatprep.subr.bf16.mxu0 0
      %292 = vmatpush1.bf16.msra.mxu0 %v289
      %293 = vmatprep.subr.bf16.mxu0 0
      %294 = vmatpush1.bf16.msra.mxu0 0
      %295 = vmatprep.subr.bf16.mxu0 0
      %296 = vmatpush1.bf16.msra.mxu0 0
      %297 = vmatprep.subr.bf16.mxu0 0
      %298 = vmatpush1.bf16.msra.mxu0 0
      %299 = vmatprep.subr.bf16.mxu0 0
      %300 = vmatpush1.bf16.msra.mxu0 0
      %301 = vmatprep.subr.bf16.mxu0 0
      %302 = vmatpush1.bf16.msra.mxu0 0
      %303 = vmatprep.subr.bf16.mxu0 0
      %304 = vmatpush1.bf16.msra.mxu0 0
      %305 = vmatprep.subr.bf16.mxu0 0
      %306 = vmatpush1.bf16.msra.mxu0 0
      %307 = vmatprep.subr.bf16.mxu0 0
      %308 = vmatpush1.bf16.msra.mxu0 0
      %309 = vmatprep.subr.bf16.mxu0 0
      %310 = vmatpush1.bf16.msra.mxu0 0
      %311 = vmatprep.subr.bf16.mxu0 0
      %312 = vmatpush1.bf16.msra.mxu0 0
      %313 = vmatprep.subr.bf16.mxu0 0
      %314 = vmatpush1.bf16.msra.mxu0 0
      %315 = vmatprep.subr.bf16.mxu0 0
      %316 = vmatpush1.bf16.msra.mxu0 0
      %317 = vmatprep.subr.bf16.mxu0 0
      %318 = vmatpush1.bf16.msra.mxu0 0
      %319 = vmatprep.subr.bf16.mxu0 0
      %320 = vmatpush1.bf16.msra.mxu0 0
      %321 = vmatprep.subr.bf16.mxu0 0
      %322 = vmatpush1.bf16.msra.mxu0 0
      %323 = vmatprep.mubr.bf16.mxu0 0
      %324 = vmatmul.mubr.bf16.gmra.mrb[0].mxu0 %v285
      %v325 = vpop.f32.mrb[0].mxu0
      %v326 = vadd.f32 0.0, %v325
      %v327 = vpop.f32.mrb[0].mxu0
      %v328 = vpop.f32.mrb[0].mxu0
      %v329 = vpop.f32.mrb[0].mxu0
      %330 = vdwg.mxu0
      %332 = vrot.lane.b32.xlu0 %v212, 120
      %v333 = vpop.permute.xlu0 %332
      %334 = vrot.lane.b32.xlu0 %v281, 120
      %v335 = vpop.permute.xlu0 %334
      %v337 = vsel %vm213, %v333, 0
      %v340 = vsel %vm213, %v335, 0
      %342 = vmatprep.subr.bf16.mxu0 0
      %343 = vmatpush1.bf16.xpose.msra.mxu0 %v340
      %344 = vmatprep.subr.bf16.mxu0 0
      %345 = vmatpush1.bf16.xpose.msra.mxu0 0
      %346 = vmatprep.subr.bf16.mxu0 0
      %347 = vmatpush1.bf16.xpose.msra.mxu0 0
      %348 = vmatprep.subr.bf16.mxu0 0
      %349 = vmatpush1.bf16.xpose.msra.mxu0 0
      %350 = vmatprep.subr.bf16.mxu0 0
      %351 = vmatpush1.bf16.xpose.msra.mxu0 0
      %352 = vmatprep.subr.bf16.mxu0 0
      %353 = vmatpush1.bf16.xpose.msra.mxu0 0
      %354 = vmatprep.subr.bf16.mxu0 0
      %355 = vmatpush1.bf16.xpose.msra.mxu0 0
      %356 = vmatprep.subr.bf16.mxu0 0
      %357 = vmatpush1.bf16.xpose.msra.mxu0 0
      %358 = vmatprep.subr.bf16.mxu0 0
      %359 = vmatpush1.bf16.xpose.msra.mxu0 0
      %360 = vmatprep.subr.bf16.mxu0 0
      %361 = vmatpush1.bf16.xpose.msra.mxu0 0
      %362 = vmatprep.subr.bf16.mxu0 0
      %363 = vmatpush1.bf16.xpose.msra.mxu0 0
      %364 = vmatprep.subr.bf16.mxu0 0
      %365 = vmatpush1.bf16.xpose.msra.mxu0 0
      %366 = vmatprep.subr.bf16.mxu0 0
      %367 = vmatpush1.bf16.xpose.msra.mxu0 0
      %368 = vmatprep.subr.bf16.mxu0 0
      %369 = vmatpush1.bf16.xpose.msra.mxu0 0
      %370 = vmatprep.subr.bf16.mxu0 0
      %371 = vmatpush1.bf16.xpose.msra.mxu0 0
      %372 = vmatprep.subr.bf16.mxu0 0
      %373 = vmatpush1.bf16.xpose.msra.mxu0 0
      %374 = vmatprep.mubr.bf16.mxu0 0
      %375 = vmatmul.mubr.bf16.gmra.mrb[0].mxu0 %v337
      %v376 = vpop.f32.mrb[0].mxu0
      %v377 = vadd.f32 0.0, %v376
      %v378 = vpop.f32.mrb[0].mxu0
      %v379 = vpop.f32.mrb[0].mxu0
      %v380 = vpop.f32.mrb[0].mxu0
      %381 = vdwg.mxu0
      %v382 = vsel %vm209, -1e+30, %v377
      %v383 = vsel %vm261, %v382, -inf
      %384 = vmax.xlane.f32.xlu0 %v383
      %v385 = vpop.xlane.xlu0 %384
      %v386 = vsub.f32 %v382, %v385
      %v387 = vmul.f32 %v386, 1.442695
      %v388 = vpow.pop %v387
      %v389 = vsel %vm261, %v388, 0.0
      %390 = vadd.xlane.f32.xlu0 %v389
      %v391 = vpop.xlane.xlu0 %390
      %v392 = vrcp.pop %v391
      %v393 = vmul.f32 %v388, %v392
      %v394 = vpack.c.bf16 %v393, %v393
      %395 = vrot.lane.b32.xlu0 %v281, 88
      %v396 = vpop.permute.xlu0 %395
      %v398 = vsel %vm261, %v394, 0
      %v401 = vsel %vm287, %v396, 0
      %403 = vmatprep.subr.bf16.mxu0 0
      %404 = vmatpush1.bf16.msra.mxu0 %v401
      %405 = vmatprep.subr.bf16.mxu0 0
      %406 = vmatpush1.bf16.msra.mxu0 0
      %407 = vmatprep.subr.bf16.mxu0 0
      %408 = vmatpush1.bf16.msra.mxu0 0
      %409 = vmatprep.subr.bf16.mxu0 0
      %410 = vmatpush1.bf16.msra.mxu0 0
      %411 = vmatprep.subr.bf16.mxu0 0
      %412 = vmatpush1.bf16.msra.mxu0 0
      %413 = vmatprep.subr.bf16.mxu0 0
      %414 = vmatpush1.bf16.msra.mxu0 0
      %415 = vmatprep.subr.bf16.mxu0 0
      %416 = vmatpush1.bf16.msra.mxu0 0
      %417 = vmatprep.subr.bf16.mxu0 0
      %418 = vmatpush1.bf16.msra.mxu0 0
      %419 = vmatprep.subr.bf16.mxu0 0
      %420 = vmatpush1.bf16.msra.mxu0 0
      %421 = vmatprep.subr.bf16.mxu0 0
      %422 = vmatpush1.bf16.msra.mxu0 0
      %423 = vmatprep.subr.bf16.mxu0 0
      %424 = vmatpush1.bf16.msra.mxu0 0
      %425 = vmatprep.subr.bf16.mxu0 0
      %426 = vmatpush1.bf16.msra.mxu0 0
      %427 = vmatprep.subr.bf16.mxu0 0
      %428 = vmatpush1.bf16.msra.mxu0 0
      %429 = vmatprep.subr.bf16.mxu0 0
      %430 = vmatpush1.bf16.msra.mxu0 0
      %431 = vmatprep.subr.bf16.mxu0 0
      %432 = vmatpush1.bf16.msra.mxu0 0
      %433 = vmatprep.subr.bf16.mxu0 0
      %434 = vmatpush1.bf16.msra.mxu0 0
      %435 = vmatprep.mubr.bf16.mxu0 0
      %436 = vmatmul.mubr.bf16.gmra.mrb[0].mxu0 %v398
      %v437 = vpop.f32.mrb[0].mxu0
      %v438 = vadd.f32 0.0, %v437
      %v439 = vpop.f32.mrb[0].mxu0
      %v440 = vpop.f32.mrb[0].mxu0
      %v441 = vpop.f32.mrb[0].mxu0
      %442 = vdwg.mxu0
      %443 = vrot.lane.b32.xlu0 %v212, 112
      %v444 = vpop.permute.xlu0 %443
      %445 = vrot.lane.b32.xlu0 %v281, 112
      %v446 = vpop.permute.xlu0 %445
      %v448 = vsel %vm213, %v444, 0
      %v451 = vsel %vm213, %v446, 0
      %453 = vmatprep.subr.bf16.mxu0 0
      %454 = vmatpush1.bf16.xpose.msra.mxu0 %v451
      %455 = vmatprep.subr.bf16.mxu0 0
      %456 = vmatpush1.bf16.xpose.msra.mxu0 0
      %457 = vmatprep.subr.bf16.mxu0 0
      %458 = vmatpush1.bf16.xpose.msra.mxu0 0
      %459 = vmatprep.subr.bf16.mxu0 0
      %460 = vmatpush1.bf16.xpose.msra.mxu0 0
      %461 = vmatprep.subr.bf16.mxu0 0
      %462 = vmatpush1.bf16.xpose.msra.mxu0 0
      %463 = vmatprep.subr.bf16.mxu0 0
      %464 = vmatpush1.bf16.xpose.msra.mxu0 0
      %465 = vmatprep.subr.bf16.mxu0 0
      %466 = vmatpush1.bf16.xpose.msra.mxu0 0
      %467 = vmatprep.subr.bf16.mxu0 0
      %468 = vmatpush1.bf16.xpose.msra.mxu0 0
      %469 = vmatprep.subr.bf16.mxu0 0
      %470 = vmatpush1.bf16.xpose.msra.mxu0 0
      %471 = vmatprep.subr.bf16.mxu0 0
      %472 = vmatpush1.bf16.xpose.msra.mxu0 0
      %473 = vmatprep.subr.bf16.mxu0 0
      %474 = vmatpush1.bf16.xpose.msra.mxu0 0
      %475 = vmatprep.subr.bf16.mxu0 0
      %476 = vmatpush1.bf16.xpose.msra.mxu0 0
      %477 = vmatprep.subr.bf16.mxu0 0
      %478 = vmatpush1.bf16.xpose.msra.mxu0 0
      %479 = vmatprep.subr.bf16.mxu0 0
      %480 = vmatpush1.bf16.xpose.msra.mxu0 0
      %481 = vmatprep.subr.bf16.mxu0 0
      %482 = vmatpush1.bf16.xpose.msra.mxu0 0
      %483 = vmatprep.subr.bf16.mxu0 0
      %484 = vmatpush1.bf16.xpose.msra.mxu0 0
      %485 = vmatprep.mubr.bf16.mxu0 0
      %486 = vmatmul.mubr.bf16.gmra.mrb[0].mxu0 %v448
      %v487 = vpop.f32.mrb[0].mxu0
      %v488 = vadd.f32 0.0, %v487
      %v489 = vpop.f32.mrb[0].mxu0
      %v490 = vpop.f32.mrb[0].mxu0
      %v491 = vpop.f32.mrb[0].mxu0
      %492 = vdwg.mxu0
      %v493 = vsel %vm209, -1e+30, %v488
      %v494 = vsel %vm261, %v493, -inf
      %495 = vmax.xlane.f32.xlu0 %v494
      %v496 = vpop.xlane.xlu0 %495
      %v497 = vsub.f32 %v493, %v496
      %v498 = vmul.f32 %v497, 1.442695
      %v499 = vpow.pop %v498
      %v500 = vsel %vm261, %v499, 0.0
      %501 = vadd.xlane.f32.xlu0 %v500
      %v502 = vpop.xlane.xlu0 %501
      %v503 = vrcp.pop %v502
      %v504 = vmul.f32 %v499, %v503
      %v505 = vpack.c.bf16 %v504, %v504
      %506 = vrot.lane.b32.xlu0 %v281, 80
      %v507 = vpop.permute.xlu0 %506
      %v509 = vsel %vm261, %v505, 0
      %v512 = vsel %vm287, %v507, 0
      %514 = vmatprep.subr.bf16.mxu0 0
      %515 = vmatpush1.bf16.msra.mxu0 %v512
      %516 = vmatprep.subr.bf16.mxu0 0
      %517 = vmatpush1.bf16.msra.mxu0 0
      %518 = vmatprep.subr.bf16.mxu0 0
      %519 = vmatpush1.bf16.msra.mxu0 0
      %520 = vmatprep.subr.bf16.mxu0 0
      %521 = vmatpush1.bf16.msra.mxu0 0
      %522 = vmatprep.subr.bf16.mxu0 0
      %523 = vmatpush1.bf16.msra.mxu0 0
      %524 = vmatprep.subr.bf16.mxu0 0
      %525 = vmatpush1.bf16.msra.mxu0 0
      %526 = vmatprep.subr.bf16.mxu0 0
      %527 = vmatpush1.bf16.msra.mxu0 0
      %528 = vmatprep.subr.bf16.mxu0 0
      %529 = vmatpush1.bf16.msra.mxu0 0
      %530 = vmatprep.subr.bf16.mxu0 0
      %531 = vmatpush1.bf16.msra.mxu0 0
      %532 = vmatprep.subr.bf16.mxu0 0
      %533 = vmatpush1.bf16.msra.mxu0 0
      %534 = vmatprep.subr.bf16.mxu0 0
      %535 = vmatpush1.bf16.msra.mxu0 0
      %536 = vmatprep.subr.bf16.mxu0 0
      %537 = vmatpush1.bf16.msra.mxu0 0
      %538 = vmatprep.subr.bf16.mxu0 0
      %539 = vmatpush1.bf16.msra.mxu0 0
      %540 = vmatprep.subr.bf16.mxu0 0
      %541 = vmatpush1.bf16.msra.mxu0 0
      %542 = vmatprep.subr.bf16.mxu0 0
      %543 = vmatpush1.bf16.msra.mxu0 0
      %544 = vmatprep.subr.bf16.mxu0 0
      %545 = vmatpush1.bf16.msra.mxu0 0
      %546 = vmatprep.mubr.bf16.mxu0 0
      %547 = vmatmul.mubr.bf16.gmra.mrb[0].mxu0 %v509
      %v548 = vpop.f32.mrb[0].mxu0
      %v549 = vadd.f32 0.0, %v548
      %v550 = vpop.f32.mrb[0].mxu0
      %v551 = vpop.f32.mrb[0].mxu0
      %v552 = vpop.f32.mrb[0].mxu0
      %553 = vdwg.mxu0
      %554 = vrot.lane.b32.xlu0 %v212, 104
      %v555 = vpop.permute.xlu0 %554
      %556 = vrot.lane.b32.xlu0 %v281, 104
      %v557 = vpop.permute.xlu0 %556
      %v559 = vsel %vm213, %v555, 0
      %v562 = vsel %vm213, %v557, 0
      %564 = vmatprep.subr.bf16.mxu0 0
      %565 = vmatpush1.bf16.xpose.msra.mxu0 %v562
      %566 = vmatprep.subr.bf16.mxu0 0
      %567 = vmatpush1.bf16.xpose.msra.mxu0 0
      %568 = vmatprep.subr.bf16.mxu0 0
      %569 = vmatpush1.bf16.xpose.msra.mxu0 0
      %570 = vmatprep.subr.bf16.mxu0 0
      %571 = vmatpush1.bf16.xpose.msra.mxu0 0
      %572 = vmatprep.subr.bf16.mxu0 0
      %573 = vmatpush1.bf16.xpose.msra.mxu0 0
      %574 = vmatprep.subr.bf16.mxu0 0
      %575 = vmatpush1.bf16.xpose.msra.mxu0 0
      %576 = vmatprep.subr.bf16.mxu0 0
      %577 = vmatpush1.bf16.xpose.msra.mxu0 0
      %578 = vmatprep.subr.bf16.mxu0 0
      %579 = vmatpush1.bf16.xpose.msra.mxu0 0
      %580 = vmatprep.subr.bf16.mxu0 0
      %581 = vmatpush1.bf16.xpose.msra.mxu0 0
      %582 = vmatprep.subr.bf16.mxu0 0
      %583 = vmatpush1.bf16.xpose.msra.mxu0 0
      %584 = vmatprep.subr.bf16.mxu0 0
      %585 = vmatpush1.bf16.xpose.msra.mxu0 0
      %586 = vmatprep.subr.bf16.mxu0 0
      %587 = vmatpush1.bf16.xpose.msra.mxu0 0
      %588 = vmatprep.subr.bf16.mxu0 0
      %589 = vmatpush1.bf16.xpose.msra.mxu0 0
      %590 = vmatprep.subr.bf16.mxu0 0
      %591 = vmatpush1.bf16.xpose.msra.mxu0 0
      %592 = vmatprep.subr.bf16.mxu0 0
      %593 = vmatpush1.bf16.xpose.msra.mxu0 0
      %594 = vmatprep.subr.bf16.mxu0 0
      %595 = vmatpush1.bf16.xpose.msra.mxu0 0
      %596 = vmatprep.mubr.bf16.mxu0 0
      %597 = vmatmul.mubr.bf16.gmra.mrb[0].mxu0 %v559
      %v598 = vpop.f32.mrb[0].mxu0
      %v599 = vadd.f32 0.0, %v598
      %v600 = vpop.f32.mrb[0].mxu0
      %v601 = vpop.f32.mrb[0].mxu0
      %v602 = vpop.f32.mrb[0].mxu0
      %603 = vdwg.mxu0
      %v604 = vsel %vm209, -1e+30, %v599
      %v605 = vsel %vm261, %v604, -inf
      %606 = vmax.xlane.f32.xlu0 %v605
      %v607 = vpop.xlane.xlu0 %606
      %v608 = vsub.f32 %v604, %v607
      %v609 = vmul.f32 %v608, 1.442695
      %v610 = vpow.pop %v609
      %v611 = vsel %vm261, %v610, 0.0
      %612 = vadd.xlane.f32.xlu0 %v611
      %v613 = vpop.xlane.xlu0 %612
      %v614 = vrcp.pop %v613
      %v615 = vmul.f32 %v610, %v614
      %v616 = vpack.c.bf16 %v615, %v615
      %617 = vrot.lane.b32.xlu0 %v281, 72
      %v618 = vpop.permute.xlu0 %617
      %v620 = vsel %vm261, %v616, 0
      %v623 = vsel %vm287, %v618, 0
      %625 = vmatprep.subr.bf16.mxu0 0
      %626 = vmatpush1.bf16.msra.mxu0 %v623
      %627 = vmatprep.subr.bf16.mxu0 0
      %628 = vmatpush1.bf16.msra.mxu0 0
      %629 = vmatprep.subr.bf16.mxu0 0
      %630 = vmatpush1.bf16.msra.mxu0 0
      %631 = vmatprep.subr.bf16.mxu0 0
      %632 = vmatpush1.bf16.msra.mxu0 0
      %633 = vmatprep.subr.bf16.mxu0 0
      %634 = vmatpush1.bf16.msra.mxu0 0
      %635 = vmatprep.subr.bf16.mxu0 0
      %636 = vmatpush1.bf16.msra.mxu0 0
      %637 = vmatprep.subr.bf16.mxu0 0
      %638 = vmatpush1.bf16.msra.mxu0 0
      %639 = vmatprep.subr.bf16.mxu0 0
      %640 = vmatpush1.bf16.msra.mxu0 0
      %641 = vmatprep.subr.bf16.mxu0 0
      %642 = vmatpush1.bf16.msra.mxu0 0
      %643 = vmatprep.subr.bf16.mxu0 0
      %644 = vmatpush1.bf16.msra.mxu0 0
      %645 = vmatprep.subr.bf16.mxu0 0
      %646 = vmatpush1.bf16.msra.mxu0 0
      %647 = vmatprep.subr.bf16.mxu0 0
      %648 = vmatpush1.bf16.msra.mxu0 0
      %649 = vmatprep.subr.bf16.mxu0 0
      %650 = vmatpush1.bf16.msra.mxu0 0
      %651 = vmatprep.subr.bf16.mxu0 0
      %652 = vmatpush1.bf16.msra.mxu0 0
      %653 = vmatprep.subr.bf16.mxu0 0
      %654 = vmatpush1.bf16.msra.mxu0 0
      %655 = vmatprep.subr.bf16.mxu0 0
      %656 = vmatpush1.bf16.msra.mxu0 0
      %657 = vmatprep.mubr.bf16.mxu0 0
      %658 = vmatmul.mubr.bf16.gmra.mrb[0].mxu0 %v620
      %v659 = vpop.f32.mrb[0].mxu0
      %v660 = vadd.f32 0.0, %v659
      %v661 = vpop.f32.mrb[0].mxu0
      %v662 = vpop.f32.mrb[0].mxu0
      %v663 = vpop.f32.mrb[0].mxu0
      %664 = vdwg.mxu0
      %666 = vrot.lane.b32.xlu0 %v438, 8
      %v667 = vpop.permute.xlu0 %666
      %670 = vrot.lane.b32.xlu0 %v549, 16
      %v671 = vpop.permute.xlu0 %670
      %674 = vrot.lane.b32.xlu0 %v660, 24
      %v675 = vpop.permute.xlu0 %674
      %v677 = vsel %vm213, %v326, %v667
      %vm678 = vcmask 130048
      %v679 = vsel %vm678, %v677, %v671
      %vm680 = vcmask 195584
      %v681 = vsel %vm680, %v679, %v675
      %v682 = vpack.c.bf16 %v681, %v681
      %vm683 = vcmask 257024
      %684 = vst.msk [vmem:[%s199] sm:$0xf] %vm683, %v682
      %p685 = scmp.lt.s32.totalorder %s14, 1
      %s686 = scalar_select %p685, %s14, 1
      %s687 = smul.addr %s686, 4
      %s688 = scalar_lea.vmem %s3, %s687
      // Predicated region
      $region33: #{byte_decoder_forward.24} parent=31 // pred_check
        %p689 = pneg %p110
      $region34: #{byte_decoder_forward.24} parent=31 // pred_check_branch
        %691 = sbr.rel (%p689) target = $region36
      $region35: #{byte_decoder_forward.24} parent=31 // pred_region
        _
      $region36: #{byte_decoder_forward.24} parent=31 // pred_fallthru
        _
    $region32: #{byte_decoder_forward.24} parent=5 // pred_fallthru
      _
    %p692 = scmp.le.s32.totalorder 2, %s9
    // Predicated region
    $region37: #{byte_decoder_forward.24} parent=5 // pred_check
      %p693 = pneg %p692
    $region38: #{byte_decoder_forward.24} parent=5 // pred_check_branch
      %695 = sbr.rel (%p693) target = $region40
    $region39: #{byte_decoder_forward.24} parent=5 // pred_region
      %s696 = ssub.s32 %s9, 2
      // Predicated region
      $region41: #{byte_decoder_forward.24} parent=39 // pred_check
        %p697 = pneg %p116
      $region42: #{byte_decoder_forward.24} parent=39 // pred_check_branch
        %699 = sbr.rel (%p697) target = $region44
      $region43: #{byte_decoder_forward.24} parent=39 // pred_region
        %p700 = scmp.lt.s32.totalorder %s15, 1
        %s701 = scalar_select %p700, %s15, 1
        %s702 = smul.addr %s701, 4
        %s703 = scalar_lea.vmem %s3, %s702
      $region44: #{byte_decoder_forward.24} parent=39 // pred_fallthru
        _
    $region40: #{byte_decoder_forward.24} parent=5 // pred_fallthru
      _
  $region6: #{byte_decoder_forward.24} parent=0 // loop_footer
    %s13 = sadd.s32 1, %s9
  $region7: #{byte_decoder_forward.24} parent=0 // loop_footer_branch
    %8 = sbr.rel target = $region3
  $region8: #{byte_decoder_forward.24} parent=0 // loop_exit
    _

// kernel: byte_decoder_forward.37
$region0: #{byte_decoder_forward.37}
  #allocation0 [shape = 'u32[]', space=smem, size = 0x4, offset = 0x4, fixed_abs, tag = 'smem constant byte address 0x4 - core index']
  #allocation1 [shape = 'u32[144,128]{1,0:T(1,128)}', space=vmem, size = 0x12000, scoped, tag = 'internal scratch']
  #allocation2 [shape = 'bf16[16,32]{1,0:T(16,128)(2,1)}', space=vmem, size = 0x1000, scoped, tag = 'scratch operand']
  %s0 = inlined_call_operand.vmem [shape: f32[16,32], index: 0, kind: input, shape index: {}]
  %s1 = inlined_call_operand.vmem [shape: f32[1,32], index: 1, kind: input, shape index: {}]
  %s2 = inlined_call_operand.vmem [shape: f32[1,32], index: 2, kind: input, shape index: {}]
  %s3 = inlined_call_operand.vmem [shape: bf16[32,256], index: 3, kind: input, shape index: {}]
  %s4 = inlined_call_operand.hbm [shape: f32[16,256], index: 4, kind: output, shape index: {}]
  %s5 = sld [smem:[#allocation0]]
  $region30: #{byte_decoder_forward.37} parent=0
    _
  %s7 = ssub.s32 1, %s5
  %s8 = scalar_select 0, %s7, %s5
  $region1: #{byte_decoder_forward.37} parent=0
    #allocation3 [shape = 'u8[16384]{0}', space=vmem, size = 0x4000, scoped, tag = 'output window, operand 0, single buffered']
    #allocation4 [shape = 's32[1]{0}', space=sflag, size = 0x4, scoped, tag = 'scoped memory for byte_decoder_forward.37']
    %9 = vsyncpa [#allocation4], 0
    // Predicated region
    $region2: #{byte_decoder_forward.37} parent=1 // pred_check
      _
    $region3: #{byte_decoder_forward.37} parent=1 // pred_check_branch
      %11 = sbr.rel (0) target = $region5
    $region4: #{byte_decoder_forward.37} parent=1 // pred_region
      _
    $region5: #{byte_decoder_forward.37} parent=1 // pred_fallthru
      _
    // Predicated region
    $region6: #{byte_decoder_forward.37} parent=1 // pred_check
      _
    $region7: #{byte_decoder_forward.37} parent=1 // pred_check_branch
      %13 = sbr.rel (0) target = $region9
    $region8: #{byte_decoder_forward.37} parent=1 // pred_region
      _
    $region9: #{byte_decoder_forward.37} parent=1 // pred_fallthru
      _
    // Predicated region
    $region10: #{byte_decoder_forward.37} parent=1 // pred_check
      _
    $region11: #{byte_decoder_forward.37} parent=1 // pred_check_branch
      %15 = sbr.rel (0) target = $region13
    $region12: #{byte_decoder_forward.37} parent=1 // pred_region
      _
    $region13: #{byte_decoder_forward.37} parent=1 // pred_fallthru
      _
    // Predicated region
    $region14: #{byte_decoder_forward.37} parent=1 // pred_check
      _
    $region15: #{byte_decoder_forward.37} parent=1 // pred_check_branch
      %17 = sbr.rel (0) target = $region17
    $region16: #{byte_decoder_forward.37} parent=1 // pred_region
      _
    $region17: #{byte_decoder_forward.37} parent=1 // pred_fallthru
      _
    %p19 = scmp.eq.s32.totalorder 0, 0
    // Predicated region
    $region18: #{byte_decoder_forward.37} parent=1 // pred_check
      %p20 = pneg %p19
    $region19: #{byte_decoder_forward.37} parent=1 // pred_check_branch
      %22 = sbr.rel (%p20) target = $region21
    $region20: #{byte_decoder_forward.37} parent=1 // pred_region
      %v23 = vld [vmem:[%s0] sm:$0xff]
      %v24 = vld [vmem:[%s0 + $0x8] sm:$0xff]
      %vm25 = vcmask 261120
      %v26 = vsel %vm25, %v23, 0.0
      %27 = vadd.xlane.f32.xlu0 %v26
      %v28 = vpop.xlane.xlu0 %27
      %v29 = vsel %vm25, %v24, 0.0
      %30 = vadd.xlane.f32.xlu0 %v29
      %v31 = vpop.xlane.xlu0 %30
      %v32 = vrcp.pop 32.0
      %v33 = vmul.f32 %v28, %v32
      %v34 = vmul.f32 %v31, %v32
      %v35 = vsub.f32 %v23, %v33
      %v36 = vsub.f32 %v24, %v34
      %v37 = vmul.f32 %v35, %v35
      %v38 = vmul.f32 %v36, %v36
      %v39 = vsel %vm25, %v37, 0.0
      %40 = vadd.xlane.f32.xlu0 %v39
      %v41 = vpop.xlane.xlu0 %40
      %v42 = vsel %vm25, %v38, 0.0
      %43 = vadd.xlane.f32.xlu0 %v42
      %v44 = vpop.xlane.xlu0 %43
      %v45 = vmul.f32 %v41, %v32
      %v46 = vmul.f32 %v44, %v32
      %v47 = vadd.f32 %v45, 1e-05
      %v48 = vadd.f32 %v46, 1e-05
      %v49 = vrsqrt.pop %v47
      %v50 = vrsqrt.pop %v48
      %v51 = vmul.f32 %v35, %v49
      %v52 = vmul.f32 %v36, %v50
      %v53 = vld [vmem:[%s1] sm:$0x1]
      %v55 = vlaneseq
      %v56 = vshrl.u32 %v55, 7
      %v57 = vsub.s32 0, %v56
      %v58 = vrot.slane %v53, %v57
      %v60 = vmul.f32 %v51, %v58
      %v61 = vmul.f32 %v52, %v58
      %v62 = vld [vmem:[%s2] sm:$0x1]
      %v64 = vlaneseq
      %v65 = vshrl.u32 %v64, 7
      %v66 = vsub.s32 0, %v65
      %v67 = vrot.slane %v62, %v66
      %v69 = vadd.f32 %v60, %v67
      %v70 = vadd.f32 %v61, %v67
      %v71 = vpack.c.bf16 %v70, %v69
      %72 = vst.msk [vmem:[#allocation2] sm:$0xff] %vm25, %v71
    $region21: #{byte_decoder_forward.37} parent=1 // pred_fallthru
      _
    %v73 = vld [vmem:[#allocation2] sm:$0xff]
    %v74 = vld [vmem:[%s3] sm:$0xff]
    %v75 = vld [vmem:[%s3 + $0x8] sm:$0xff]
    %v76 = vld [vmem:[%s3 + $0x10] sm:$0xff]
    %v77 = vld [vmem:[%s3 + $0x18] sm:$0xff]
    %v82 = vunpack.c.l.b16 %v74
    %v83 = vunpack.c.h.b16 %v74
    %v84 = vunpack.c.l.b16 %v75
    %v85 = vunpack.c.h.b16 %v75
    %v86 = vunpack.c.l.b16 %v76
    %v87 = vunpack.c.h.b16 %v76
    %v88 = vunpack.c.l.b16 %v77
    %v89 = vunpack.c.h.b16 %v77
    %v90 = vpack.c.b16 %v84, %v82
    %v91 = vpack.c.b16 %v85, %v83
    %v92 = vpack.c.b16 %v88, %v86
    %v93 = vpack.c.b16 %v89, %v87
    %vm98 = vcmask 261120
    %v100 = vsel %vm98, %v73, 0
    %102 = vmatprep.subr.bf16.mxu0 %v91
    %103 = vmatpush1.bf16.msra.mxu0 %v90
    %104 = vmatprep.subr.bf16.mxu0 %v93
    %105 = vmatpush1.bf16.msra.mxu0 %v92
    %106 = vmatprep.subr.bf16.mxu0 0
    %107 = vmatpush1.bf16.msra.mxu0 0
    %108 = vmatprep.subr.bf16.mxu0 0
    %109 = vmatpush1.bf16.msra.mxu0 0
    %110 = vmatprep.subr.bf16.mxu0 0
    %111 = vmatpush1.bf16.msra.mxu0 0
    %112 = vmatprep.subr.bf16.mxu0 0
    %113 = vmatpush1.bf16.msra.mxu0 0
    %114 = vmatprep.subr.bf16.mxu0 0
    %115 = vmatpush1.bf16.msra.mxu0 0
    %116 = vmatprep.subr.bf16.mxu0 0
    %117 = vmatpush1.bf16.msra.mxu0 0
    %118 = vmatprep.subr.bf16.mxu0 0
    %119 = vmatpush1.bf16.msra.mxu0 0
    %120 = vmatprep.subr.bf16.mxu0 0
    %121 = vmatpush1.bf16.msra.mxu0 0
    %122 = vmatprep.subr.bf16.mxu0 0
    %123 = vmatpush1.bf16.msra.mxu0 0
    %124 = vmatprep.subr.bf16.mxu0 0
    %125 = vmatpush1.bf16.msra.mxu0 0
    %126 = vmatprep.subr.bf16.mxu0 0
    %127 = vmatpush1.bf16.msra.mxu0 0
    %128 = vmatprep.subr.bf16.mxu0 0
    %129 = vmatpush1.bf16.msra.mxu0 0
    %130 = vmatprep.subr.bf16.mxu0 0
    %131 = vmatpush1.bf16.msra.mxu0 0
    %132 = vmatprep.subr.bf16.mxu0 0
    %133 = vmatpush1.bf16.msra.mxu0 0
    %134 = vmatprep.mubr.bf16.mxu0 0
    %135 = vmatmul.mubr.bf16.gmra.mrb[0].mxu0 %v100
    %v136 = vpop.f32.mrb[0].mxu0
    %v137 = vadd.f32 0.0, %v136
    %v138 = vpop.f32.mrb[0].mxu0
    %v139 = vadd.f32 0.0, %v138
    %v140 = vpop.f32.mrb[0].mxu0
    %v141 = vadd.f32 0.0, %v140
    %v142 = vpop.f32.mrb[0].mxu0
    %v143 = vadd.f32 0.0, %v142
    %144 = vdwg.mxu0
    %145 = vst [vmem:[#allocation3] sm:$0xff] %v137
    %146 = vst [vmem:[#allocation3 + $0x8] sm:$0xff] %v139
    %147 = vst [vmem:[#allocation3 + $0x10] sm:$0xff] %v141
    %148 = vst [vmem:[#allocation3 + $0x18] sm:$0xff] %v143
    // Predicated region
    $region22: #{byte_decoder_forward.37} parent=1 // pred_check
      _
    $region23: #{byte_decoder_forward.37} parent=1 // pred_check_branch
      %150 = sbr.rel (0) target = $region25
    $region24: #{byte_decoder_forward.37} parent=1 // pred_region
      %s152 = ssub.s32 512, 512
      %153 = vsyncadd [#allocation4], %s152
      %s154 = sshll.u32 [#allocation3], 4
      %s155 = int_to_ptr.vmem [resolvable:$true] %s154
      %160 = dma.vmem_to_hbm [thread:$0]  %s155, 512, %s4, [#allocation4], 256, 256, 16
    $region25: #{byte_decoder_forward.37} parent=1 // pred_fallthru
      _
    // Predicated region
    $region26: #{byte_decoder_forward.37} parent=1 // pred_check
      _
    $region27: #{byte_decoder_forward.37} parent=1 // pred_check_branch
      %162 = sbr.rel (0) target = $region29
    $region28: #{byte_decoder_forward.37} parent=1 // pred_region
      %163 = dma.done [#allocation4], 512
    $region29: #{byte_decoder_forward.37} parent=1 // pred_fallthru
      _
    %164 = vsyncpa [#allocation4], 1

// kernel: byte_decoder_forward.27
$region0: #{byte_decoder_forward.27}
  #allocation0 [shape = 'u32[]', space=smem, size = 0x4, offset = 0x4, fixed_abs, tag = 'smem constant byte address 0x4 - core index']
  #allocation1 [shape = 'u32[144,128]{1,0:T(1,128)}', space=vmem, size = 0x12000, scoped, tag = 'internal scratch']
  #allocation2 [shape = 'f32[16,32]{1,0:T(8,128)}', space=vmem, size = 0x2000, scoped, tag = 'scratch operand']
  %s0 = inlined_call_operand.vmem [shape: bf16[16,128], index: 0, kind: input, shape index: {}]
  %s1 = inlined_call_operand.vmem [shape: bf16[128,32], index: 1, kind: input, shape index: {}]
  %s2 = inlined_call_operand.vmem [shape: f32[1,32], index: 2, kind: input, shape index: {}]
  %s3 = inlined_call_operand.vmem [shape: f32[16,32], index: 3, kind: input, shape index: {}]
  %s4 = inlined_call_operand.vmem [shape: f32[16,32], index: 4, kind: output, shape index: {}]
  %s5 = sld [smem:[#allocation0]]
  $region34: #{byte_decoder_forward.27} parent=0
    _
  %s7 = ssub.s32 1, %s5
  %s8 = scalar_select 0, %s7, %s5
  // Predicated region
  $region2: #{byte_decoder_forward.27} parent=0 // pred_check
    _
  $region3: #{byte_decoder_forward.27} parent=0 // pred_check_branch
    %10 = sbr.rel (0) target = $region5
  $region4: #{byte_decoder_forward.27} parent=0 // pred_region
    _
  $region5: #{byte_decoder_forward.27} parent=0 // pred_fallthru
    _
  // Predicated region
  $region6: #{byte_decoder_forward.27} parent=0 // pred_check
    _
  $region7: #{byte_decoder_forward.27} parent=0 // pred_check_branch
    %12 = sbr.rel (0) target = $region9
  $region8: #{byte_decoder_forward.27} parent=0 // pred_region
    _
  $region9: #{byte_decoder_forward.27} parent=0 // pred_fallthru
    _
  // Predicated region
  $region10: #{byte_decoder_forward.27} parent=0 // pred_check
    _
  $region11: #{byte_decoder_forward.27} parent=0 // pred_check_branch
    %14 = sbr.rel (0) target = $region13
  $region12: #{byte_decoder_forward.27} parent=0 // pred_region
    _
  $region13: #{byte_decoder_forward.27} parent=0 // pred_fallthru
    _
  // Predicated region
  $region14: #{byte_decoder_forward.27} parent=0 // pred_check
    _
  $region15: #{byte_decoder_forward.27} parent=0 // pred_check_branch
    %16 = sbr.rel (0) target = $region17
  $region16: #{byte_decoder_forward.27} parent=0 // pred_region
    _
  $region17: #{byte_decoder_forward.27} parent=0 // pred_fallthru
    _
  %p18 = scmp.eq.s32.totalorder 0, 0
  // Predicated region
  $region18: #{byte_decoder_forward.27} parent=0 // pred_check
    %p19 = pneg %p18
  $region19: #{byte_decoder_forward.27} parent=0 // pred_check_branch
    %21 = sbr.rel (%p19) target = $region21
  $region20: #{byte_decoder_forward.27} parent=0 // pred_region
    %vm22 = vcmask 261120
    %23 = vst.msk [vmem:[#allocation2] sm:$0xff] %vm22, 0.0
    %24 = vst.msk [vmem:[#allocation2 + $0x8] sm:$0xff] %vm22, 0.0
  $region21: #{byte_decoder_forward.27} parent=0 // pred_fallthru
    _
  %v25 = vld [vmem:[#allocation2] sm:$0xff]
  %v26 = vld [vmem:[#allocation2 + $0x8] sm:$0xff]
  %v27 = vld [vmem:[%s0] sm:$0xf]
  %v28 = vld [vmem:[%s0 + $0x4] sm:$0xf]
  %v29 = vld [vmem:[%s1] sm:$0xf]
  %v30 = vld [vmem:[%s1 + $0x4] sm:$0xf]
  %v31 = vld [vmem:[%s1 + $0x8] sm:$0xf]
  %v32 = vld [vmem:[%s1 + $0xc] sm:$0xf]
  %v33 = vld [vmem:[%s1 + $0x10] sm:$0xf]
  %v34 = vld [vmem:[%s1 + $0x14] sm:$0xf]
  %v35 = vld [vmem:[%s1 + $0x18] sm:$0xf]
  %v36 = vld [vmem:[%s1 + $0x1c] sm:$0xf]
  %v37 = vld [vmem:[%s1 + $0x20] sm:$0xf]
  %v38 = vld [vmem:[%s1 + $0x24] sm:$0xf]
  %v39 = vld [vmem:[%s1 + $0x28] sm:$0xf]
  %v40 = vld [vmem:[%s1 + $0x2c] sm:$0xf]
  %v41 = vld [vmem:[%s1 + $0x30] sm:$0xf]
  %v42 = vld [vmem:[%s1 + $0x34] sm:$0xf]
  %v43 = vld [vmem:[%s1 + $0x38] sm:$0xf]
  %v44 = vld [vmem:[%s1 + $0x3c] sm:$0xf]
  %v47 = vunpack.c.l.b16 %v27
  %v48 = vunpack.c.l.b16 %v28
  %v49 = vpack.c.b16 %v48, %v47
  %v67 = vunpack.c.l.b16 %v29
  %v68 = vunpack.c.l.b16 %v30
  %v69 = vunpack.c.l.b16 %v31
  %v70 = vunpack.c.l.b16 %v32
  %v71 = vunpack.c.l.b16 %v33
  %v72 = vunpack.c.l.b16 %v34
  %v73 = vunpack.c.l.b16 %v35
  %v74 = vunpack.c.l.b16 %v36
  %v75 = vunpack.c.l.b16 %v37
  %v76 = vunpack.c.l.b16 %v38
  %v77 = vunpack.c.l.b16 %v39
  %v78 = vunpack.c.l.b16 %v40
  %v79 = vunpack.c.l.b16 %v41
  %v80 = vunpack.c.l.b16 %v42
  %v81 = vunpack.c.l.b16 %v43
  %v82 = vunpack.c.l.b16 %v44
  %v83 = vpack.c.b16 %v68, %v67
  %v84 = vpack.c.b16 %v70, %v69
  %v85 = vpack.c.b16 %v72, %v71
  %v86 = vpack.c.b16 %v74, %v73
  %v87 = vpack.c.b16 %v76, %v75
  %v88 = vpack.c.b16 %v78, %v77
  %v89 = vpack.c.b16 %v80, %v79
  %v90 = vpack.c.b16 %v82, %v81
  %99 = vmatprep.subr.bf16.mxu0 0
  %100 = vmatpush1.bf16.msra.mxu0 %v83
  %101 = vmatprep.subr.bf16.mxu0 0
  %102 = vmatpush1.bf16.msra.mxu0 %v84
  %103 = vmatprep.subr.bf16.mxu0 0
  %104 = vmatpush1.bf16.msra.mxu0 %v85
  %105 = vmatprep.subr.bf16.mxu0 0
  %106 = vmatpush1.bf16.msra.mxu0 %v86
  %107 = vmatprep.subr.bf16.mxu0 0
  %108 = vmatpush1.bf16.msra.mxu0 %v87
  %109 = vmatprep.subr.bf16.mxu0 0
  %110 = vmatpush1.bf16.msra.mxu0 %v88
  %111 = vmatprep.subr.bf16.mxu0 0
  %112 = vmatpush1.bf16.msra.mxu0 %v89
  %113 = vmatprep.subr.bf16.mxu0 0
  %114 = vmatpush1.bf16.msra.mxu0 %v90
  %115 = vmatprep.subr.bf16.mxu0 0
  %116 = vmatpush1.bf16.msra.mxu0 0
  %117 = vmatprep.subr.bf16.mxu0 0
  %118 = vmatpush1.bf16.msra.mxu0 0
  %119 = vmatprep.subr.bf16.mxu0 0
  %120 = vmatpush1.bf16.msra.mxu0 0
  %121 = vmatprep.subr.bf16.mxu0 0
  %122 = vmatpush1.bf16.msra.mxu0 0
  %123 = vmatprep.subr.bf16.mxu0 0
  %124 = vmatpush1.bf16.msra.mxu0 0
  %125 = vmatprep.subr.bf16.mxu0 0
  %126 = vmatpush1.bf16.msra.mxu0 0
  %127 = vmatprep.subr.bf16.mxu0 0
  %128 = vmatpush1.bf16.msra.mxu0 0
  %129 = vmatprep.subr.bf16.mxu0 0
  %130 = vmatpush1.bf16.msra.mxu0 0
  %131 = vmatprep.mubr.bf16.mxu0 0
  %132 = vmatmul.mubr.bf16.gmra.mrb[0].mxu0 %v49
  %v133 = vpop.f32.mrb[0].mxu0
  %v134 = vadd.f32 0.0, %v133
  %v135 = vpop.f32.mrb[0].mxu0
  %v136 = vpop.f32.mrb[0].mxu0
  %v137 = vadd.f32 0.0, %v136
  %v138 = vpop.f32.mrb[0].mxu0
  %139 = vdwg.mxu0
  %v140 = vadd.f32 %v25, %v134
  %v141 = vadd.f32 %v26, %v137
  %vm142 = vcmask 261120
  %143 = vst.msk [vmem:[#allocation2] sm:$0xff] %vm142, %v140
  %144 = vst.msk [vmem:[#allocation2 + $0x8] sm:$0xff] %vm142, %v141
  // Predicated region
  $region22: #{byte_decoder_forward.27} parent=0 // pred_check
    %p145 = pneg %p18
  $region23: #{byte_decoder_forward.27} parent=0 // pred_check_branch
    %147 = sbr.rel (%p145) target = $region25
  $region24: #{byte_decoder_forward.27} parent=0 // pred_region
    %v148 = vld [vmem:[#allocation2] sm:$0xff]
    %v149 = vld [vmem:[#allocation2 + $0x8] sm:$0xff]
    %v150 = vld [vmem:[%s2] sm:$0x1]
    %v152 = vlaneseq
    %v153 = vshrl.u32 %v152, 7
    %v154 = vsub.s32 0, %v153
    %v155 = vrot.slane %v150, %v154
    %v157 = vadd.f32 %v148, %v155
    %v158 = vadd.f32 %v149, %v155
    %v159 = vld [vmem:[%s3] sm:$0xff]
    %v160 = vld [vmem:[%s3 + $0x8] sm:$0xff]
    %v161 = vadd.f32 %v157, %v159
    %v162 = vadd.f32 %v158, %v160
    %163 = vst.msk [vmem:[%s4] sm:$0xff] %vm142, %v161
    %164 = vst.msk [vmem:[%s4 + $0x8] sm:$0xff] %vm142, %v162
  $region25: #{byte_decoder_forward.27} parent=0 // pred_fallthru
    _
  // Predicated region
  $region26: #{byte_decoder_forward.27} parent=0 // pred_check
    _
  $region27: #{byte_decoder_forward.27} parent=0 // pred_check_branch
    %166 = sbr.rel (0) target = $region29
  $region28: #{byte_decoder_forward.27} parent=0 // pred_region
    _
  $region29: #{byte_decoder_forward.27} parent=0 // pred_fallthru
    _
  // Predicated region
  $region30: #{byte_decoder_forward.27} parent=0 // pred_check
    _
  $region31: #{byte_decoder_forward.27} parent=0 // pred_check_branch
    %168 = sbr.rel (0) target = $region33
  $region32: #{byte_decoder_forward.27} parent=0 // pred_region
    _
  $region33: #{byte_decoder_forward.27} parent=0 // pred_fallthru
    _

</llo_original>
